<compile_context>
chip_gen: v6e
topology: v6e:2x2x1
jax: 0.10.0
libtpu: 0.0.40
codegen_flags: <defaults>
</compile_context>

<pallas_src>
import jax
import jax.numpy as jnp
from jax.experimental import pallas as pl
from jax.experimental.pallas import tpu as pltpu

BN_EPS = 1e-5


def _pick_tile(total, prefs):
    """Largest preferred tile that divides `total`; falls back to `total`."""
    for t in prefs:
        if t <= total and total % t == 0:
            return t
    return total


# --------------------------------------------------------------------------- #
# ConvTranspose3d(k=2, s=2):
#   out[n, co, 2d+kd, 2h+kh, 2w+kw] = b[co] + sum_ci x[n,ci,d,h,w] * w[ci,co,kd,kh,kw]
# as a lane-dense bf16 GEMM: (8*Cout, Cin) @ (Cin, N*D*H*W).
# --------------------------------------------------------------------------- #
def _upsample_kernel(x_ref, w_ref, b_ref, o_ref):
    o_ref[...] = (
        jnp.dot(w_ref[...], x_ref[...], preferred_element_type=jnp.float32)
        + b_ref[...]
    ).astype(o_ref.dtype)


def conv_transpose3d_k2s2(x, weight, bias):
    """x: (N, Cin, D, H, W) -> (N, 2D, Cout, 2H, 2W) channels-second, bf16."""
    N, Cin, D, H, W = x.shape
    Cout = weight.shape[1]
    M = N * D * H * W
    xf = jnp.transpose(x, (1, 0, 2, 3, 4)).reshape(Cin, M).astype(jnp.bfloat16)
    # rows ordered (kd, kh, kw, co)
    wf = jnp.transpose(weight, (2, 3, 4, 1, 0)).reshape(8 * Cout, Cin)
    wf = wf.astype(jnp.bfloat16)
    bf = jnp.tile(bias, 8).reshape(8 * Cout, 1).astype(jnp.float32)

    TM = _pick_tile(M, (512, 1024, 256, 128))
    y = pl.pallas_call(
        _upsample_kernel,
        out_shape=jax.ShapeDtypeStruct((8 * Cout, M), jnp.bfloat16),
        grid=(M // TM,),
        in_specs=[
            pl.BlockSpec((Cin, TM), lambda i: (0, i)),
            pl.BlockSpec((8 * Cout, Cin), lambda i: (0, 0)),
            pl.BlockSpec((8 * Cout, 1), lambda i: (0, 0)),
        ],
        out_specs=pl.BlockSpec((8 * Cout, TM), lambda i: (0, i)),
        compiler_params=pltpu.CompilerParams(dimension_semantics=("parallel",)),
    )(xf, wf, bf)

    # TODO(synk): the pixel-shuffle de-interleave below is still a single XLA
    # transpose of the upsampled tensor; folding it into strided output stores
    # of the GEMM would remove this last HBM copy.
    y = y.reshape(2, 2, 2, Cout, N, D, H, W)
    y = jnp.transpose(y, (4, 5, 0, 3, 6, 1, 7, 2))
    return y.reshape(N, 2 * D, Cout, 2 * H, 2 * W)


# --------------------------------------------------------------------------- #
# 3x3x3 conv (padding=1) with fused im2col, bias and BatchNorm batch statistics.
#
# Input layout: zero-padded planes flattened on the lane axis:
#   xflat[n, dpad, c, r*(Wp+2) + col],  r in [0, Hp+3), col in [0, Wp+2)
# (1 top / 2 bottom pad rows, 1 left / 1 right pad col; depth padded 1/1).
# For output (h, w) and tap (kh, kw) the needed element is at flat position
#   p + kh*(Wp+2) + kw   with   p = h*(Wp+2) + w,
# so every tap is a *contiguous* lane slice of length L = Hp*(Wp+2); all 27 taps
# accumulate into the same (Cout, L) f32 VMEM accumulator.  Columns with w >= Wp
# are junk and are masked out of the BN statistics / final result.
# --------------------------------------------------------------------------- #
def _make_conv_kernel(Hp, Wp):
    Wpp = Wp + 2
    L = Hp * Wpp

    def kernel(x_ref, wt_ref, b_ref, m_ref, y_ref, s_ref, q_ref, acc_ref):
        kd = pl.program_id(2)

        @pl.when(kd == 0)
        def _init():
            acc_ref[...] = jnp.zeros_like(acc_ref)

        acc = acc_ref[...]
        for kh in range(3):
            for kw in range(3):
                off = kh * Wpp + kw
                acc = acc + jnp.dot(
                    wt_ref[kh * 3 + kw],            # (Cout, Cin)  bf16
                    x_ref[:, off:off + L],          # (Cin,  L)    bf16
                    preferred_element_type=jnp.float32,
                )
        acc_ref[...] = acc

        @pl.when(kd == 2)
        def _finish():
            out = acc + b_ref[...]                  # (Cout, L) f32
            y_ref[...] = out.astype(y_ref.dtype)
            m = m_ref[...]                          # (1, L) validity mask
            s_ref[...] = jnp.sum(out * m, axis=1, keepdims=True)
            q_ref[...] = jnp.sum(out * out * m, axis=1, keepdims=True)

    return kernel


def conv3x3x3_bias_stats(xflat, wt, bias, mask, Hp, Wp):
    """xflat: (N, Dp+2, Cin, PF) bf16;  wt: (3, 9, Cout, Cin) bf16;
    bias: (Cout, 1) f32;  mask: (1, L) f32.
    Returns conv output (N, Dp, Cout, L) bf16 plus per-plane channel sums and
    sums-of-squares (for training-mode BatchNorm)."""
    N, Dpad, Cin, PF = xflat.shape
    Dp = Dpad - 2
    Wpp = Wp + 2
    L = Hp * Wpp
    Cout = wt.shape[2]
    assert PF == (Hp + 3) * Wpp

    kernel = _make_conv_kernel(Hp, Wp)
    y, s, q = pl.pallas_call(
        kernel,
        out_shape=(
            jax.ShapeDtypeStruct((N, Dp, Cout, L), jnp.bfloat16),
            jax.ShapeDtypeStruct((N, Dp, Cout, 1), jnp.float32),
            jax.ShapeDtypeStruct((N, Dp, Cout, 1), jnp.float32),
        ),
        grid_spec=pltpu.PrefetchScalarGridSpec(
            num_scalar_prefetch=0,
            grid=(N, Dp, 3),
            in_specs=[
                pl.BlockSpec((None, None, Cin, PF),
                             lambda n, d, kd: (n, d + kd, 0, 0)),
                pl.BlockSpec((None, 9, Cout, Cin),
                             lambda n, d, kd: (kd, 0, 0, 0)),
                pl.BlockSpec((Cout, 1), lambda n, d, kd: (0, 0)),
                pl.BlockSpec((1, L), lambda n, d, kd: (0, 0)),
            ],
            out_specs=(
                pl.BlockSpec((None, None, Cout, L), lambda n, d, kd: (n, d, 0, 0)),
                pl.BlockSpec((None, None, Cout, 1), lambda n, d, kd: (n, d, 0, 0)),
                pl.BlockSpec((None, None, Cout, 1), lambda n, d, kd: (n, d, 0, 0)),
            ),
            scratch_shapes=[pltpu.VMEM((Cout, L), jnp.float32)],
        ),
        compiler_params=pltpu.CompilerParams(
            dimension_semantics=("parallel", "parallel", "arbitrary"),
            vmem_limit_bytes=32 * 1024 * 1024,
        ),
    )(xflat, wt, bias, mask)
    return y, s, q


def bn_fold(s, q, count, gamma, beta):
    """Fold training-mode BatchNorm statistics into per-channel scale / shift."""
    S = jnp.sum(s, axis=(0, 1))[:, 0]
    Q = jnp.sum(q, axis=(0, 1))[:, 0]
    mean = S / count
    var = Q / count - mean * mean           # biased variance (PyTorch BN train)
    scale = gamma / jnp.sqrt(var + BN_EPS)
    shift = beta - mean * scale
    return scale.astype(jnp.float32), shift.astype(jnp.float32)


# --------------------------------------------------------------------------- #
# BN(scale/shift) + ReLU fused with re-padding: directly emits the zero-padded,
# plane-flattened layout consumed by the next 3x3x3 conv kernel.
# --------------------------------------------------------------------------- #
def _make_bn_relu_pad_kernel(Hp, Wp):
    Wpp = Wp + 2
    L = Hp * Wpp

    def kernel(y_ref, sc_ref, sh_ref, m_ref, o_ref):
        dpad = pl.program_id(1)
        n_interior = pl.num_programs(1) - 2
        o_ref[...] = jnp.zeros_like(o_ref)

        @pl.when((dpad >= 1) & (dpad <= n_interior))
        def _interior():
            act = jnp.maximum(
                y_ref[...].astype(jnp.float32) * sc_ref[...] + sh_ref[...], 0.0)
            act = act * m_ref[...]          # zero junk cols -> become seam zeros
            o_ref[:, Wpp + 1:Wpp + 1 + L] = act.astype(o_ref.dtype)

    return kernel


def bn_relu_pad(y, scale, shift, mask, Hp, Wp):
    N, Dp, C, L = y.shape
    Wpp = Wp + 2
    PF = (Hp + 3) * Wpp
    kernel = _make_bn_relu_pad_kernel(Hp, Wp)
    return pl.pallas_call(
        kernel,
        out_shape=jax.ShapeDtypeStruct((N, Dp + 2, C, PF), jnp.bfloat16),
        grid=(N, Dp + 2),
        in_specs=[
            pl.BlockSpec(
                (None, None, C, L),
                lambda n, d: (n, jnp.minimum(jnp.maximum(d - 1, 0), Dp - 1), 0, 0)),
            pl.BlockSpec((C, 1), lambda n, d: (0, 0)),
            pl.BlockSpec((C, 1), lambda n, d: (0, 0)),
            pl.BlockSpec((1, L), lambda n, d: (0, 0)),
        ],
        out_specs=pl.BlockSpec((None, None, C, PF), lambda n, d: (n, d, 0, 0)),
        compiler_params=pltpu.CompilerParams(
            dimension_semantics=("parallel", "parallel")),
    )(y, scale.reshape(C, 1), shift.reshape(C, 1), mask)


# Final BN + ReLU (no re-pad) on the second conv's output.
def _bn_relu_kernel(y_ref, sc_ref, sh_ref, o_ref):
    o_ref[...] = jnp.maximum(
        y_ref[...].astype(jnp.float32) * sc_ref[...] + sh_ref[...], 0.0)


def bn_relu(y, scale, shift):
    N, Dp, C, L = y.shape
    TD = _pick_tile(Dp, (8, 4, 2))
    return pl.pallas_call(
        _bn_relu_kernel,
        out_shape=jax.ShapeDtypeStruct((N, Dp, C, L), jnp.float32),
        grid=(N, Dp // TD),
        in_specs=[
            pl.BlockSpec((None, TD, C, L), lambda n, d: (n, d, 0, 0)),
            pl.BlockSpec((C, 1), lambda n, d: (0, 0)),
            pl.BlockSpec((C, 1), lambda n, d: (0, 0)),
        ],
        out_specs=pl.BlockSpec((None, TD, C, L), lambda n, d: (n, d, 0, 0)),
        compiler_params=pltpu.CompilerParams(
            dimension_semantics=("parallel", "parallel")),
    )(y, scale.reshape(C, 1), shift.reshape(C, 1))


# ----------------------------- decoder forward ------------------------------ #
def unet3d_decoder_forward(params, x, x1):
    N, _, D, H, W = x.shape
    Cout = params["up_w"].shape[1]
    Dp, Hp, Wp = 2 * D, 2 * H, 2 * W
    Wpp = Wp + 2
    L = Hp * Wpp
    PF = (Hp + 3) * Wpp
    mask = (jnp.arange(L) % Wpp < Wp).astype(jnp.float32).reshape(1, L)

    # 1) ConvTranspose3d(k=2, s=2) -> (N, Dp, Cout, Hp, Wp) bf16
    up = conv_transpose3d_k2s2(x, params["up_w"], params["up_b"])

    # 2) concat([up, skip]) on the channel axis + build padded/flattened layout
    x1_r = jnp.transpose(x1, (0, 2, 1, 3, 4)).astype(jnp.bfloat16)
    cat = jnp.concatenate([up, x1_r], axis=2)            # (N, Dp, C1, Hp, Wp)
    C1 = cat.shape[2]
    assert C1 == params["w1"].shape[1]
    xflat = jnp.pad(
        cat, ((0, 0), (1, 1), (0, 0), (1, 2), (1, 1))
    ).reshape(N, Dp + 2, C1, PF)

    count = float(N * Dp * Hp * Wp)

    # 3) conv1 (+bias, fused BN batch statistics)
    wt1 = jnp.transpose(params["w1"], (2, 3, 4, 0, 1)).reshape(3, 9, Cout, C1)
    y1, s1, q1 = conv3x3x3_bias_stats(
        xflat, wt1.astype(jnp.bfloat16),
        params["b1"].reshape(Cout, 1).astype(jnp.float32), mask, Hp, Wp)
    sc1, sh1 = bn_fold(s1, q1, count, params["g1"], params["beta1"])

    # 4) BN + ReLU fused with re-padding for conv2
    h1 = bn_relu_pad(y1, sc1, sh1, mask, Hp, Wp)         # (N, Dp+2, Cout, PF)

    # 5) conv2 (+bias, fused BN batch statistics)
    wt2 = jnp.transpose(params["w2"], (2, 3, 4, 0, 1)).reshape(3, 9, Cout, Cout)
    y2, s2, q2 = conv3x3x3_bias_stats(
        h1, wt2.astype(jnp.bfloat16),
        params["b2"].reshape(Cout, 1).astype(jnp.float32), mask, Hp, Wp)
    sc2, sh2 = bn_fold(s2, q2, count, params["g2"], params["beta2"])

    # 6) final BN + ReLU, drop junk columns, back to NCDHW
    h2 = bn_relu(y2, sc2, sh2)                           # (N, Dp, Cout, L) f32
    h2 = h2.reshape(N, Dp, Cout, Hp, Wpp)[..., :Wp]
    return jnp.transpose(h2, (0, 2, 1, 3, 4))


def init_params(key, in_channels, out_channels):
    ks = jax.random.split(key, 6)
    f = lambda k, shp, s: (s * jax.random.normal(k, shp)).astype(jnp.float32)
    return {
        "up_w": f(ks[0], (in_channels, out_channels, 2, 2, 2), 0.1),
        "up_b": f(ks[1], (out_channels,), 0.1),
        "w1":   f(ks[2], (out_channels, in_channels, 3, 3, 3), 0.1),
        "b1":   f(ks[3], (out_channels,), 0.1),
        "g1":   jnp.ones((out_channels,), jnp.float32),
        "beta1": jnp.zeros((out_channels,), jnp.float32),
        "w2":   f(ks[4], (out_channels, out_channels, 3, 3, 3), 0.1),
        "b2":   f(ks[5], (out_channels,), 0.1),
        "g2":   jnp.ones((out_channels,), jnp.float32),
        "beta2": jnp.zeros((out_channels,), jnp.float32),
    }


if __name__ == "__main__":
    in_channels, out_channels = 8, 4          # in_channels == 2 * out_channels
    N, D, H, W = 2, 8, 8, 8

    key = jax.random.PRNGKey(0)
    kx, kx1, kp = jax.random.split(key, 3)
    x = jax.random.normal(kx, (N, in_channels, D, H, W), dtype=jnp.float32)
    x1 = jax.random.normal(kx1, (N, out_channels, 2 * D, 2 * H, 2 * W),
                           dtype=jnp.float32)
    params = init_params(kp, in_channels, out_channels)

    out = jax.jit(unet3d_decoder_forward)(params, x, x1)
    out = jax.block_until_ready(out)
    assert out.shape == (N, out_channels, 2 * D, 2 * H, 2 * W), out.shape
    assert bool(jnp.all(jnp.isfinite(out)))
    print("KERNEL_OK")
</pallas_src>

<mosaic_0001>
module attributes {stable_mosaic.version = 11 : i64} {
  func.func @_upsample_kernel(%arg0: i32, %arg1: memref<8x512xbf16, #tpu.memory_space<vmem>>, %arg2: memref<32x8xbf16, #tpu.memory_space<vmem>>, %arg3: memref<32x1xf32, #tpu.memory_space<vmem>>, %arg4: memref<32x512xbf16, #tpu.memory_space<vmem>>) attributes {dimension_semantics = [#tpu.dimension_semantics<parallel>], iteration_bounds = array<i64: 2>, scalar_prefetch = 0 : i64, scratch_operands = 0 : i64, tpu.core_type = #tpu.core_type<tc>, window_params = [{transform_indices = @transform_0, window_bounds = array<i64: 8, 512>}, {pipeline_mode = #tpu.pipeline_mode<synchronous>, transform_indices = @transform_1, window_bounds = array<i64: 32, 8>}, {pipeline_mode = #tpu.pipeline_mode<synchronous>, transform_indices = @transform_2, window_bounds = array<i64: 32, 1>}, {transform_indices = @transform_3, window_bounds = array<i64: 32, 512>}]} {
    %c0 = arith.constant 0 : index
    %c0_0 = arith.constant 0 : index
    %0 = vector.load %arg2[%c0, %c0_0] : memref<32x8xbf16, #tpu.memory_space<vmem>>, vector<32x8xbf16>
    %c0_1 = arith.constant 0 : index
    %c0_2 = arith.constant 0 : index
    %1 = vector.load %arg1[%c0_1, %c0_2] : memref<8x512xbf16, #tpu.memory_space<vmem>>, vector<8x512xbf16>
    %cst = arith.constant dense<0.000000e+00> : vector<32x512xf32>
    %2 = tpu.matmul %0, %1, %cst {dimension_numbers = #tpu.dot_dimension_numbers<[1], [0], [0], [1], [0, 0, 1, 1], [], []>} : vector<32x8xbf16>, vector<8x512xbf16>, vector<32x512xf32> -> vector<32x512xf32>
    %c0_3 = arith.constant 0 : index
    %c0_4 = arith.constant 0 : index
    %3 = vector.load %arg3[%c0_3, %c0_4] : memref<32x1xf32, #tpu.memory_space<vmem>>, vector<32x1xf32>
    %4 = vector.broadcast %3 : vector<32x1xf32> to vector<32x512xf32>
    %5 = arith.addf %2, %4 : vector<32x512xf32>
    %6 = arith.truncf %5 : vector<32x512xf32> to vector<32x512xbf16>
    %c0_5 = arith.constant 0 : index
    %c0_6 = arith.constant 0 : index
    %7 = vector.load %arg4[%c0_5, %c0_6] : memref<32x512xbf16, #tpu.memory_space<vmem>>, vector<32x512xbf16>
    tpu.vector_store %arg4[%c0_5, %c0_6], %6 {strides = array<i32>} : memref<32x512xbf16, #tpu.memory_space<vmem>>, vector<32x512xbf16>,
    return
  }
  func.func @transform_0(%arg0: i32) -> (i32, i32) {
    %c0_i32 = arith.constant 0 : i32
    %c0_i32_0 = arith.constant 0 : i32
    return %c0_i32, %arg0 : i32, i32
  }
  func.func @transform_1(%arg0: i32) -> (i32, i32) {
    %c0_i32 = arith.constant 0 : i32
    %c0_i32_0 = arith.constant 0 : i32
    %c0_i32_1 = arith.constant 0 : i32
    return %c0_i32, %c0_i32_0 : i32, i32
  }
  func.func @transform_2(%arg0: i32) -> (i32, i32) {
    %c0_i32 = arith.constant 0 : i32
    %c0_i32_0 = arith.constant 0 : i32
    %c0_i32_1 = arith.constant 0 : i32
    return %c0_i32, %c0_i32_0 : i32, i32
  }
  func.func @transform_3(%arg0: i32) -> (i32, i32) {
    %c0_i32 = arith.constant 0 : i32
    %c0_i32_0 = arith.constant 0 : i32
    return %c0_i32, %arg0 : i32, i32
  }
}

module attributes {stable_mosaic.version = 11 : i64} {
  func.func @kernel(%arg0: i32, %arg1: i32, %arg2: i32, %arg3: memref<1x1x8x342xbf16, #tpu.memory_space<vmem>>, %arg4: memref<1x9x4x8xbf16, #tpu.memory_space<vmem>>, %arg5: memref<4x1xf32, #tpu.memory_space<vmem>>, %arg6: memref<1x288xf32, #tpu.memory_space<vmem>>, %arg7: memref<1x1x4x288xbf16, #tpu.memory_space<vmem>>, %arg8: memref<1x1x4x1xf32, #tpu.memory_space<vmem>>, %arg9: memref<1x1x4x1xf32, #tpu.memory_space<vmem>>, %arg10: memref<4x288xf32, #tpu.memory_space<vmem>>) attributes {dimension_semantics = [#tpu.dimension_semantics<parallel>, #tpu.dimension_semantics<parallel>, #tpu.dimension_semantics<arbitrary>], iteration_bounds = array<i64: 2, 16, 3>, scalar_prefetch = 0 : i64, scratch_operands = 1 : i64, tpu.core_type = #tpu.core_type<tc>, window_params = [{transform_indices = @transform_0, window_bounds = array<i64: 1, 1, 8, 342>}, {transform_indices = @transform_1, window_bounds = array<i64: 1, 9, 4, 8>}, {pipeline_mode = #tpu.pipeline_mode<synchronous>, transform_indices = @transform_2, window_bounds = array<i64: 4, 1>}, {pipeline_mode = #tpu.pipeline_mode<synchronous>, transform_indices = @transform_3, window_bounds = array<i64: 1, 288>}, {transform_indices = @transform_4, window_bounds = array<i64: 1, 1, 4, 288>}, {transform_indices = @transform_5, window_bounds = array<i64: 1, 1, 4, 1>}, {transform_indices = @transform_6, window_bounds = array<i64: 1, 1, 4, 1>}]} {
    %c0_i32 = arith.constant 0 : i32
    %0 = arith.cmpi eq, %arg2, %c0_i32 : i32
    %1 = arith.extui %0 : i1 to i32
    %c0_i32_0 = arith.constant 0 : i32
    %2 = arith.cmpi ne, %1, %c0_i32_0 : i32
    scf.if %2 {
      %cst_71 = arith.constant 0.000000e+00 : f32
      %62 = vector.broadcast %cst_71 : f32 to vector<4x288xf32>
      %c0_72 = arith.constant 0 : index
      %c0_73 = arith.constant 0 : index
      %63 = vector.load %arg10[%c0_72, %c0_73] : memref<4x288xf32, #tpu.memory_space<vmem>>, vector<4x288xf32>
      tpu.vector_store %arg10[%c0_72, %c0_73], %62 {strides = array<i32>} : memref<4x288xf32, #tpu.memory_space<vmem>>, vector<4x288xf32>,
    } else {
    }
    %c0 = arith.constant 0 : index
    %c0_1 = arith.constant 0 : index
    %3 = vector.load %arg10[%c0, %c0_1] : memref<4x288xf32, #tpu.memory_space<vmem>>, vector<4x288xf32>
    %c0_2 = arith.constant 0 : index
    %c0_3 = arith.constant 0 : index
    %c0_4 = arith.constant 0 : index
    %c0_5 = arith.constant 0 : index
    %4 = vector.load %arg4[%c0_2, %c0_3, %c0_4, %c0_5] : memref<1x9x4x8xbf16, #tpu.memory_space<vmem>>, vector<1x1x4x8xbf16>
    %5 = vector.shape_cast %4 : vector<1x1x4x8xbf16> to vector<4x8xbf16>
    %c0_6 = arith.constant 0 : index
    %c0_7 = arith.constant 0 : index
    %c0_8 = arith.constant 0 : index
    %c0_9 = arith.constant 0 : index
    %6 = vector.load %arg3[%c0_6, %c0_7, %c0_8, %c0_9] : memref<1x1x8x342xbf16, #tpu.memory_space<vmem>>, vector<1x1x8x288xbf16>
    %7 = vector.shape_cast %6 : vector<1x1x8x288xbf16> to vector<8x288xbf16>
    %cst = arith.constant dense<0.000000e+00> : vector<4x288xf32>
    %8 = tpu.matmul %5, %7, %cst {dimension_numbers = #tpu.dot_dimension_numbers<[1], [0], [0], [1], [0, 0, 1, 1], [], []>} : vector<4x8xbf16>, vector<8x288xbf16>, vector<4x288xf32> -> vector<4x288xf32>
    %9 = arith.addf %3, %8 : vector<4x288xf32>
    %c0_10 = arith.constant 0 : index
    %c1 = arith.constant 1 : index
    %c0_11 = arith.constant 0 : index
    %c0_12 = arith.constant 0 : index
    %10 = vector.load %arg4[%c0_10, %c1, %c0_11, %c0_12] : memref<1x9x4x8xbf16, #tpu.memory_space<vmem>>, vector<1x1x4x8xbf16>
    %11 = vector.shape_cast %10 : vector<1x1x4x8xbf16> to vector<4x8xbf16>
    %c0_13 = arith.constant 0 : index
    %c0_14 = arith.constant 0 : index
    %c0_15 = arith.constant 0 : index
    %c1_16 = arith.constant 1 : index
    %12 = vector.load %arg3[%c0_13, %c0_14, %c0_15, %c1_16] : memref<1x1x8x342xbf16, #tpu.memory_space<vmem>>, vector<1x1x8x288xbf16>
    %13 = vector.shape_cast %12 : vector<1x1x8x288xbf16> to vector<8x288xbf16>
    %cst_17 = arith.constant dense<0.000000e+00> : vector<4x288xf32>
    %14 = tpu.matmul %11, %13, %cst_17 {dimension_numbers = #tpu.dot_dimension_numbers<[1], [0], [0], [1], [0, 0, 1, 1], [], []>} : vector<4x8xbf16>, vector<8x288xbf16>, vector<4x288xf32> -> vector<4x288xf32>
    %15 = arith.addf %9, %14 : vector<4x288xf32>
    %c0_18 = arith.constant 0 : index
    %c2 = arith.constant 2 : index
    %c0_19 = arith.constant 0 : index
    %c0_20 = arith.constant 0 : index
    %16 = vector.load %arg4[%c0_18, %c2, %c0_19, %c0_20] : memref<1x9x4x8xbf16, #tpu.memory_space<vmem>>, vector<1x1x4x8xbf16>
    %17 = vector.shape_cast %16 : vector<1x1x4x8xbf16> to vector<4x8xbf16>
    %c0_21 = arith.constant 0 : index
    %c0_22 = arith.constant 0 : index
    %c0_23 = arith.constant 0 : index
    %c2_24 = arith.constant 2 : index
    %18 = vector.load %arg3[%c0_21, %c0_22, %c0_23, %c2_24] : memref<1x1x8x342xbf16, #tpu.memory_space<vmem>>, vector<1x1x8x288xbf16>
    %19 = vector.shape_cast %18 : vector<1x1x8x288xbf16> to vector<8x288xbf16>
    %cst_25 = arith.constant dense<0.000000e+00> : vector<4x288xf32>
    %20 = tpu.matmul %17, %19, %cst_25 {dimension_numbers = #tpu.dot_dimension_numbers<[1], [0], [0], [1], [0, 0, 1, 1], [], []>} : vector<4x8xbf16>, vector<8x288xbf16>, vector<4x288xf32> -> vector<4x288xf32>
    %21 = arith.addf %15, %20 : vector<4x288xf32>
    %c0_26 = arith.constant 0 : index
    %c3 = arith.constant 3 : index
    %c0_27 = arith.constant 0 : index
    %c0_28 = arith.constant 0 : index
    %22 = vector.load %arg4[%c0_26, %c3, %c0_27, %c0_28] : memref<1x9x4x8xbf16, #tpu.memory_space<vmem>>, vector<1x1x4x8xbf16>
    %23 = vector.shape_cast %22 : vector<1x1x4x8xbf16> to vector<4x8xbf16>
    %c0_29 = arith.constant 0 : index
    %c0_30 = arith.constant 0 : index
    %c0_31 = arith.constant 0 : index
    %c18 = arith.constant 18 : index
    %24 = vector.load %arg3[%c0_29, %c0_30, %c0_31, %c18] : memref<1x1x8x342xbf16, #tpu.memory_space<vmem>>, vector<1x1x8x288xbf16>
    %25 = vector.shape_cast %24 : vector<1x1x8x288xbf16> to vector<8x288xbf16>
    %cst_32 = arith.constant dense<0.000000e+00> : vector<4x288xf32>
    %26 = tpu.matmul %23, %25, %cst_32 {dimension_numbers = #tpu.dot_dimension_numbers<[1], [0], [0], [1], [0, 0, 1, 1], [], []>} : vector<4x8xbf16>, vector<8x288xbf16>, vector<4x288xf32> -> vector<4x288xf32>
    %27 = arith.addf %21, %26 : vector<4x288xf32>
    %c0_33 = arith.constant 0 : index
    %c4 = arith.constant 4 : index
    %c0_34 = arith.constant 0 : index
    %c0_35 = arith.constant 0 : index
    %28 = vector.load %arg4[%c0_33, %c4, %c0_34, %c0_35] : memref<1x9x4x8xbf16, #tpu.memory_space<vmem>>, vector<1x1x4x8xbf16>
    %29 = vector.shape_cast %28 : vector<1x1x4x8xbf16> to vector<4x8xbf16>
    %c0_36 = arith.constant 0 : index
    %c0_37 = arith.constant 0 : index
    %c0_38 = arith.constant 0 : index
    %c19 = arith.constant 19 : index
    %30 = vector.load %arg3[%c0_36, %c0_37, %c0_38, %c19] : memref<1x1x8x342xbf16, #tpu.memory_space<vmem>>, vector<1x1x8x288xbf16>
    %31 = vector.shape_cast %30 : vector<1x1x8x288xbf16> to vector<8x288xbf16>
    %cst_39 = arith.constant dense<0.000000e+00> : vector<4x288xf32>
    %32 = tpu.matmul %29, %31, %cst_39 {dimension_numbers = #tpu.dot_dimension_numbers<[1], [0], [0], [1], [0, 0, 1, 1], [], []>} : vector<4x8xbf16>, vector<8x288xbf16>, vector<4x288xf32> -> vector<4x288xf32>
    %33 = arith.addf %27, %32 : vector<4x288xf32>
    %c0_40 = arith.constant 0 : index
    %c5 = arith.constant 5 : index
    %c0_41 = arith.constant 0 : index
    %c0_42 = arith.constant 0 : index
    %34 = vector.load %arg4[%c0_40, %c5, %c0_41, %c0_42] : memref<1x9x4x8xbf16, #tpu.memory_space<vmem>>, vector<1x1x4x8xbf16>
    %35 = vector.shape_cast %34 : vector<1x1x4x8xbf16> to vector<4x8xbf16>
    %c0_43 = arith.constant 0 : index
    %c0_44 = arith.constant 0 : index
    %c0_45 = arith.constant 0 : index
    %c20 = arith.constant 20 : index
    %36 = vector.load %arg3[%c0_43, %c0_44, %c0_45, %c20] : memref<1x1x8x342xbf16, #tpu.memory_space<vmem>>, vector<1x1x8x288xbf16>
    %37 = vector.shape_cast %36 : vector<1x1x8x288xbf16> to vector<8x288xbf16>
    %cst_46 = arith.constant dense<0.000000e+00> : vector<4x288xf32>
    %38 = tpu.matmul %35, %37, %cst_46 {dimension_numbers = #tpu.dot_dimension_numbers<[1], [0], [0], [1], [0, 0, 1, 1], [], []>} : vector<4x8xbf16>, vector<8x288xbf16>, vector<4x288xf32> -> vector<4x288xf32>
    %39 = arith.addf %33, %38 : vector<4x288xf32>
    %c0_47 = arith.constant 0 : index
    %c6 = arith.constant 6 : index
    %c0_48 = arith.constant 0 : index
    %c0_49 = arith.constant 0 : index
    %40 = vector.load %arg4[%c0_47, %c6, %c0_48, %c0_49] : memref<1x9x4x8xbf16, #tpu.memory_space<vmem>>, vector<1x1x4x8xbf16>
    %41 = vector.shape_cast %40 : vector<1x1x4x8xbf16> to vector<4x8xbf16>
    %c0_50 = arith.constant 0 : index
    %c0_51 = arith.constant 0 : index
    %c0_52 = arith.constant 0 : index
    %c36 = arith.constant 36 : index
    %42 = vector.load %arg3[%c0_50, %c0_51, %c0_52, %c36] : memref<1x1x8x342xbf16, #tpu.memory_space<vmem>>, vector<1x1x8x288xbf16>
    %43 = vector.shape_cast %42 : vector<1x1x8x288xbf16> to vector<8x288xbf16>
    %cst_53 = arith.constant dense<0.000000e+00> : vector<4x288xf32>
    %44 = tpu.matmul %41, %43, %cst_53 {dimension_numbers = #tpu.dot_dimension_numbers<[1], [0], [0], [1], [0, 0, 1, 1], [], []>} : vector<4x8xbf16>, vector<8x288xbf16>, vector<4x288xf32> -> vector<4x288xf32>
    %45 = arith.addf %39, %44 : vector<4x288xf32>
    %c0_54 = arith.constant 0 : index
    %c7 = arith.constant 7 : index
    %c0_55 = arith.constant 0 : index
    %c0_56 = arith.constant 0 : index
    %46 = vector.load %arg4[%c0_54, %c7, %c0_55, %c0_56] : memref<1x9x4x8xbf16, #tpu.memory_space<vmem>>, vector<1x1x4x8xbf16>
    %47 = vector.shape_cast %46 : vector<1x1x4x8xbf16> to vector<4x8xbf16>
    %c0_57 = arith.constant 0 : index
    %c0_58 = arith.constant 0 : index
    %c0_59 = arith.constant 0 : index
    %c37 = arith.constant 37 : index
    %48 = vector.load %arg3[%c0_57, %c0_58, %c0_59, %c37] : memref<1x1x8x342xbf16, #tpu.memory_space<vmem>>, vector<1x1x8x288xbf16>
    %49 = vector.shape_cast %48 : vector<1x1x8x288xbf16> to vector<8x288xbf16>
    %cst_60 = arith.constant dense<0.000000e+00> : vector<4x288xf32>
    %50 = tpu.matmul %47, %49, %cst_60 {dimension_numbers = #tpu.dot_dimension_numbers<[1], [0], [0], [1], [0, 0, 1, 1], [], []>} : vector<4x8xbf16>, vector<8x288xbf16>, vector<4x288xf32> -> vector<4x288xf32>
    %51 = arith.addf %45, %50 : vector<4x288xf32>
    %c0_61 = arith.constant 0 : index
    %c8 = arith.constant 8 : index
    %c0_62 = arith.constant 0 : index
    %c0_63 = arith.constant 0 : index
    %52 = vector.load %arg4[%c0_61, %c8, %c0_62, %c0_63] : memref<1x9x4x8xbf16, #tpu.memory_space<vmem>>, vector<1x1x4x8xbf16>
    %53 = vector.shape_cast %52 : vector<1x1x4x8xbf16> to vector<4x8xbf16>
    %c0_64 = arith.constant 0 : index
    %c0_65 = arith.constant 0 : index
    %c0_66 = arith.constant 0 : index
    %c38 = arith.constant 38 : index
    %54 = vector.load %arg3[%c0_64, %c0_65, %c0_66, %c38] : memref<1x1x8x342xbf16, #tpu.memory_space<vmem>>, vector<1x1x8x288xbf16>
    %55 = vector.shape_cast %54 : vector<1x1x8x288xbf16> to vector<8x288xbf16>
    %cst_67 = arith.constant dense<0.000000e+00> : vector<4x288xf32>
    %56 = tpu.matmul %53, %55, %cst_67 {dimension_numbers = #tpu.dot_dimension_numbers<[1], [0], [0], [1], [0, 0, 1, 1], [], []>} : vector<4x8xbf16>, vector<8x288xbf16>, vector<4x288xf32> -> vector<4x288xf32>
    %57 = arith.addf %51, %56 : vector<4x288xf32>
    %c0_68 = arith.constant 0 : index
    %c0_69 = arith.constant 0 : index
    %58 = vector.load %arg10[%c0_68, %c0_69] : memref<4x288xf32, #tpu.memory_space<vmem>>, vector<4x288xf32>
    tpu.vector_store %arg10[%c0_68, %c0_69], %57 {strides = array<i32>} : memref<4x288xf32, #tpu.memory_space<vmem>>, vector<4x288xf32>,
    %c2_i32 = arith.constant 2 : i32
    %59 = arith.cmpi eq, %arg2, %c2_i32 : i32
    %60 = arith.extui %59 : i1 to i32
    %c0_i32_70 = arith.constant 0 : i32
    %61 = arith.cmpi ne, %60, %c0_i32_70 : i32
    scf.if %61 {
      %c0_71 = arith.constant 0 : index
      %c0_72 = arith.constant 0 : index
      %62 = vector.load %arg5[%c0_71, %c0_72] : memref<4x1xf32, #tpu.memory_space<vmem>>, vector<4x1xf32>
      %63 = vector.broadcast %62 : vector<4x1xf32> to vector<4x288xf32>
      %64 = arith.addf %57, %63 : vector<4x288xf32>
      %65 = arith.truncf %64 : vector<4x288xf32> to vector<4x288xbf16>
      %c0_73 = arith.constant 0 : index
      %c0_74 = arith.constant 0 : index
      %c0_75 = arith.constant 0 : index
      %c0_76 = arith.constant 0 : index
      %66 = vector.load %arg7[%c0_73, %c0_74, %c0_75, %c0_76] : memref<1x1x4x288xbf16, #tpu.memory_space<vmem>>, vector<1x1x4x288xbf16>
      %67 = vector.shape_cast %66 : vector<1x1x4x288xbf16> to vector<4x288xbf16>
      %68 = vector.shape_cast %65 : vector<4x288xbf16> to vector<1x1x4x288xbf16>
      tpu.vector_store %arg7[%c0_73, %c0_74, %c0_75, %c0_76], %68 {strides = array<i32>} : memref<1x1x4x288xbf16, #tpu.memory_space<vmem>>, vector<1x1x4x288xbf16>,
      %c0_77 = arith.constant 0 : index
      %c0_78 = arith.constant 0 : index
      %69 = vector.load %arg6[%c0_77, %c0_78] : memref<1x288xf32, #tpu.memory_space<vmem>>, vector<1x288xf32>
      %70 = vector.broadcast %69 : vector<1x288xf32> to vector<4x288xf32>
      %71 = arith.mulf %64, %70 : vector<4x288xf32>
      %cst_79 = arith.constant dense<0.000000e+00> : vector<4xf32>
      %72 = vector.multi_reduction <add>, %71, %cst_79 [1] : vector<4x288xf32> to vector<4xf32>
      %73 = vector.shape_cast %72 : vector<4xf32> to vector<4x1xf32>
      %c0_80 = arith.constant 0 : index
      %c0_81 = arith.constant 0 : index
      %c0_82 = arith.constant 0 : index
      %c0_83 = arith.constant 0 : index
      %74 = vector.load %arg8[%c0_80, %c0_81, %c0_82, %c0_83] : memref<1x1x4x1xf32, #tpu.memory_space<vmem>>, vector<1x1x4x1xf32>
      %75 = vector.shape_cast %74 : vector<1x1x4x1xf32> to vector<4x1xf32>
      %76 = vector.shape_cast %73 : vector<4x1xf32> to vector<1x1x4x1xf32>
      tpu.vector_store %arg8[%c0_80, %c0_81, %c0_82, %c0_83], %76 {strides = array<i32>} : memref<1x1x4x1xf32, #tpu.memory_space<vmem>>, vector<1x1x4x1xf32>,
      %77 = arith.mulf %64, %64 : vector<4x288xf32>
      %78 = vector.broadcast %69 : vector<1x288xf32> to vector<4x288xf32>
      %79 = arith.mulf %77, %78 : vector<4x288xf32>
      %cst_84 = arith.constant dense<0.000000e+00> : vector<4xf32>
      %80 = vector.multi_reduction <add>, %79, %cst_84 [1] : vector<4x288xf32> to vector<4xf32>
      %81 = vector.shape_cast %80 : vector<4xf32> to vector<4x1xf32>
      %c0_85 = arith.constant 0 : index
      %c0_86 = arith.constant 0 : index
      %c0_87 = arith.constant 0 : index
      %c0_88 = arith.constant 0 : index
      %82 = vector.load %arg9[%c0_85, %c0_86, %c0_87, %c0_88] : memref<1x1x4x1xf32, #tpu.memory_space<vmem>>, vector<1x1x4x1xf32>
      %83 = vector.shape_cast %82 : vector<1x1x4x1xf32> to vector<4x1xf32>
      %84 = vector.shape_cast %81 : vector<4x1xf32> to vector<1x1x4x1xf32>
      tpu.vector_store %arg9[%c0_85, %c0_86, %c0_87, %c0_88], %84 {strides = array<i32>} : memref<1x1x4x1xf32, #tpu.memory_space<vmem>>, vector<1x1x4x1xf32>,
    } else {
    }
    return
  }
  func.func @transform_0(%arg0: i32, %arg1: i32, %arg2: i32) -> (i32, i32, i32, i32) {
    %0 = arith.addi %arg1, %arg2 : i32
    %c0_i32 = arith.constant 0 : i32
    %c0_i32_0 = arith.constant 0 : i32
    %c0_i32_1 = arith.constant 0 : i32
    return %arg0, %0, %c0_i32, %c0_i32_0 : i32, i32, i32, i32
  }
  func.func @transform_1(%arg0: i32, %arg1: i32, %arg2: i32) -> (i32, i32, i32, i32) {
    %c0_i32 = arith.constant 0 : i32
    %c0_i32_0 = arith.constant 0 : i32
    %c0_i32_1 = arith.constant 0 : i32
    %c0_i32_2 = arith.constant 0 : i32
    return %arg2, %c0_i32, %c0_i32_0, %c0_i32_1 : i32, i32, i32, i32
  }
  func.func @transform_2(%arg0: i32, %arg1: i32, %arg2: i32) -> (i32, i32) {
    %c0_i32 = arith.constant 0 : i32
    %c0_i32_0 = arith.constant 0 : i32
    %c0_i32_1 = arith.constant 0 : i32
    return %c0_i32, %c0_i32_0 : i32, i32
  }
  func.func @transform_3(%arg0: i32, %arg1: i32, %arg2: i32) -> (i32, i32) {
    %c0_i32 = arith.constant 0 : i32
    %c0_i32_0 = arith.constant 0 : i32
    %c0_i32_1 = arith.constant 0 : i32
    return %c0_i32, %c0_i32_0 : i32, i32
  }
  func.func @transform_4(%arg0: i32, %arg1: i32, %arg2: i32) -> (i32, i32, i32, i32) {
    %c0_i32 = arith.constant 0 : i32
    %c0_i32_0 = arith.constant 0 : i32
    %c0_i32_1 = arith.constant 0 : i32
    return %arg0, %arg1, %c0_i32, %c0_i32_0 : i32, i32, i32, i32
  }
  func.func @transform_5(%arg0: i32, %arg1: i32, %arg2: i32) -> (i32, i32, i32, i32) {
    %c0_i32 = arith.constant 0 : i32
    %c0_i32_0 = arith.constant 0 : i32
    %c0_i32_1 = arith.constant 0 : i32
    return %arg0, %arg1, %c0_i32, %c0_i32_0 : i32, i32, i32, i32
  }
  func.func @transform_6(%arg0: i32, %arg1: i32, %arg2: i32) -> (i32, i32, i32, i32) {
    %c0_i32 = arith.constant 0 : i32
    %c0_i32_0 = arith.constant 0 : i32
    %c0_i32_1 = arith.constant 0 : i32
    return %arg0, %arg1, %c0_i32, %c0_i32_0 : i32, i32, i32, i32
  }
}

module attributes {stable_mosaic.version = 11 : i64} {
  func.func @kernel(%arg0: i32, %arg1: i32, %arg2: memref<1x1x4x288xbf16, #tpu.memory_space<vmem>>, %arg3: memref<4x1xf32, #tpu.memory_space<vmem>>, %arg4: memref<4x1xf32, #tpu.memory_space<vmem>>, %arg5: memref<1x288xf32, #tpu.memory_space<vmem>>, %arg6: memref<1x1x4x342xbf16, #tpu.memory_space<vmem>>) attributes {dimension_semantics = [#tpu.dimension_semantics<parallel>, #tpu.dimension_semantics<parallel>], iteration_bounds = array<i64: 2, 18>, scalar_prefetch = 0 : i64, scratch_operands = 0 : i64, tpu.core_type = #tpu.core_type<tc>, window_params = [{transform_indices = @transform_0, window_bounds = array<i64: 1, 1, 4, 288>}, {pipeline_mode = #tpu.pipeline_mode<synchronous>, transform_indices = @transform_1, window_bounds = array<i64: 4, 1>}, {pipeline_mode = #tpu.pipeline_mode<synchronous>, transform_indices = @transform_2, window_bounds = array<i64: 4, 1>}, {pipeline_mode = #tpu.pipeline_mode<synchronous>, transform_indices = @transform_3, window_bounds = array<i64: 1, 288>}, {transform_indices = @transform_4, window_bounds = array<i64: 1, 1, 4, 342>}]} {
    %cst = arith.constant 0.000000e+00 : bf16
    %0 = vector.broadcast %cst : bf16 to vector<4x342xbf16>
    %c0 = arith.constant 0 : index
    %c0_0 = arith.constant 0 : index
    %c0_1 = arith.constant 0 : index
    %c0_2 = arith.constant 0 : index
    %1 = vector.load %arg6[%c0, %c0_0, %c0_1, %c0_2] : memref<1x1x4x342xbf16, #tpu.memory_space<vmem>>, vector<1x1x4x342xbf16>
    %2 = vector.shape_cast %1 : vector<1x1x4x342xbf16> to vector<4x342xbf16>
    %3 = vector.shape_cast %0 : vector<4x342xbf16> to vector<1x1x4x342xbf16>
    tpu.vector_store %arg6[%c0, %c0_0, %c0_1, %c0_2], %3 {strides = array<i32>} : memref<1x1x4x342xbf16, #tpu.memory_space<vmem>>, vector<1x1x4x342xbf16>,
    %c1_i32 = arith.constant 1 : i32
    %4 = arith.cmpi sge, %arg1, %c1_i32 : i32
    %c16_i32 = arith.constant 16 : i32
    %5 = arith.cmpi sle, %arg1, %c16_i32 : i32
    %6 = arith.andi %4, %5 : i1
    %7 = arith.extui %6 : i1 to i32
    %c0_i32 = arith.constant 0 : i32
    %8 = arith.cmpi ne, %7, %c0_i32 : i32
    scf.if %8 {
      %c0_3 = arith.constant 0 : index
      %c0_4 = arith.constant 0 : index
      %c0_5 = arith.constant 0 : index
      %c0_6 = arith.constant 0 : index
      %9 = vector.load %arg2[%c0_3, %c0_4, %c0_5, %c0_6] : memref<1x1x4x288xbf16, #tpu.memory_space<vmem>>, vector<1x1x4x288xbf16>
      %10 = vector.shape_cast %9 : vector<1x1x4x288xbf16> to vector<4x288xbf16>
      %11 = arith.extf %10 : vector<4x288xbf16> to vector<4x288xf32>
      %c0_7 = arith.constant 0 : index
      %c0_8 = arith.constant 0 : index
      %12 = vector.load %arg3[%c0_7, %c0_8] : memref<4x1xf32, #tpu.memory_space<vmem>>, vector<4x1xf32>
      %13 = vector.broadcast %12 : vector<4x1xf32> to vector<4x288xf32>
      %14 = arith.mulf %11, %13 : vector<4x288xf32>
      %c0_9 = arith.constant 0 : index
      %c0_10 = arith.constant 0 : index
      %15 = vector.load %arg4[%c0_9, %c0_10] : memref<4x1xf32, #tpu.memory_space<vmem>>, vector<4x1xf32>
      %16 = vector.broadcast %15 : vector<4x1xf32> to vector<4x288xf32>
      %17 = arith.addf %14, %16 : vector<4x288xf32>
      %cst_11 = arith.constant 0.000000e+00 : f32
      %18 = vector.broadcast %cst_11 : f32 to vector<4x288xf32>
      %19 = arith.maximumf %17, %18 : vector<4x288xf32>
      %c0_12 = arith.constant 0 : index
      %c0_13 = arith.constant 0 : index
      %20 = vector.load %arg5[%c0_12, %c0_13] : memref<1x288xf32, #tpu.memory_space<vmem>>, vector<1x288xf32>
      %21 = vector.broadcast %20 : vector<1x288xf32> to vector<4x288xf32>
      %22 = arith.mulf %19, %21 : vector<4x288xf32>
      %23 = arith.truncf %22 : vector<4x288xf32> to vector<4x288xbf16>
      %c0_14 = arith.constant 0 : index
      %c0_15 = arith.constant 0 : index
      %c0_16 = arith.constant 0 : index
      %c19 = arith.constant 19 : index
      %24 = vector.load %arg6[%c0_14, %c0_15, %c0_16, %c19] : memref<1x1x4x342xbf16, #tpu.memory_space<vmem>>, vector<1x1x4x288xbf16>
      %25 = vector.shape_cast %24 : vector<1x1x4x288xbf16> to vector<4x288xbf16>
      %26 = vector.shape_cast %23 : vector<4x288xbf16> to vector<1x1x4x288xbf16>
      tpu.vector_store %arg6[%c0_14, %c0_15, %c0_16, %c19], %26 {strides = array<i32>} : memref<1x1x4x342xbf16, #tpu.memory_space<vmem>>, vector<1x1x4x288xbf16>,
    } else {
    }
    return
  }
  func.func @transform_0(%arg0: i32, %arg1: i32) -> (i32, i32, i32, i32) {
    %c1_i32 = arith.constant 1 : i32
    %0 = arith.subi %arg1, %c1_i32 : i32
    %c0_i32 = arith.constant 0 : i32
    %1 = arith.maxsi %0, %c0_i32 : i32
    %c15_i32 = arith.constant 15 : i32
    %2 = arith.minsi %1, %c15_i32 : i32
    %c0_i32_0 = arith.constant 0 : i32
    %c0_i32_1 = arith.constant 0 : i32
    %c0_i32_2 = arith.constant 0 : i32
    return %arg0, %2, %c0_i32_0, %c0_i32_1 : i32, i32, i32, i32
  }
  func.func @transform_1(%arg0: i32, %arg1: i32) -> (i32, i32) {
    %c0_i32 = arith.constant 0 : i32
    %c0_i32_0 = arith.constant 0 : i32
    %c0_i32_1 = arith.constant 0 : i32
    return %c0_i32, %c0_i32_0 : i32, i32
  }
  func.func @transform_2(%arg0: i32, %arg1: i32) -> (i32, i32) {
    %c0_i32 = arith.constant 0 : i32
    %c0_i32_0 = arith.constant 0 : i32
    %c0_i32_1 = arith.constant 0 : i32
    return %c0_i32, %c0_i32_0 : i32, i32
  }
  func.func @transform_3(%arg0: i32, %arg1: i32) -> (i32, i32) {
    %c0_i32 = arith.constant 0 : i32
    %c0_i32_0 = arith.constant 0 : i32
    %c0_i32_1 = arith.constant 0 : i32
    return %c0_i32, %c0_i32_0 : i32, i32
  }
  func.func @transform_4(%arg0: i32, %arg1: i32) -> (i32, i32, i32, i32) {
    %c0_i32 = arith.constant 0 : i32
    %c0_i32_0 = arith.constant 0 : i32
    %c0_i32_1 = arith.constant 0 : i32
    return %arg0, %arg1, %c0_i32, %c0_i32_0 : i32, i32, i32, i32
  }
}

module attributes {stable_mosaic.version = 11 : i64} {
  func.func @kernel(%arg0: i32, %arg1: i32, %arg2: i32, %arg3: memref<1x1x4x342xbf16, #tpu.memory_space<vmem>>, %arg4: memref<1x9x4x4xbf16, #tpu.memory_space<vmem>>, %arg5: memref<4x1xf32, #tpu.memory_space<vmem>>, %arg6: memref<1x288xf32, #tpu.memory_space<vmem>>, %arg7: memref<1x1x4x288xbf16, #tpu.memory_space<vmem>>, %arg8: memref<1x1x4x1xf32, #tpu.memory_space<vmem>>, %arg9: memref<1x1x4x1xf32, #tpu.memory_space<vmem>>, %arg10: memref<4x288xf32, #tpu.memory_space<vmem>>) attributes {dimension_semantics = [#tpu.dimension_semantics<parallel>, #tpu.dimension_semantics<parallel>, #tpu.dimension_semantics<arbitrary>], iteration_bounds = array<i64: 2, 16, 3>, scalar_prefetch = 0 : i64, scratch_operands = 1 : i64, tpu.core_type = #tpu.core_type<tc>, window_params = [{transform_indices = @transform_0, window_bounds = array<i64: 1, 1, 4, 342>}, {transform_indices = @transform_1, window_bounds = array<i64: 1, 9, 4, 4>}, {pipeline_mode = #tpu.pipeline_mode<synchronous>, transform_indices = @transform_2, window_bounds = array<i64: 4, 1>}, {pipeline_mode = #tpu.pipeline_mode<synchronous>, transform_indices = @transform_3, window_bounds = array<i64: 1, 288>}, {transform_indices = @transform_4, window_bounds = array<i64: 1, 1, 4, 288>}, {transform_indices = @transform_5, window_bounds = array<i64: 1, 1, 4, 1>}, {transform_indices = @transform_6, window_bounds = array<i64: 1, 1, 4, 1>}]} {
    %c0_i32 = arith.constant 0 : i32
    %0 = arith.cmpi eq, %arg2, %c0_i32 : i32
    %1 = arith.extui %0 : i1 to i32
    %c0_i32_0 = arith.constant 0 : i32
    %2 = arith.cmpi ne, %1, %c0_i32_0 : i32
    scf.if %2 {
      %cst_71 = arith.constant 0.000000e+00 : f32
      %62 = vector.broadcast %cst_71 : f32 to vector<4x288xf32>
      %c0_72 = arith.constant 0 : index
      %c0_73 = arith.constant 0 : index
      %63 = vector.load %arg10[%c0_72, %c0_73] : memref<4x288xf32, #tpu.memory_space<vmem>>, vector<4x288xf32>
      tpu.vector_store %arg10[%c0_72, %c0_73], %62 {strides = array<i32>} : memref<4x288xf32, #tpu.memory_space<vmem>>, vector<4x288xf32>,
    } else {
    }
    %c0 = arith.constant 0 : index
    %c0_1 = arith.constant 0 : index
    %3 = vector.load %arg10[%c0, %c0_1] : memref<4x288xf32, #tpu.memory_space<vmem>>, vector<4x288xf32>
    %c0_2 = arith.constant 0 : index
    %c0_3 = arith.constant 0 : index
    %c0_4 = arith.constant 0 : index
    %c0_5 = arith.constant 0 : index
    %4 = vector.load %arg4[%c0_2, %c0_3, %c0_4, %c0_5] : memref<1x9x4x4xbf16, #tpu.memory_space<vmem>>, vector<1x1x4x4xbf16>
    %5 = vector.shape_cast %4 : vector<1x1x4x4xbf16> to vector<4x4xbf16>
    %c0_6 = arith.constant 0 : index
    %c0_7 = arith.constant 0 : index
    %c0_8 = arith.constant 0 : index
    %c0_9 = arith.constant 0 : index
    %6 = vector.load %arg3[%c0_6, %c0_7, %c0_8, %c0_9] : memref<1x1x4x342xbf16, #tpu.memory_space<vmem>>, vector<1x1x4x288xbf16>
    %7 = vector.shape_cast %6 : vector<1x1x4x288xbf16> to vector<4x288xbf16>
    %cst = arith.constant dense<0.000000e+00> : vector<4x288xf32>
    %8 = tpu.matmul %5, %7, %cst {dimension_numbers = #tpu.dot_dimension_numbers<[1], [0], [0], [1], [0, 0, 1, 1], [], []>} : vector<4x4xbf16>, vector<4x288xbf16>, vector<4x288xf32> -> vector<4x288xf32>
    %9 = arith.addf %3, %8 : vector<4x288xf32>
    %c0_10 = arith.constant 0 : index
    %c1 = arith.constant 1 : index
    %c0_11 = arith.constant 0 : index
    %c0_12 = arith.constant 0 : index
    %10 = vector.load %arg4[%c0_10, %c1, %c0_11, %c0_12] : memref<1x9x4x4xbf16, #tpu.memory_space<vmem>>, vector<1x1x4x4xbf16>
    %11 = vector.shape_cast %10 : vector<1x1x4x4xbf16> to vector<4x4xbf16>
    %c0_13 = arith.constant 0 : index
    %c0_14 = arith.constant 0 : index
    %c0_15 = arith.constant 0 : index
    %c1_16 = arith.constant 1 : index
    %12 = vector.load %arg3[%c0_13, %c0_14, %c0_15, %c1_16] : memref<1x1x4x342xbf16, #tpu.memory_space<vmem>>, vector<1x1x4x288xbf16>
    %13 = vector.shape_cast %12 : vector<1x1x4x288xbf16> to vector<4x288xbf16>
    %cst_17 = arith.constant dense<0.000000e+00> : vector<4x288xf32>
    %14 = tpu.matmul %11, %13, %cst_17 {dimension_numbers = #tpu.dot_dimension_numbers<[1], [0], [0], [1], [0, 0, 1, 1], [], []>} : vector<4x4xbf16>, vector<4x288xbf16>, vector<4x288xf32> -> vector<4x288xf32>
    %15 = arith.addf %9, %14 : vector<4x288xf32>
    %c0_18 = arith.constant 0 : index
    %c2 = arith.constant 2 : index
    %c0_19 = arith.constant 0 : index
    %c0_20 = arith.constant 0 : index
    %16 = vector.load %arg4[%c0_18, %c2, %c0_19, %c0_20] : memref<1x9x4x4xbf16, #tpu.memory_space<vmem>>, vector<1x1x4x4xbf16>
    %17 = vector.shape_cast %16 : vector<1x1x4x4xbf16> to vector<4x4xbf16>
    %c0_21 = arith.constant 0 : index
    %c0_22 = arith.constant 0 : index
    %c0_23 = arith.constant 0 : index
    %c2_24 = arith.constant 2 : index
    %18 = vector.load %arg3[%c0_21, %c0_22, %c0_23, %c2_24] : memref<1x1x4x342xbf16, #tpu.memory_space<vmem>>, vector<1x1x4x288xbf16>
    %19 = vector.shape_cast %18 : vector<1x1x4x288xbf16> to vector<4x288xbf16>
    %cst_25 = arith.constant dense<0.000000e+00> : vector<4x288xf32>
    %20 = tpu.matmul %17, %19, %cst_25 {dimension_numbers = #tpu.dot_dimension_numbers<[1], [0], [0], [1], [0, 0, 1, 1], [], []>} : vector<4x4xbf16>, vector<4x288xbf16>, vector<4x288xf32> -> vector<4x288xf32>
    %21 = arith.addf %15, %20 : vector<4x288xf32>
    %c0_26 = arith.constant 0 : index
    %c3 = arith.constant 3 : index
    %c0_27 = arith.constant 0 : index
    %c0_28 = arith.constant 0 : index
    %22 = vector.load %arg4[%c0_26, %c3, %c0_27, %c0_28] : memref<1x9x4x4xbf16, #tpu.memory_space<vmem>>, vector<1x1x4x4xbf16>
    %23 = vector.shape_cast %22 : vector<1x1x4x4xbf16> to vector<4x4xbf16>
    %c0_29 = arith.constant 0 : index
    %c0_30 = arith.constant 0 : index
    %c0_31 = arith.constant 0 : index
    %c18 = arith.constant 18 : index
    %24 = vector.load %arg3[%c0_29, %c0_30, %c0_31, %c18] : memref<1x1x4x342xbf16, #tpu.memory_space<vmem>>, vector<1x1x4x288xbf16>
    %25 = vector.shape_cast %24 : vector<1x1x4x288xbf16> to vector<4x288xbf16>
    %cst_32 = arith.constant dense<0.000000e+00> : vector<4x288xf32>
    %26 = tpu.matmul %23, %25, %cst_32 {dimension_numbers = #tpu.dot_dimension_numbers<[1], [0], [0], [1], [0, 0, 1, 1], [], []>} : vector<4x4xbf16>, vector<4x288xbf16>, vector<4x288xf32> -> vector<4x288xf32>
    %27 = arith.addf %21, %26 : vector<4x288xf32>
    %c0_33 = arith.constant 0 : index
    %c4 = arith.constant 4 : index
    %c0_34 = arith.constant 0 : index
    %c0_35 = arith.constant 0 : index
    %28 = vector.load %arg4[%c0_33, %c4, %c0_34, %c0_35] : memref<1x9x4x4xbf16, #tpu.memory_space<vmem>>, vector<1x1x4x4xbf16>
    %29 = vector.shape_cast %28 : vector<1x1x4x4xbf16> to vector<4x4xbf16>
    %c0_36 = arith.constant 0 : index
    %c0_37 = arith.constant 0 : index
    %c0_38 = arith.constant 0 : index
    %c19 = arith.constant 19 : index
    %30 = vector.load %arg3[%c0_36, %c0_37, %c0_38, %c19] : memref<1x1x4x342xbf16, #tpu.memory_space<vmem>>, vector<1x1x4x288xbf16>
    %31 = vector.shape_cast %30 : vector<1x1x4x288xbf16> to vector<4x288xbf16>
    %cst_39 = arith.constant dense<0.000000e+00> : vector<4x288xf32>
    %32 = tpu.matmul %29, %31, %cst_39 {dimension_numbers = #tpu.dot_dimension_numbers<[1], [0], [0], [1], [0, 0, 1, 1], [], []>} : vector<4x4xbf16>, vector<4x288xbf16>, vector<4x288xf32> -> vector<4x288xf32>
    %33 = arith.addf %27, %32 : vector<4x288xf32>
    %c0_40 = arith.constant 0 : index
    %c5 = arith.constant 5 : index
    %c0_41 = arith.constant 0 : index
    %c0_42 = arith.constant 0 : index
    %34 = vector.load %arg4[%c0_40, %c5, %c0_41, %c0_42] : memref<1x9x4x4xbf16, #tpu.memory_space<vmem>>, vector<1x1x4x4xbf16>
    %35 = vector.shape_cast %34 : vector<1x1x4x4xbf16> to vector<4x4xbf16>
    %c0_43 = arith.constant 0 : index
    %c0_44 = arith.constant 0 : index
    %c0_45 = arith.constant 0 : index
    %c20 = arith.constant 20 : index
    %36 = vector.load %arg3[%c0_43, %c0_44, %c0_45, %c20] : memref<1x1x4x342xbf16, #tpu.memory_space<vmem>>, vector<1x1x4x288xbf16>
    %37 = vector.shape_cast %36 : vector<1x1x4x288xbf16> to vector<4x288xbf16>
    %cst_46 = arith.constant dense<0.000000e+00> : vector<4x288xf32>
    %38 = tpu.matmul %35, %37, %cst_46 {dimension_numbers = #tpu.dot_dimension_numbers<[1], [0], [0], [1], [0, 0, 1, 1], [], []>} : vector<4x4xbf16>, vector<4x288xbf16>, vector<4x288xf32> -> vector<4x288xf32>
    %39 = arith.addf %33, %38 : vector<4x288xf32>
    %c0_47 = arith.constant 0 : index
    %c6 = arith.constant 6 : index
    %c0_48 = arith.constant 0 : index
    %c0_49 = arith.constant 0 : index
    %40 = vector.load %arg4[%c0_47, %c6, %c0_48, %c0_49] : memref<1x9x4x4xbf16, #tpu.memory_space<vmem>>, vector<1x1x4x4xbf16>
    %41 = vector.shape_cast %40 : vector<1x1x4x4xbf16> to vector<4x4xbf16>
    %c0_50 = arith.constant 0 : index
    %c0_51 = arith.constant 0 : index
    %c0_52 = arith.constant 0 : index
    %c36 = arith.constant 36 : index
    %42 = vector.load %arg3[%c0_50, %c0_51, %c0_52, %c36] : memref<1x1x4x342xbf16, #tpu.memory_space<vmem>>, vector<1x1x4x288xbf16>
    %43 = vector.shape_cast %42 : vector<1x1x4x288xbf16> to vector<4x288xbf16>
    %cst_53 = arith.constant dense<0.000000e+00> : vector<4x288xf32>
    %44 = tpu.matmul %41, %43, %cst_53 {dimension_numbers = #tpu.dot_dimension_numbers<[1], [0], [0], [1], [0, 0, 1, 1], [], []>} : vector<4x4xbf16>, vector<4x288xbf16>, vector<4x288xf32> -> vector<4x288xf32>
    %45 = arith.addf %39, %44 : vector<4x288xf32>
    %c0_54 = arith.constant 0 : index
    %c7 = arith.constant 7 : index
    %c0_55 = arith.constant 0 : index
    %c0_56 = arith.constant 0 : index
    %46 = vector.load %arg4[%c0_54, %c7, %c0_55, %c0_56] : memref<1x9x4x4xbf16, #tpu.memory_space<vmem>>, vector<1x1x4x4xbf16>
    %47 = vector.shape_cast %46 : vector<1x1x4x4xbf16> to vector<4x4xbf16>
    %c0_57 = arith.constant 0 : index
    %c0_58 = arith.constant 0 : index
    %c0_59 = arith.constant 0 : index
    %c37 = arith.constant 37 : index
    %48 = vector.load %arg3[%c0_57, %c0_58, %c0_59, %c37] : memref<1x1x4x342xbf16, #tpu.memory_space<vmem>>, vector<1x1x4x288xbf16>
    %49 = vector.shape_cast %48 : vector<1x1x4x288xbf16> to vector<4x288xbf16>
    %cst_60 = arith.constant dense<0.000000e+00> : vector<4x288xf32>
    %50 = tpu.matmul %47, %49, %cst_60 {dimension_numbers = #tpu.dot_dimension_numbers<[1], [0], [0], [1], [0, 0, 1, 1], [], []>} : vector<4x4xbf16>, vector<4x288xbf16>, vector<4x288xf32> -> vector<4x288xf32>
    %51 = arith.addf %45, %50 : vector<4x288xf32>
    %c0_61 = arith.constant 0 : index
    %c8 = arith.constant 8 : index
    %c0_62 = arith.constant 0 : index
    %c0_63 = arith.constant 0 : index
    %52 = vector.load %arg4[%c0_61, %c8, %c0_62, %c0_63] : memref<1x9x4x4xbf16, #tpu.memory_space<vmem>>, vector<1x1x4x4xbf16>
    %53 = vector.shape_cast %52 : vector<1x1x4x4xbf16> to vector<4x4xbf16>
    %c0_64 = arith.constant 0 : index
    %c0_65 = arith.constant 0 : index
    %c0_66 = arith.constant 0 : index
    %c38 = arith.constant 38 : index
    %54 = vector.load %arg3[%c0_64, %c0_65, %c0_66, %c38] : memref<1x1x4x342xbf16, #tpu.memory_space<vmem>>, vector<1x1x4x288xbf16>
    %55 = vector.shape_cast %54 : vector<1x1x4x288xbf16> to vector<4x288xbf16>
    %cst_67 = arith.constant dense<0.000000e+00> : vector<4x288xf32>
    %56 = tpu.matmul %53, %55, %cst_67 {dimension_numbers = #tpu.dot_dimension_numbers<[1], [0], [0], [1], [0, 0, 1, 1], [], []>} : vector<4x4xbf16>, vector<4x288xbf16>, vector<4x288xf32> -> vector<4x288xf32>
    %57 = arith.addf %51, %56 : vector<4x288xf32>
    %c0_68 = arith.constant 0 : index
    %c0_69 = arith.constant 0 : index
    %58 = vector.load %arg10[%c0_68, %c0_69] : memref<4x288xf32, #tpu.memory_space<vmem>>, vector<4x288xf32>
    tpu.vector_store %arg10[%c0_68, %c0_69], %57 {strides = array<i32>} : memref<4x288xf32, #tpu.memory_space<vmem>>, vector<4x288xf32>,
    %c2_i32 = arith.constant 2 : i32
    %59 = arith.cmpi eq, %arg2, %c2_i32 : i32
    %60 = arith.extui %59 : i1 to i32
    %c0_i32_70 = arith.constant 0 : i32
    %61 = arith.cmpi ne, %60, %c0_i32_70 : i32
    scf.if %61 {
      %c0_71 = arith.constant 0 : index
      %c0_72 = arith.constant 0 : index
      %62 = vector.load %arg5[%c0_71, %c0_72] : memref<4x1xf32, #tpu.memory_space<vmem>>, vector<4x1xf32>
      %63 = vector.broadcast %62 : vector<4x1xf32> to vector<4x288xf32>
      %64 = arith.addf %57, %63 : vector<4x288xf32>
      %65 = arith.truncf %64 : vector<4x288xf32> to vector<4x288xbf16>
      %c0_73 = arith.constant 0 : index
      %c0_74 = arith.constant 0 : index
      %c0_75 = arith.constant 0 : index
      %c0_76 = arith.constant 0 : index
      %66 = vector.load %arg7[%c0_73, %c0_74, %c0_75, %c0_76] : memref<1x1x4x288xbf16, #tpu.memory_space<vmem>>, vector<1x1x4x288xbf16>
      %67 = vector.shape_cast %66 : vector<1x1x4x288xbf16> to vector<4x288xbf16>
      %68 = vector.shape_cast %65 : vector<4x288xbf16> to vector<1x1x4x288xbf16>
      tpu.vector_store %arg7[%c0_73, %c0_74, %c0_75, %c0_76], %68 {strides = array<i32>} : memref<1x1x4x288xbf16, #tpu.memory_space<vmem>>, vector<1x1x4x288xbf16>,
      %c0_77 = arith.constant 0 : index
      %c0_78 = arith.constant 0 : index
      %69 = vector.load %arg6[%c0_77, %c0_78] : memref<1x288xf32, #tpu.memory_space<vmem>>, vector<1x288xf32>
      %70 = vector.broadcast %69 : vector<1x288xf32> to vector<4x288xf32>
      %71 = arith.mulf %64, %70 : vector<4x288xf32>
      %cst_79 = arith.constant dense<0.000000e+00> : vector<4xf32>
      %72 = vector.multi_reduction <add>, %71, %cst_79 [1] : vector<4x288xf32> to vector<4xf32>
      %73 = vector.shape_cast %72 : vector<4xf32> to vector<4x1xf32>
      %c0_80 = arith.constant 0 : index
      %c0_81 = arith.constant 0 : index
      %c0_82 = arith.constant 0 : index
      %c0_83 = arith.constant 0 : index
      %74 = vector.load %arg8[%c0_80, %c0_81, %c0_82, %c0_83] : memref<1x1x4x1xf32, #tpu.memory_space<vmem>>, vector<1x1x4x1xf32>
      %75 = vector.shape_cast %74 : vector<1x1x4x1xf32> to vector<4x1xf32>
      %76 = vector.shape_cast %73 : vector<4x1xf32> to vector<1x1x4x1xf32>
      tpu.vector_store %arg8[%c0_80, %c0_81, %c0_82, %c0_83], %76 {strides = array<i32>} : memref<1x1x4x1xf32, #tpu.memory_space<vmem>>, vector<1x1x4x1xf32>,
      %77 = arith.mulf %64, %64 : vector<4x288xf32>
      %78 = vector.broadcast %69 : vector<1x288xf32> to vector<4x288xf32>
      %79 = arith.mulf %77, %78 : vector<4x288xf32>
      %cst_84 = arith.constant dense<0.000000e+00> : vector<4xf32>
      %80 = vector.multi_reduction <add>, %79, %cst_84 [1] : vector<4x288xf32> to vector<4xf32>
      %81 = vector.shape_cast %80 : vector<4xf32> to vector<4x1xf32>
      %c0_85 = arith.constant 0 : index
      %c0_86 = arith.constant 0 : index
      %c0_87 = arith.constant 0 : index
      %c0_88 = arith.constant 0 : index
      %82 = vector.load %arg9[%c0_85, %c0_86, %c0_87, %c0_88] : memref<1x1x4x1xf32, #tpu.memory_space<vmem>>, vector<1x1x4x1xf32>
      %83 = vector.shape_cast %82 : vector<1x1x4x1xf32> to vector<4x1xf32>
      %84 = vector.shape_cast %81 : vector<4x1xf32> to vector<1x1x4x1xf32>
      tpu.vector_store %arg9[%c0_85, %c0_86, %c0_87, %c0_88], %84 {strides = array<i32>} : memref<1x1x4x1xf32, #tpu.memory_space<vmem>>, vector<1x1x4x1xf32>,
    } else {
    }
    return
  }
  func.func @transform_0(%arg0: i32, %arg1: i32, %arg2: i32) -> (i32, i32, i32, i32) {
    %0 = arith.addi %arg1, %arg2 : i32
    %c0_i32 = arith.constant 0 : i32
    %c0_i32_0 = arith.constant 0 : i32
    %c0_i32_1 = arith.constant 0 : i32
    return %arg0, %0, %c0_i32, %c0_i32_0 : i32, i32, i32, i32
  }
  func.func @transform_1(%arg0: i32, %arg1: i32, %arg2: i32) -> (i32, i32, i32, i32) {
    %c0_i32 = arith.constant 0 : i32
    %c0_i32_0 = arith.constant 0 : i32
    %c0_i32_1 = arith.constant 0 : i32
    %c0_i32_2 = arith.constant 0 : i32
    return %arg2, %c0_i32, %c0_i32_0, %c0_i32_1 : i32, i32, i32, i32
  }
  func.func @transform_2(%arg0: i32, %arg1: i32, %arg2: i32) -> (i32, i32) {
    %c0_i32 = arith.constant 0 : i32
    %c0_i32_0 = arith.constant 0 : i32
    %c0_i32_1 = arith.constant 0 : i32
    return %c0_i32, %c0_i32_0 : i32, i32
  }
  func.func @transform_3(%arg0: i32, %arg1: i32, %arg2: i32) -> (i32, i32) {
    %c0_i32 = arith.constant 0 : i32
    %c0_i32_0 = arith.constant 0 : i32
    %c0_i32_1 = arith.constant 0 : i32
    return %c0_i32, %c0_i32_0 : i32, i32
  }
  func.func @transform_4(%arg0: i32, %arg1: i32, %arg2: i32) -> (i32, i32, i32, i32) {
    %c0_i32 = arith.constant 0 : i32
    %c0_i32_0 = arith.constant 0 : i32
    %c0_i32_1 = arith.constant 0 : i32
    return %arg0, %arg1, %c0_i32, %c0_i32_0 : i32, i32, i32, i32
  }
  func.func @transform_5(%arg0: i32, %arg1: i32, %arg2: i32) -> (i32, i32, i32, i32) {
    %c0_i32 = arith.constant 0 : i32
    %c0_i32_0 = arith.constant 0 : i32
    %c0_i32_1 = arith.constant 0 : i32
    return %arg0, %arg1, %c0_i32, %c0_i32_0 : i32, i32, i32, i32
  }
  func.func @transform_6(%arg0: i32, %arg1: i32, %arg2: i32) -> (i32, i32, i32, i32) {
    %c0_i32 = arith.constant 0 : i32
    %c0_i32_0 = arith.constant 0 : i32
    %c0_i32_1 = arith.constant 0 : i32
    return %arg0, %arg1, %c0_i32, %c0_i32_0 : i32, i32, i32, i32
  }
}

module attributes {stable_mosaic.version = 11 : i64} {
  func.func @_bn_relu_kernel(%arg0: i32, %arg1: i32, %arg2: memref<1x8x4x288xbf16, #tpu.memory_space<vmem>>, %arg3: memref<4x1xf32, #tpu.memory_space<vmem>>, %arg4: memref<4x1xf32, #tpu.memory_space<vmem>>, %arg5: memref<1x8x4x288xf32, #tpu.memory_space<vmem>>) attributes {dimension_semantics = [#tpu.dimension_semantics<parallel>, #tpu.dimension_semantics<parallel>], iteration_bounds = array<i64: 2, 2>, scalar_prefetch = 0 : i64, scratch_operands = 0 : i64, tpu.core_type = #tpu.core_type<tc>, window_params = [{transform_indices = @transform_0, window_bounds = array<i64: 1, 8, 4, 288>}, {pipeline_mode = #tpu.pipeline_mode<synchronous>, transform_indices = @transform_1, window_bounds = array<i64: 4, 1>}, {pipeline_mode = #tpu.pipeline_mode<synchronous>, transform_indices = @transform_2, window_bounds = array<i64: 4, 1>}, {transform_indices = @transform_3, window_bounds = array<i64: 1, 8, 4, 288>}]} {
    %c0 = arith.constant 0 : index
    %c0_0 = arith.constant 0 : index
    %c0_1 = arith.constant 0 : index
    %c0_2 = arith.constant 0 : index
    %0 = vector.load %arg2[%c0, %c0_0, %c0_1, %c0_2] : memref<1x8x4x288xbf16, #tpu.memory_space<vmem>>, vector<1x8x4x288xbf16>
    %1 = vector.shape_cast %0 : vector<1x8x4x288xbf16> to vector<8x4x288xbf16>
    %2 = arith.extf %1 : vector<8x4x288xbf16> to vector<8x4x288xf32>
    %c0_3 = arith.constant 0 : index
    %c0_4 = arith.constant 0 : index
    %3 = vector.load %arg3[%c0_3, %c0_4] : memref<4x1xf32, #tpu.memory_space<vmem>>, vector<4x1xf32>
    %4 = vector.shape_cast %3 : vector<4x1xf32> to vector<1x4x1xf32>
    %5 = vector.broadcast %4 : vector<1x4x1xf32> to vector<8x4x288xf32>
    %6 = arith.mulf %2, %5 : vector<8x4x288xf32>
    %c0_5 = arith.constant 0 : index
    %c0_6 = arith.constant 0 : index
    %7 = vector.load %arg4[%c0_5, %c0_6] : memref<4x1xf32, #tpu.memory_space<vmem>>, vector<4x1xf32>
    %8 = vector.shape_cast %7 : vector<4x1xf32> to vector<1x4x1xf32>
    %9 = vector.broadcast %8 : vector<1x4x1xf32> to vector<8x4x288xf32>
    %10 = arith.addf %6, %9 : vector<8x4x288xf32>
    %cst = arith.constant 0.000000e+00 : f32
    %11 = vector.broadcast %cst : f32 to vector<8x4x288xf32>
    %12 = arith.maximumf %10, %11 : vector<8x4x288xf32>
    %c0_7 = arith.constant 0 : index
    %c0_8 = arith.constant 0 : index
    %c0_9 = arith.constant 0 : index
    %c0_10 = arith.constant 0 : index
    %13 = vector.load %arg5[%c0_7, %c0_8, %c0_9, %c0_10] : memref<1x8x4x288xf32, #tpu.memory_space<vmem>>, vector<1x8x4x288xf32>
    %14 = vector.shape_cast %13 : vector<1x8x4x288xf32> to vector<8x4x288xf32>
    %15 = vector.shape_cast %12 : vector<8x4x288xf32> to vector<1x8x4x288xf32>
    tpu.vector_store %arg5[%c0_7, %c0_8, %c0_9, %c0_10], %15 {strides = array<i32>} : memref<1x8x4x288xf32, #tpu.memory_space<vmem>>, vector<1x8x4x288xf32>,
    return
  }
  func.func @transform_0(%arg0: i32, %arg1: i32) -> (i32, i32, i32, i32) {
    %c0_i32 = arith.constant 0 : i32
    %c0_i32_0 = arith.constant 0 : i32
    %c0_i32_1 = arith.constant 0 : i32
    return %arg0, %arg1, %c0_i32, %c0_i32_0 : i32, i32, i32, i32
  }
  func.func @transform_1(%arg0: i32, %arg1: i32) -> (i32, i32) {
    %c0_i32 = arith.constant 0 : i32
    %c0_i32_0 = arith.constant 0 : i32
    %c0_i32_1 = arith.constant 0 : i32
    return %c0_i32, %c0_i32_0 : i32, i32
  }
  func.func @transform_2(%arg0: i32, %arg1: i32) -> (i32, i32) {
    %c0_i32 = arith.constant 0 : i32
    %c0_i32_0 = arith.constant 0 : i32
    %c0_i32_1 = arith.constant 0 : i32
    return %c0_i32, %c0_i32_0 : i32, i32
  }
  func.func @transform_3(%arg0: i32, %arg1: i32) -> (i32, i32, i32, i32) {
    %c0_i32 = arith.constant 0 : i32
    %c0_i32_0 = arith.constant 0 : i32
    %c0_i32_1 = arith.constant 0 : i32
    return %arg0, %arg1, %c0_i32, %c0_i32_0 : i32, i32, i32, i32
  }
}

</mosaic_0001>

<llo_original>
// kernel: tile.8
$region0: #{tile.8}
  #allocation2 [shape = 's32[1]{0}', space=sflag, size = 0x4, scoped, tag = 'scoped memory for tile.8']
  %s0 = inlined_call_operand.hbm [shape: f32[4], index: 0, kind: input, shape index: {}]
  %s1 = inlined_call_operand.vmem [shape: f32[8,4], index: 1, kind: output, shape index: {}]
  $region1: #{tile.8} parent=0
    #allocation0 [shape = 'u8[512]{0}', space=vmem, size = 0x400, scoped, tag = 'operand span for operand 0']
    #allocation1 [shape = 's32[1]{0}', space=sflag, size = 0x4, scoped, tag = 'scoped memory for tile.8']
    %2 = vsyncpa [#allocation1], 0
    // Predicated region
    $region2: #{tile.8} parent=1 // pred_check
      _
    $region3: #{tile.8} parent=1 // pred_check_branch
      %4 = sbr.rel (0) target = $region5
    $region4: #{tile.8} parent=1 // pred_region
      %s6 = ssub.s32 16, 16
      %7 = vsyncadd [#allocation1], %s6
      %s9 = sshll.u32 [#allocation0], 4
      %s10 = int_to_ptr.vmem [resolvable:$true] %s9
      %12 = dma.hbm_to_vmem [thread:$0]  %s0, 16, %s10, [#allocation1]
    $region5: #{tile.8} parent=1 // pred_fallthru
      _
    // Predicated region
    $region6: #{tile.8} parent=1 // pred_check
      _
    $region7: #{tile.8} parent=1 // pred_check_branch
      %14 = sbr.rel (0) target = $region9
    $region8: #{tile.8} parent=1 // pred_region
      %15 = dma.done [#allocation1], 16
    $region9: #{tile.8} parent=1 // pred_fallthru
      _
    %v16 = vld [vmem:[#allocation0] ss:$0 sm:$0xff]
    %17 = vst [vmem:[%s1] sm:$0xff] %v16
    %18 = vsyncpa [#allocation1], 1

// kernel: tile.0
$region0: #{tile.0}
  %s0 = inlined_call_operand.vmem [shape: f32[8,4], index: 0, kind: input, shape index: {}]
  %s1 = inlined_call_operand.vmem [shape: f32[32,1], index: 1, kind: output, shape index: {}]
  %v2 = vld [vmem:[%s0] sm:$0xff]
  %vm3 = vcmask 7168
  %4 = vst.msk [vmem:[%s1] ss:$4 sm:$0xff] %vm3, %v2
  %v5 = vld [vmem:[%s0] sm:$0xff]
  %6 = vrot.lane.b32.xlu0 %v5, 127
  %v7 = vpop.permute.xlu0 %6
  %vm8 = vcmask 7168
  %s9 = scalar_lea.vmem %s1, 1
  %10 = vst.msk [vmem:[%s9] ss:$4 sm:$0xff] %vm8, %v7
  %v11 = vld [vmem:[%s0] sm:$0xff]
  %12 = vrot.lane.b32.xlu0 %v11, 126
  %v13 = vpop.permute.xlu0 %12
  %vm14 = vcmask 7168
  %s15 = scalar_lea.vmem %s1, 2
  %16 = vst.msk [vmem:[%s15] ss:$4 sm:$0xff] %vm14, %v13
  %v17 = vld [vmem:[%s0] sm:$0xff]
  %18 = vrot.lane.b32.xlu0 %v17, 125
  %v19 = vpop.permute.xlu0 %18
  %vm20 = vcmask 7168
  %s21 = scalar_lea.vmem %s1, 3
  %22 = vst.msk [vmem:[%s21] ss:$4 sm:$0xff] %vm20, %v19

// kernel: unet3d_decoder_forward.5
$region0: #{unet3d_decoder_forward.5}
  #allocation0 [shape = 'u32[]', space=smem, size = 0x4, offset = 0x4, fixed_abs, tag = 'smem constant byte address 0x4 - core index']
  #allocation1 [shape = 'u32[144,128]{1,0:T(1,128)}', space=vmem, size = 0x12000, scoped, tag = 'internal scratch']
  %s0 = inlined_call_operand.vmem [shape: bf16[8,1024], index: 0, kind: input, shape index: {}]
  %s1 = inlined_call_operand.vmem [shape: bf16[32,8], index: 1, kind: input, shape index: {}]
  %s2 = inlined_call_operand.vmem [shape: f32[32,1], index: 2, kind: input, shape index: {}]
  %s3 = inlined_call_operand.vmem [shape: bf16[32,1024], index: 3, kind: output, shape index: {}]
  %s4 = sld [smem:[#allocation0]]
  $region64: #{unet3d_decoder_forward.5} parent=0
    _
  %s6 = ssub.s32 1, %s4
  %s7 = scalar_select 0, %s6, %s4
  $region1: #{unet3d_decoder_forward.5} parent=0
    #allocation2 [shape = 'u8[65536]{0}', space=vmem, size = 0x10000, scoped, tag = 'output window, operand 0']
    loop: start=0, step=1, limit=4
    $region2: #{unet3d_decoder_forward.5} parent=1 // loop_pre_header
      _
    $region3: #{unet3d_decoder_forward.5} parent=1 // loop_header
      %s9 = sphi 0, %s13
      %p10 = scmp.ge.s32.totalorder %s9, 4
      %s19 = sphi 0, %s21
      %s22 = sphi 0, %s19
      %s23 = sphi 0, %s22
      %s39 = sphi 0, %s23
      %s43 = sphi 0, %s43
      %s45 = sphi 0, %s43
      %s46 = sphi 0, %s45
      %s60 = sphi 0, %s46
      %s64 = sphi 0, %s64
      %s66 = sphi 0, %s64
      %s67 = sphi 0, %s66
      %s81 = sphi 0, %s67
      %s87 = sphi 0, %s89
      %s90 = sphi 0, %s87
      %s91 = sphi 0, %s90
      %s107 = sphi 0, %s91
    $region4: #{unet3d_decoder_forward.5} parent=1 // loop_header_branch
      %12 = sbr.rel (%p10) target = $region8
    $region5: #{unet3d_decoder_forward.5} parent=1 // loop_body
      %s14 = ssub.s32 %s9, 1
      %s15 = ssub.s32 %s9, 2
      %s16 = sadd.s32 %s9, 1
      %s17 = ssub.s32 %s9, %s16
      %p18 = scmp.eq.s32.totalorder %s17, 0
      %s20 = sadd.s32 %s19, 1
      %s21 = scalar_select %p18, %s19, %s20
      %p24 = pneg %p18
      %p25 = scmp.eq.s32.totalorder %s9, 1
      %p26 = por %p24, %p25
      %p27 = scmp.ne.s32.totalorder %s19, %s22
      %p28 = scmp.eq.s32.totalorder %s9, 0
      %p29 = por %p27, %p28
      %p30 = scmp.ne.s32.totalorder %s19, %s22
      %p31 = scmp.eq.s32.totalorder %s14, 1
      %p32 = por %p30, %p31
      %p33 = scmp.ne.s32.totalorder %s22, %s23
      %p34 = scmp.eq.s32.totalorder %s14, 0
      %p35 = por %p33, %p34
      %p36 = scmp.ne.s32.totalorder %s22, %s23
      %p37 = scmp.eq.s32.totalorder %s15, 1
      %p38 = por %p36, %p37
      %p40 = scmp.ne.s32.totalorder %s23, %s39
      %p41 = scmp.eq.s32.totalorder %s15, 0
      %p42 = por %p40, %p41
      %s44 = sadd.s32 %s43, 1
      %p47 = scmp.eq.s32.totalorder %s9, 1
      %p48 = scmp.ne.s32.totalorder %s43, %s45
      %p49 = scmp.eq.s32.totalorder %s9, 0
      %p50 = por %p48, %p49
      %p51 = scmp.ne.s32.totalorder %s43, %s45
      %p52 = scmp.eq.s32.totalorder %s14, 1
      %p53 = por %p51, %p52
      %p54 = scmp.ne.s32.totalorder %s45, %s46
      %p55 = scmp.eq.s32.totalorder %s14, 0
      %p56 = por %p54, %p55
      %p57 = scmp.ne.s32.totalorder %s45, %s46
      %p58 = scmp.eq.s32.totalorder %s15, 1
      %p59 = por %p57, %p58
      %p61 = scmp.ne.s32.totalorder %s46, %s60
      %p62 = scmp.eq.s32.totalorder %s15, 0
      %p63 = por %p61, %p62
      %s65 = sadd.s32 %s64, 1
      %p68 = scmp.eq.s32.totalorder %s9, 1
      %p69 = scmp.ne.s32.totalorder %s64, %s66
      %p70 = scmp.eq.s32.totalorder %s9, 0
      %p71 = por %p69, %p70
      %p72 = scmp.ne.s32.totalorder %s64, %s66
      %p73 = scmp.eq.s32.totalorder %s14, 1
      %p74 = por %p72, %p73
      %p75 = scmp.ne.s32.totalorder %s66, %s67
      %p76 = scmp.eq.s32.totalorder %s14, 0
      %p77 = por %p75, %p76
      %p78 = scmp.ne.s32.totalorder %s66, %s67
      %p79 = scmp.eq.s32.totalorder %s15, 1
      %p80 = por %p78, %p79
      %p82 = scmp.ne.s32.totalorder %s67, %s81
      %p83 = scmp.eq.s32.totalorder %s15, 0
      %p84 = por %p82, %p83
      %s85 = ssub.s32 %s9, %s16
      %p86 = scmp.eq.s32.totalorder %s85, 0
      %s88 = sadd.s32 %s87, 1
      %s89 = scalar_select %p86, %s87, %s88
      %p92 = pneg %p86
      %p93 = scmp.eq.s32.totalorder %s9, 1
      %p94 = por %p92, %p93
      %p95 = scmp.ne.s32.totalorder %s87, %s90
      %p96 = scmp.eq.s32.totalorder %s9, 0
      %p97 = por %p95, %p96
      %p98 = scmp.ne.s32.totalorder %s87, %s90
      %p99 = scmp.eq.s32.totalorder %s14, 1
      %p100 = por %p98, %p99
      %p101 = scmp.ne.s32.totalorder %s90, %s91
      %p102 = scmp.eq.s32.totalorder %s14, 0
      %p103 = por %p101, %p102
      %p104 = scmp.ne.s32.totalorder %s90, %s91
      %p105 = scmp.eq.s32.totalorder %s15, 1
      %p106 = por %p104, %p105
      %p108 = scmp.ne.s32.totalorder %s91, %s107
      %p109 = scmp.eq.s32.totalorder %s15, 0
      %p110 = por %p108, %p109
      %p111 = scmp.le.s32.totalorder 1, %s9
      %p112 = scmp.lt.s32.totalorder %s9, 3
      %p113 = pnand %p111, %p112
      %p114 = pneg %p113
      // Predicated region
      $region9: #{unet3d_decoder_forward.5} parent=5 // pred_check
        _
      $region10: #{unet3d_decoder_forward.5} parent=5 // pred_check_branch
        %116 = sbr.rel (%p113) target = $region12
      $region11: #{unet3d_decoder_forward.5} parent=5 // pred_region
        %s117 = ssub.s32 %s9, 1
        // Predicated region
        $region13: #{unet3d_decoder_forward.5} parent=11 // pred_check
          %p118 = pneg %p56
        $region14: #{unet3d_decoder_forward.5} parent=11 // pred_check_branch
          %120 = sbr.rel (%p118) target = $region16
        $region15: #{unet3d_decoder_forward.5} parent=11 // pred_region
          _
        $region16: #{unet3d_decoder_forward.5} parent=11 // pred_fallthru
          _
        // Predicated region
        $region17: #{unet3d_decoder_forward.5} parent=11 // pred_check
          %p121 = pneg %p77
        $region18: #{unet3d_decoder_forward.5} parent=11 // pred_check_branch
          %123 = sbr.rel (%p121) target = $region20
        $region19: #{unet3d_decoder_forward.5} parent=11 // pred_region
          _
        $region20: #{unet3d_decoder_forward.5} parent=11 // pred_fallthru
          _
      $region12: #{unet3d_decoder_forward.5} parent=5 // pred_fallthru
        _
      %p124 = scmp.lt.s32.totalorder %s9, 2
      // Predicated region
      $region21: #{unet3d_decoder_forward.5} parent=5 // pred_check
        %p125 = pneg %p124
      $region22: #{unet3d_decoder_forward.5} parent=5 // pred_check_branch
        %127 = sbr.rel (%p125) target = $region24
      $region23: #{unet3d_decoder_forward.5} parent=5 // pred_region
        // Predicated region
        $region25: #{unet3d_decoder_forward.5} parent=23 // pred_check
          %p128 = pneg %p29
        $region26: #{unet3d_decoder_forward.5} parent=23 // pred_check_branch
          %130 = sbr.rel (%p128) target = $region28
        $region27: #{unet3d_decoder_forward.5} parent=23 // pred_region
          %s131 = smul.u32 4, %s9
          %p132 = scmp.lt.s32.totalorder %s131, 7
          %s133 = scalar_select %p132, %s131, 7
          %s134 = smul.addr %s133, 4
          %s135 = scalar_lea.vmem %s0, %s134
          %s136 = smul.u32 4, %s9
        $region28: #{unet3d_decoder_forward.5} parent=23 // pred_fallthru
          _
      $region24: #{unet3d_decoder_forward.5} parent=5 // pred_fallthru
        _
      %p137 = scmp.le.s32.totalorder 1, %s9
      %p138 = scmp.lt.s32.totalorder %s9, 3
      %p139 = pnand %p137, %p138
      %p140 = pneg %p139
      // Predicated region
      $region29: #{unet3d_decoder_forward.5} parent=5 // pred_check
        _
      $region30: #{unet3d_decoder_forward.5} parent=5 // pred_check_branch
        %142 = sbr.rel (%p139) target = $region32
      $region31: #{unet3d_decoder_forward.5} parent=5 // pred_region
        %s143 = ssub.s32 %s9, 1
        %s144 = smul.u32 4, %s14
        %p145 = scmp.lt.s32.totalorder %s144, 7
        %s146 = scalar_select %p145, %s144, 7
        %s147 = smul.addr %s146, 4
        %s148 = scalar_lea.vmem %s0, %s147
        %p149 = pneg %p35
        %p150 = pneg %p32
        %p151 = pneg %p56
        %p152 = pneg %p53
        %p153 = pneg %p77
        %p154 = pneg %p74
        %p155 = pneg %p103
        %p156 = pneg %p100
        %s157 = sand.u32 %s90, 1
        %s158 = sand.u32 %s90, 1
        %s159 = smul.addr %s158, 64
        %s160 = scalar_lea.vmem [#allocation2], %s159
        %s161 = smul.u32 4, %s14
        %p162 = scmp.lt.s32.totalorder %s161, 7
        %s163 = scalar_select %p162, %s161, 7
        %s164 = smul.addr %s163, 4
        %s165 = scalar_lea.vmem %s0, %s164
        %s166 = smul.u32 4, %s14
        %s167 = smul.u32 4, %s14
        %v169 = vld [vmem:[%s1] sm:$0xf]
        %v170 = vld [vmem:[%s1 + $0x4] sm:$0xf]
        %v171 = vld [vmem:[%s1 + $0x8] sm:$0xf]
        %v172 = vld [vmem:[%s1 + $0xc] sm:$0xf]
        %v173 = vld [vmem:[%s165] sm:$0xff]
        %v174 = vld [vmem:[%s165 + $0x8] sm:$0xff]
        %v175 = vld [vmem:[%s2] sm:$0xff]
        %v176 = vld [vmem:[%s2 + $0x8] sm:$0xff]
        %v177 = vld [vmem:[%s2 + $0x10] sm:$0xff]
        %v178 = vld [vmem:[%s2 + $0x18] sm:$0xff]
        %180 = vset.pattern.permute.xlu0 0
        %181 = vperm.xlu0 %180, %v175
        %v182 = vpop.permute.xlu0 %181
        %185 = vset.pattern.permute.xlu0 0
        %186 = vperm.xlu0 %185, %v176
        %v187 = vpop.permute.xlu0 %186
        %190 = vset.pattern.permute.xlu0 0
        %191 = vperm.xlu0 %190, %v177
        %v192 = vpop.permute.xlu0 %191
        %195 = vset.pattern.permute.xlu0 0
        %196 = vperm.xlu0 %195, %v178
        %v197 = vpop.permute.xlu0 %196
        %v203 = vunpack.c.l.b16 %v169
        %v204 = vunpack.c.l.b16 %v170
        %v205 = vunpack.c.l.b16 %v171
        %v206 = vunpack.c.l.b16 %v172
        %v207 = vpack.c.b16 %v204, %v203
        %v208 = vpack.c.b16 %v206, %v205
        %v211 = vunpack.c.l.b16 %v173
        %v212 = vunpack.c.h.b16 %v173
        %v213 = vunpack.c.l.b16 %v174
        %v214 = vunpack.c.h.b16 %v174
        %v215 = vpack.c.b16 %v211, %v211
        %v216 = vpack.c.b16 %v212, %v212
        %v217 = vpack.c.b16 %v213, %v213
        %v218 = vpack.c.b16 %v214, %v214
        %vm219 = vcmask 64512
        %v221 = vsel %vm219, %v207, 0
        %v224 = vsel %vm219, %v208, 0
        %vm226 = vcmask 1043456
        %v228 = vsel %vm226, %v215, 0
        %v231 = vsel %vm226, %v216, 0
        %v234 = vsel %vm226, %v217, 0
        %v237 = vsel %vm226, %v218, 0
        %239 = vmatprep.subr.bf16.mxu0 0
        %240 = vmatpush1.bf16.msra.mxu0 0
        %241 = vmatprep.subr.bf16.mxu0 0
        %242 = vmatpush1.bf16.msra.mxu0 0
        %243 = vmatprep.subr.bf16.mxu0 0
        %244 = vmatpush1.bf16.msra.mxu0 0
        %245 = vmatprep.subr.bf16.mxu0 0
        %246 = vmatpush1.bf16.msra.mxu0 0
        %247 = vmatprep.subr.bf16.mxu0 0
        %248 = vmatpush1.bf16.msra.mxu0 0
        %249 = vmatprep.subr.bf16.mxu0 0
        %250 = vmatpush1.bf16.msra.mxu0 0
        %251 = vmatprep.subr.bf16.mxu0 0
        %252 = vmatpush1.bf16.msra.mxu0 0
        %253 = vmatprep.subr.bf16.mxu0 %v231
        %254 = vmatpush1.bf16.msra.mxu0 %v228
        %255 = vmatprep.subr.bf16.mxu0 0
        %256 = vmatpush2.bf16.msra.mxu0 0
        %257 = vmatprep.subr.bf16.mxu0 0
        %258 = vmatpush2.bf16.msra.mxu0 0
        %259 = vmatprep.subr.bf16.mxu0 0
        %260 = vmatpush2.bf16.msra.mxu0 0
        %261 = vmatprep.subr.bf16.mxu0 0
        %262 = vmatpush2.bf16.msra.mxu0 0
        %263 = vmatprep.subr.bf16.mxu0 0
        %264 = vmatpush2.bf16.msra.mxu0 0
        %265 = vmatprep.subr.bf16.mxu0 0
        %266 = vmatpush2.bf16.msra.mxu0 0
        %267 = vmatprep.subr.bf16.mxu0 0
        %268 = vmatpush2.bf16.msra.mxu0 0
        %269 = vmatprep.subr.bf16.mxu0 0
        %270 = vmatpush2.bf16.msra.mxu0 0
        %271 = vmatprep.mubr.bf16.mxu0 0
        %272 = vmatmul.mubr.bf16.gmra.mxu0 %v221
        %v273 = vpop.f32.mrf.mxu0
        %v274 = vadd.f32 %v182, %v273
        %v275 = vpop.f32.mrf.mxu0
        %v276 = vadd.f32 %v182, %v275
        %v277 = vpop.f32.mrf.mxu0
        %v278 = vadd.f32 %v187, %v277
        %v279 = vpop.f32.mrf.mxu0
        %v280 = vadd.f32 %v187, %v279
        %281 = vmatprep.mubr.bf16.mxu0 0
        %282 = vmatmul.mubr.bf16.gmra.mxu0 %v224
        %v283 = vpop.f32.mrf.mxu0
        %v284 = vadd.f32 %v192, %v283
        %v285 = vpop.f32.mrf.mxu0
        %v286 = vadd.f32 %v192, %v285
        %v287 = vpop.f32.mrf.mxu0
        %v288 = vadd.f32 %v197, %v287
        %v289 = vpop.f32.mrf.mxu0
        %v290 = vadd.f32 %v197, %v289
        %291 = vdwg.mxu0
        %292 = vmatprep.subr.bf16.mxu0 0
        %293 = vmatpush1.bf16.msra.mxu0 0
        %294 = vmatprep.subr.bf16.mxu0 0
        %295 = vmatpush1.bf16.msra.mxu0 0
        %296 = vmatprep.subr.bf16.mxu0 0
        %297 = vmatpush1.bf16.msra.mxu0 0
        %298 = vmatprep.subr.bf16.mxu0 0
        %299 = vmatpush1.bf16.msra.mxu0 0
        %300 = vmatprep.subr.bf16.mxu0 0
        %301 = vmatpush1.bf16.msra.mxu0 0
        %302 = vmatprep.subr.bf16.mxu0 0
        %303 = vmatpush1.bf16.msra.mxu0 0
        %304 = vmatprep.subr.bf16.mxu0 0
        %305 = vmatpush1.bf16.msra.mxu0 0
        %306 = vmatprep.subr.bf16.mxu0 %v237
        %307 = vmatpush1.bf16.msra.mxu0 %v234
        %308 = vmatprep.subr.bf16.mxu0 0
        %309 = vmatpush2.bf16.msra.mxu0 0
        %310 = vmatprep.subr.bf16.mxu0 0
        %311 = vmatpush2.bf16.msra.mxu0 0
        %312 = vmatprep.subr.bf16.mxu0 0
        %313 = vmatpush2.bf16.msra.mxu0 0
        %314 = vmatprep.subr.bf16.mxu0 0
        %315 = vmatpush2.bf16.msra.mxu0 0
        %316 = vmatprep.subr.bf16.mxu0 0
        %317 = vmatpush2.bf16.msra.mxu0 0
        %318 = vmatprep.subr.bf16.mxu0 0
        %319 = vmatpush2.bf16.msra.mxu0 0
        %320 = vmatprep.subr.bf16.mxu0 0
        %321 = vmatpush2.bf16.msra.mxu0 0
        %322 = vmatprep.subr.bf16.mxu0 0
        %323 = vmatpush2.bf16.msra.mxu0 0
        %324 = vmatprep.mubr.bf16.mxu0 0
        %325 = vmatmul.mubr.bf16.gmra.mxu0 %v221
        %v326 = vpop.f32.mrf.mxu0
        %v327 = vadd.f32 %v182, %v326
        %v328 = vpop.f32.mrf.mxu0
        %v329 = vadd.f32 %v182, %v328
        %v330 = vpop.f32.mrf.mxu0
        %v331 = vadd.f32 %v187, %v330
        %v332 = vpop.f32.mrf.mxu0
        %v333 = vadd.f32 %v187, %v332
        %334 = vmatprep.mubr.bf16.mxu0 0
        %335 = vmatmul.mubr.bf16.gmra.mxu0 %v224
        %v336 = vpop.f32.mrf.mxu0
        %v337 = vadd.f32 %v192, %v336
        %v338 = vpop.f32.mrf.mxu0
        %v339 = vadd.f32 %v192, %v338
        %v340 = vpop.f32.mrf.mxu0
        %v341 = vadd.f32 %v197, %v340
        %v342 = vpop.f32.mrf.mxu0
        %v343 = vadd.f32 %v197, %v342
        %344 = vdwg.mxu0
        %v345 = vpack.c.bf16 %v278, %v274
        %v346 = vpack.c.bf16 %v280, %v276
        %v347 = vpack.c.bf16 %v331, %v327
        %v348 = vpack.c.bf16 %v333, %v329
        %v349 = vpack.c.bf16 %v288, %v284
        %v350 = vpack.c.bf16 %v290, %v286
        %v351 = vpack.c.bf16 %v341, %v337
        %v352 = vpack.c.bf16 %v343, %v339
        %v361 = vunpack.c.l.b16 %v345
        %v362 = vunpack.c.l.b16 %v346
        %v363 = vunpack.c.l.b16 %v347
        %v364 = vunpack.c.l.b16 %v348
        %v365 = vunpack.c.h.b16 %v345
        %v366 = vunpack.c.h.b16 %v346
        %v367 = vunpack.c.h.b16 %v347
        %v368 = vunpack.c.h.b16 %v348
        %v369 = vunpack.c.l.b16 %v349
        %v370 = vunpack.c.l.b16 %v350
        %v371 = vunpack.c.l.b16 %v351
        %v372 = vunpack.c.l.b16 %v352
        %v373 = vunpack.c.h.b16 %v349
        %v374 = vunpack.c.h.b16 %v350
        %v375 = vunpack.c.h.b16 %v351
        %v376 = vunpack.c.h.b16 %v352
        %v377 = vpack.c.b16 %v362, %v361
        %v378 = vpack.c.b16 %v364, %v363
        %v379 = vpack.c.b16 %v366, %v365
        %v380 = vpack.c.b16 %v368, %v367
        %v381 = vpack.c.b16 %v370, %v369
        %v382 = vpack.c.b16 %v372, %v371
        %v383 = vpack.c.b16 %v374, %v373
        %v384 = vpack.c.b16 %v376, %v375
        %393 = vst [vmem:[%s160] sm:$0xff] %v377
        %394 = vst [vmem:[%s160 + $0x8] sm:$0xff] %v378
        %395 = vst [vmem:[%s160 + $0x10] sm:$0xff] %v379
        %396 = vst [vmem:[%s160 + $0x18] sm:$0xff] %v380
        %397 = vst [vmem:[%s160 + $0x20] sm:$0xff] %v381
        %398 = vst [vmem:[%s160 + $0x28] sm:$0xff] %v382
        %399 = vst [vmem:[%s160 + $0x30] sm:$0xff] %v383
        %400 = vst [vmem:[%s160 + $0x38] sm:$0xff] %v384
        %s401 = sand.u32 %s90, 1
        %s402 = sand.u32 %s90, 1
        %s403 = smul.addr %s402, 64
        %s404 = scalar_lea.vmem [#allocation2], %s403
        // Predicated region
        $region33: #{unet3d_decoder_forward.5} parent=31 // pred_check
          %p405 = pneg %p100
        $region34: #{unet3d_decoder_forward.5} parent=31 // pred_check_branch
          %407 = sbr.rel (%p405) target = $region36
        $region35: #{unet3d_decoder_forward.5} parent=31 // pred_region
          %s408 = smul.u32 4, %s14
          %s409 = smul.addr %s408, 4
          %s410 = scalar_lea.vmem %s3, %s409
          // Predicated region
          $region37: #{unet3d_decoder_forward.5} parent=35 // pred_check
            _
          $region38: #{unet3d_decoder_forward.5} parent=35 // pred_check_branch
            %412 = sbr.rel (0) target = $region40
          $region39: #{unet3d_decoder_forward.5} parent=35 // pred_region
            // Predicated region
            $region41: #{unet3d_decoder_forward.5} parent=39 // pred_check
              _
            $region42: #{unet3d_decoder_forward.5} parent=39 // pred_check_branch
              %414 = sbr.rel (0) target = $region44
            $region43: #{unet3d_decoder_forward.5} parent=39 // pred_region
              loop: start=0, step=1, limit=1
              $region45: #{unet3d_decoder_forward.5} parent=43 // loop_pre_header
                _
              $region46: #{unet3d_decoder_forward.5} parent=43 // loop_header
                %s416 = sphi 0, %s420
                %p417 = scmp.ge.s32.totalorder %s416, 1
                %s421 = sphi %s404, %s404
                %s422 = sphi %s410, %s410
              $region47: #{unet3d_decoder_forward.5} parent=43 // loop_header_branch
                %419 = sbr.rel (%p417) target = $region51
              $region48: #{unet3d_decoder_forward.5} parent=43 // loop_body
                %v423 = vld [vmem:[%s421] sm:$0xff]
                %424 = vst [vmem:[%s422] sm:$0xff] %v423
                %v425 = vld [vmem:[%s421 + $0x8] sm:$0xff]
                %426 = vst [vmem:[%s422 + $0x8] sm:$0xff] %v425
                %v427 = vld [vmem:[%s421 + $0x10] sm:$0xff]
                %428 = vst [vmem:[%s422 + $0x20] sm:$0xff] %v427
                %v429 = vld [vmem:[%s421 + $0x18] sm:$0xff]
                %430 = vst [vmem:[%s422 + $0x28] sm:$0xff] %v429
                %v431 = vld [vmem:[%s421 + $0x20] sm:$0xff]
                %432 = vst [vmem:[%s422 + $0x40] sm:$0xff] %v431
                %v433 = vld [vmem:[%s421 + $0x28] sm:$0xff]
                %434 = vst [vmem:[%s422 + $0x48] sm:$0xff] %v433
                %v435 = vld [vmem:[%s421 + $0x30] sm:$0xff]
                %436 = vst [vmem:[%s422 + $0x60] sm:$0xff] %v435
                %v437 = vld [vmem:[%s421 + $0x38] sm:$0xff]
                %438 = vst [vmem:[%s422 + $0x68] sm:$0xff] %v437
              $region49: #{unet3d_decoder_forward.5} parent=43 // loop_footer
                %s420 = sadd.s32 1, %s416
              $region50: #{unet3d_decoder_forward.5} parent=43 // loop_footer_branch
                %415 = sbr.rel target = $region46
              $region51: #{unet3d_decoder_forward.5} parent=43 // loop_exit
                _
            $region44: #{unet3d_decoder_forward.5} parent=39 // pred_fallthru
              _
            // Predicated region
            $region52: #{unet3d_decoder_forward.5} parent=39 // pred_check
              _
            $region53: #{unet3d_decoder_forward.5} parent=39 // pred_check_branch
              %440 = sbr.rel target = $region55
            $region54: #{unet3d_decoder_forward.5} parent=39 // pred_region
              _
            $region55: #{unet3d_decoder_forward.5} parent=39 // pred_fallthru
              _
          $region40: #{unet3d_decoder_forward.5} parent=35 // pred_fallthru
            _
          %441 = vnop
        $region36: #{unet3d_decoder_forward.5} parent=31 // pred_fallthru
          _
      $region32: #{unet3d_decoder_forward.5} parent=5 // pred_fallthru
        _
      %p442 = scmp.le.s32.totalorder 2, %s9
      // Predicated region
      $region56: #{unet3d_decoder_forward.5} parent=5 // pred_check
        %p443 = pneg %p442
      $region57: #{unet3d_decoder_forward.5} parent=5 // pred_check_branch
        %445 = sbr.rel (%p443) target = $region59
      $region58: #{unet3d_decoder_forward.5} parent=5 // pred_region
        %s446 = ssub.s32 %s9, 2
        // Predicated region
        $region60: #{unet3d_decoder_forward.5} parent=58 // pred_check
          %p447 = pneg %p106
        $region61: #{unet3d_decoder_forward.5} parent=58 // pred_check_branch
          %449 = sbr.rel (%p447) target = $region63
        $region62: #{unet3d_decoder_forward.5} parent=58 // pred_region
          %s450 = sand.u32 %s91, 1
          %s451 = sand.u32 %s91, 1
          %s452 = smul.addr %s451, 64
          %s453 = scalar_lea.vmem [#allocation2], %s452
        $region63: #{unet3d_decoder_forward.5} parent=58 // pred_fallthru
          _
      $region59: #{unet3d_decoder_forward.5} parent=5 // pred_fallthru
        _
    $region6: #{unet3d_decoder_forward.5} parent=1 // loop_footer
      %s13 = sadd.s32 1, %s9
    $region7: #{unet3d_decoder_forward.5} parent=1 // loop_footer_branch
      %8 = sbr.rel target = $region3
    $region8: #{unet3d_decoder_forward.5} parent=1 // loop_exit
      _

// kernel: unet3d_decoder_forward.7
$region0: #{unet3d_decoder_forward.7}
  #allocation0 [shape = 'u32[]', space=smem, size = 0x4, offset = 0x4, fixed_abs, tag = 'smem constant byte address 0x4 - core index']
  #allocation1 [shape = 'u32[144,128]{1,0:T(1,128)}', space=vmem, size = 0x12000, scoped, tag = 'internal scratch']
  %s0 = inlined_call_operand.vmem [shape: bf16[2,16,4,288], index: 0, kind: input, shape index: {}]
  %s1 = inlined_call_operand.vmem [shape: f32[4,1], index: 1, kind: input, shape index: {}]
  %s2 = inlined_call_operand.vmem [shape: f32[4,1], index: 2, kind: input, shape index: {}]
  %s3 = inlined_call_operand.vmem [shape: f32[1,288], index: 3, kind: input, shape index: {}]
  %s4 = inlined_call_operand.vmem [shape: bf16[2,18,4,342], index: 4, kind: output, shape index: {}]
  %s5 = sld [smem:[#allocation0]]
  $region53: #{unet3d_decoder_forward.7} parent=0
    _
  %s7 = ssub.s32 1, %s5
  %s8 = scalar_select 0, %s7, %s5
  loop: start=0, step=1, limit=38
  $region2: #{unet3d_decoder_forward.7} parent=0 // loop_pre_header
    _
  $region3: #{unet3d_decoder_forward.7} parent=0 // loop_header
    %s10 = sphi 0, %s14
    %p11 = scmp.ge.s32.totalorder %s10, 38
    %s17 = sphi 0, %s29
    %s18 = sphi 0, %s25
    %s19 = sphi 0, %s17
    %s20 = sphi 0, %s18
    %s21 = sphi 0, %s19
    %s22 = sphi 0, %s20
    %s44 = sphi 0, %s46
    %s47 = sphi 0, %s44
    %s48 = sphi 0, %s47
    %s64 = sphi 0, %s48
    %s68 = sphi 0, %s68
    %s70 = sphi 0, %s68
    %s71 = sphi 0, %s70
    %s85 = sphi 0, %s71
    %s89 = sphi 0, %s89
    %s91 = sphi 0, %s89
    %s92 = sphi 0, %s91
    %s106 = sphi 0, %s92
    %s110 = sphi 0, %s110
    %s112 = sphi 0, %s110
    %s113 = sphi 0, %s112
    %s127 = sphi 0, %s113
    %s135 = sphi 0, %s137
    %s138 = sphi 0, %s135
    %s139 = sphi 0, %s138
    %s155 = sphi 0, %s139
  $region4: #{unet3d_decoder_forward.7} parent=0 // loop_header_branch
    %13 = sbr.rel (%p11) target = $region8
  $region5: #{unet3d_decoder_forward.7} parent=0 // loop_body
    %s15 = ssub.s32 %s10, 1
    %s16 = ssub.s32 %s10, 2
    %s23 = sadd.s32 1, %s18
    %p24 = scmp.ge.s32.totalorder %s23, 18
    %s25 = scalar_select %p24, 0, %s23
    %s26 = sadd.s32 1, %s17
    %s27 = scalar_select %p24, %s26, %s17
    %p28 = scmp.ge.s32.totalorder %s27, 2
    %s29 = scalar_select %p28, 0, %s27
    %s30 = ssub.s32 %s18, 1
    %p31 = scmp.gt.s32.totalorder %s30, 0
    %s32 = scalar_select %p31, %s30, 0
    %p33 = scmp.lt.s32.totalorder %s32, 15
    %s34 = scalar_select %p33, %s32, 15
    %s35 = ssub.s32 %s25, 1
    %p36 = scmp.gt.s32.totalorder %s35, 0
    %s37 = scalar_select %p36, %s35, 0
    %p38 = scmp.lt.s32.totalorder %s37, 15
    %s39 = scalar_select %p38, %s37, 15
    %s40 = ssub.s32 %s17, %s29
    %s41 = ssub.s32 %s34, %s39
    %s42 = sor.u32 %s40, %s41
    %p43 = scmp.eq.s32.totalorder %s42, 0
    %s45 = sadd.s32 %s44, 1
    %s46 = scalar_select %p43, %s44, %s45
    %p49 = pneg %p43
    %p50 = scmp.eq.s32.totalorder %s10, 35
    %p51 = por %p49, %p50
    %p52 = scmp.ne.s32.totalorder %s44, %s47
    %p53 = scmp.eq.s32.totalorder %s10, 0
    %p54 = por %p52, %p53
    %p55 = scmp.ne.s32.totalorder %s44, %s47
    %p56 = scmp.eq.s32.totalorder %s15, 35
    %p57 = por %p55, %p56
    %p58 = scmp.ne.s32.totalorder %s47, %s48
    %p59 = scmp.eq.s32.totalorder %s15, 0
    %p60 = por %p58, %p59
    %p61 = scmp.ne.s32.totalorder %s47, %s48
    %p62 = scmp.eq.s32.totalorder %s16, 35
    %p63 = por %p61, %p62
    %p65 = scmp.ne.s32.totalorder %s48, %s64
    %p66 = scmp.eq.s32.totalorder %s16, 0
    %p67 = por %p65, %p66
    %s69 = sadd.s32 %s68, 1
    %p72 = scmp.eq.s32.totalorder %s10, 35
    %p73 = scmp.ne.s32.totalorder %s68, %s70
    %p74 = scmp.eq.s32.totalorder %s10, 0
    %p75 = por %p73, %p74
    %p76 = scmp.ne.s32.totalorder %s68, %s70
    %p77 = scmp.eq.s32.totalorder %s15, 35
    %p78 = por %p76, %p77
    %p79 = scmp.ne.s32.totalorder %s70, %s71
    %p80 = scmp.eq.s32.totalorder %s15, 0
    %p81 = por %p79, %p80
    %p82 = scmp.ne.s32.totalorder %s70, %s71
    %p83 = scmp.eq.s32.totalorder %s16, 35
    %p84 = por %p82, %p83
    %p86 = scmp.ne.s32.totalorder %s71, %s85
    %p87 = scmp.eq.s32.totalorder %s16, 0
    %p88 = por %p86, %p87
    %s90 = sadd.s32 %s89, 1
    %p93 = scmp.eq.s32.totalorder %s10, 35
    %p94 = scmp.ne.s32.totalorder %s89, %s91
    %p95 = scmp.eq.s32.totalorder %s10, 0
    %p96 = por %p94, %p95
    %p97 = scmp.ne.s32.totalorder %s89, %s91
    %p98 = scmp.eq.s32.totalorder %s15, 35
    %p99 = por %p97, %p98
    %p100 = scmp.ne.s32.totalorder %s91, %s92
    %p101 = scmp.eq.s32.totalorder %s15, 0
    %p102 = por %p100, %p101
    %p103 = scmp.ne.s32.totalorder %s91, %s92
    %p104 = scmp.eq.s32.totalorder %s16, 35
    %p105 = por %p103, %p104
    %p107 = scmp.ne.s32.totalorder %s92, %s106
    %p108 = scmp.eq.s32.totalorder %s16, 0
    %p109 = por %p107, %p108
    %s111 = sadd.s32 %s110, 1
    %p114 = scmp.eq.s32.totalorder %s10, 35
    %p115 = scmp.ne.s32.totalorder %s110, %s112
    %p116 = scmp.eq.s32.totalorder %s10, 0
    %p117 = por %p115, %p116
    %p118 = scmp.ne.s32.totalorder %s110, %s112
    %p119 = scmp.eq.s32.totalorder %s15, 35
    %p120 = por %p118, %p119
    %p121 = scmp.ne.s32.totalorder %s112, %s113
    %p122 = scmp.eq.s32.totalorder %s15, 0
    %p123 = por %p121, %p122
    %p124 = scmp.ne.s32.totalorder %s112, %s113
    %p125 = scmp.eq.s32.totalorder %s16, 35
    %p126 = por %p124, %p125
    %p128 = scmp.ne.s32.totalorder %s113, %s127
    %p129 = scmp.eq.s32.totalorder %s16, 0
    %p130 = por %p128, %p129
    %s131 = ssub.s32 %s17, %s29
    %s132 = ssub.s32 %s18, %s25
    %s133 = sor.u32 %s131, %s132
    %p134 = scmp.eq.s32.totalorder %s133, 0
    %s136 = sadd.s32 %s135, 1
    %s137 = scalar_select %p134, %s135, %s136
    %p140 = pneg %p134
    %p141 = scmp.eq.s32.totalorder %s10, 35
    %p142 = por %p140, %p141
    %p143 = scmp.ne.s32.totalorder %s135, %s138
    %p144 = scmp.eq.s32.totalorder %s10, 0
    %p145 = por %p143, %p144
    %p146 = scmp.ne.s32.totalorder %s135, %s138
    %p147 = scmp.eq.s32.totalorder %s15, 35
    %p148 = por %p146, %p147
    %p149 = scmp.ne.s32.totalorder %s138, %s139
    %p150 = scmp.eq.s32.totalorder %s15, 0
    %p151 = por %p149, %p150
    %p152 = scmp.ne.s32.totalorder %s138, %s139
    %p153 = scmp.eq.s32.totalorder %s16, 35
    %p154 = por %p152, %p153
    %p156 = scmp.ne.s32.totalorder %s139, %s155
    %p157 = scmp.eq.s32.totalorder %s16, 0
    %p158 = por %p156, %p157
    %p159 = scmp.le.s32.totalorder 1, %s10
    %p160 = scmp.lt.s32.totalorder %s10, 37
    %p161 = pnand %p159, %p160
    %p162 = pneg %p161
    // Predicated region
    $region9: #{unet3d_decoder_forward.7} parent=5 // pred_check
      _
    $region10: #{unet3d_decoder_forward.7} parent=5 // pred_check_branch
      %164 = sbr.rel (%p161) target = $region12
    $region11: #{unet3d_decoder_forward.7} parent=5 // pred_region
      %s165 = ssub.s32 %s10, 1
      // Predicated region
      $region13: #{unet3d_decoder_forward.7} parent=11 // pred_check
        %p166 = pneg %p81
      $region14: #{unet3d_decoder_forward.7} parent=11 // pred_check_branch
        %168 = sbr.rel (%p166) target = $region16
      $region15: #{unet3d_decoder_forward.7} parent=11 // pred_region
        _
      $region16: #{unet3d_decoder_forward.7} parent=11 // pred_fallthru
        _
      // Predicated region
      $region17: #{unet3d_decoder_forward.7} parent=11 // pred_check
        %p169 = pneg %p102
      $region18: #{unet3d_decoder_forward.7} parent=11 // pred_check_branch
        %171 = sbr.rel (%p169) target = $region20
      $region19: #{unet3d_decoder_forward.7} parent=11 // pred_region
        _
      $region20: #{unet3d_decoder_forward.7} parent=11 // pred_fallthru
        _
      // Predicated region
      $region21: #{unet3d_decoder_forward.7} parent=11 // pred_check
        %p172 = pneg %p123
      $region22: #{unet3d_decoder_forward.7} parent=11 // pred_check_branch
        %174 = sbr.rel (%p172) target = $region24
      $region23: #{unet3d_decoder_forward.7} parent=11 // pred_region
        _
      $region24: #{unet3d_decoder_forward.7} parent=11 // pred_fallthru
        _
    $region12: #{unet3d_decoder_forward.7} parent=5 // pred_fallthru
      _
    %p175 = scmp.lt.s32.totalorder %s10, 36
    // Predicated region
    $region25: #{unet3d_decoder_forward.7} parent=5 // pred_check
      %p176 = pneg %p175
    $region26: #{unet3d_decoder_forward.7} parent=5 // pred_check_branch
      %178 = sbr.rel (%p176) target = $region28
    $region27: #{unet3d_decoder_forward.7} parent=5 // pred_region
      // Predicated region
      $region29: #{unet3d_decoder_forward.7} parent=27 // pred_check
        %p179 = pneg %p54
      $region30: #{unet3d_decoder_forward.7} parent=27 // pred_check_branch
        %181 = sbr.rel (%p179) target = $region32
      $region31: #{unet3d_decoder_forward.7} parent=27 // pred_region
        %s182 = ssub.s32 %s18, 1
        %p183 = scmp.gt.s32.totalorder %s182, 0
        %s184 = scalar_select %p183, %s182, 0
        %p185 = scmp.lt.s32.totalorder %s184, 15
        %s186 = scalar_select %p185, %s184, 15
        %p187 = scmp.lt.s32.totalorder %s17, 1
        %s188 = scalar_select %p187, %s17, 1
        %p189 = scmp.lt.s32.totalorder %s186, 15
        %s190 = scalar_select %p189, %s186, 15
        %s191 = smul.addr %s190, 3
        %s192 = smul.addr %s188, 48
        %s193 = sadd.s32 %s191, %s192
        %s194 = smul.addr %s193, 2
        %s195 = scalar_lea.vmem %s0, %s194
        %s196 = ssub.s32 %s18, 1
        %p197 = scmp.gt.s32.totalorder %s196, 0
        %s198 = scalar_select %p197, %s196, 0
        %p199 = scmp.lt.s32.totalorder %s198, 15
        %s200 = scalar_select %p199, %s198, 15
      $region32: #{unet3d_decoder_forward.7} parent=27 // pred_fallthru
        _
    $region28: #{unet3d_decoder_forward.7} parent=5 // pred_fallthru
      _
    %p201 = scmp.le.s32.totalorder 1, %s10
    %p202 = scmp.lt.s32.totalorder %s10, 37
    %p203 = pnand %p201, %p202
    %p204 = pneg %p203
    // Predicated region
    $region33: #{unet3d_decoder_forward.7} parent=5 // pred_check
      _
    $region34: #{unet3d_decoder_forward.7} parent=5 // pred_check_branch
      %206 = sbr.rel (%p203) target = $region36
    $region35: #{unet3d_decoder_forward.7} parent=5 // pred_region
      %s207 = ssub.s32 %s10, 1
      %s208 = ssub.s32 %s20, 1
      %p209 = scmp.gt.s32.totalorder %s208, 0
      %s210 = scalar_select %p209, %s208, 0
      %p211 = scmp.lt.s32.totalorder %s210, 15
      %s212 = scalar_select %p211, %s210, 15
      %p213 = scmp.lt.s32.totalorder %s19, 1
      %s214 = scalar_select %p213, %s19, 1
      %p215 = scmp.lt.s32.totalorder %s212, 15
      %s216 = scalar_select %p215, %s212, 15
      %s217 = smul.addr %s216, 3
      %s218 = smul.addr %s214, 48
      %s219 = sadd.s32 %s217, %s218
      %s220 = smul.addr %s219, 2
      %s221 = scalar_lea.vmem %s0, %s220
      %p222 = pneg %p60
      %p223 = pneg %p57
      %p224 = pneg %p81
      %p225 = pneg %p78
      %p226 = pneg %p102
      %p227 = pneg %p99
      %p228 = pneg %p123
      %p229 = pneg %p120
      %p230 = pneg %p151
      %p231 = pneg %p148
      %p232 = scmp.lt.s32.totalorder %s19, 1
      %s233 = scalar_select %p232, %s19, 1
      %p234 = scmp.lt.s32.totalorder %s20, 17
      %s235 = scalar_select %p234, %s20, 17
      %s236 = smul.addr %s235, 3
      %s237 = smul.addr %s233, 54
      %s238 = sadd.s32 %s236, %s237
      %s239 = smul.addr %s238, 2
      %s240 = scalar_lea.vmem %s4, %s239
      %s241 = ssub.s32 %s20, 1
      %p242 = scmp.gt.s32.totalorder %s241, 0
      %s243 = scalar_select %p242, %s241, 0
      %p244 = scmp.lt.s32.totalorder %s243, 15
      %s245 = scalar_select %p244, %s243, 15
      %p246 = scmp.lt.s32.totalorder %s19, 1
      %s247 = scalar_select %p246, %s19, 1
      %p248 = scmp.lt.s32.totalorder %s245, 15
      %s249 = scalar_select %p248, %s245, 15
      %s250 = smul.addr %s249, 3
      %s251 = smul.addr %s247, 48
      %s252 = sadd.s32 %s250, %s251
      %s253 = smul.addr %s252, 2
      %s254 = scalar_lea.vmem %s0, %s253
      %s255 = ssub.s32 %s20, 1
      %p256 = scmp.gt.s32.totalorder %s255, 0
      %s257 = scalar_select %p256, %s255, 0
      %p258 = scmp.lt.s32.totalorder %s257, 15
      %s259 = scalar_select %p258, %s257, 15
      %p260 = scmp.lt.s32.totalorder %s19, 1
      %s261 = scalar_select %p260, %s19, 1
      %p262 = scmp.lt.s32.totalorder %s20, 17
      %s263 = scalar_select %p262, %s20, 17
      %s264 = smul.addr %s263, 3
      %s265 = smul.addr %s261, 54
      %s266 = sadd.s32 %s264, %s265
      %s267 = smul.addr %s266, 2
      %s268 = scalar_lea.vmem %s4, %s267
      %vm270 = vcmask 1041408
      %vm271 = vcmask 1043458
      %vm272 = vmor %vm271, %vm270
      %vm273 = vcmask 701444
      %vm274 = vmor %vm273, %vm272
      %275 = vst.msk [vmem:[%s268] sm:$0x3f] %vm274, 0
      %p276 = scmp.ge.s32.totalorder %s20, 1
      %p277 = scmp.le.s32.totalorder %s20, 16
      %p278 = pnand %p276, %p277
      %p279 = pneg %p278
      // Predicated region
      $region37: #{unet3d_decoder_forward.7} parent=35 // pred_check
        _
      $region38: #{unet3d_decoder_forward.7} parent=35 // pred_check_branch
        %281 = sbr.rel (%p278) target = $region40
      $region39: #{unet3d_decoder_forward.7} parent=35 // pred_region
        %v282 = vld [vmem:[%s254] sm:$0x3f]
        %v283 = vunpack.c.l.bf16 %v282
        %v284 = vunpack.c.h.bf16 %v282
        %v285 = vld [vmem:[%s1] sm:$0xf]
        %287 = vset.pattern.permute.xlu0 0
        %288 = vperm.xlu0 %287, %v285
        %v289 = vpop.permute.xlu0 %288
        %v291 = vunpack.c.l.s4 839922192
        %v292 = vunpack.c.0.s8 %v291
        %v293 = vlaneseq
        %v294 = vshrl.u32 %v293, 7
        %v295 = vsub.s32 %v292, %v294
        %v296 = vrot.slane %v289, %v295
        %v298 = vmul.f32 %v283, %v296
        %v299 = vmul.f32 %v284, %v296
        %v300 = vld [vmem:[%s2] sm:$0xf]
        %302 = vset.pattern.permute.xlu0 0
        %303 = vperm.xlu0 %302, %v300
        %v304 = vpop.permute.xlu0 %303
        %v306 = vunpack.c.l.s4 839922192
        %v307 = vunpack.c.0.s8 %v306
        %v308 = vlaneseq
        %v309 = vshrl.u32 %v308, 7
        %v310 = vsub.s32 %v307, %v309
        %v311 = vrot.slane %v304, %v310
        %v313 = vadd.f32 %v298, %v311
        %v314 = vadd.f32 %v299, %v311
        %v315 = vmax.f32 %v313, 0.0
        %v316 = vmax.f32 %v314, 0.0
        %v317 = vld [vmem:[%s3] sm:$0x7]
        %v319 = vlaneseq
        %v320 = vshrl.u32 %v319, 7
        %v321 = vsub.s32 0, %v320
        %v322 = vrot.slane %v317, %v321
        %v323 = vlaneseq
        %v324 = vshrl.u32 %v323, 7
        %v325 = vsub.s32 1, %v324
        %v326 = vrot.slane %v317, %v325
        %v327 = vlaneseq
        %v328 = vshrl.u32 %v327, 7
        %v329 = vsub.s32 2, %v328
        %v330 = vrot.slane %v317, %v329
        %v332 = vcombine.low %v322, %v326
        %v334 = vmul.f32 %v315, %v332
        %v335 = vmul.f32 %v316, %v330
        %v337 = vcombine.high %v334, %v334
        %v339 = vpack.c.bf16 %v334, %v334
        %v340 = vpack.c.bf16 %v337, %v337
        %v341 = vpack.c.bf16 %v335, %v335
        %v345 = vcombine.low %v339, %v340
        %v347 = vunpack.c.l.s4 1983009808
        %v348 = vunpack.c.0.s8 %v347
        %v349 = vlaneseq
        %v350 = vshrl.u32 %v349, 7
        %v351 = vsub.s32 %v348, %v350
        %v352 = vrot.slane %v345, %v351
        %v354 = vunpack.c.l.s4 1983009808
        %v355 = vunpack.c.0.s8 %v354
        %v356 = vlaneseq
        %v357 = vshrl.u32 %v356, 7
        %v358 = vsub.s32 %v355, %v357
        %v359 = vrot.slane %v341, %v358
        %v360 = vcombine.low %v352, %v359
        %361 = vrot.lane.b32.xlu0 %v360, 19
        %v362 = vpop.permute.xlu0 %361
        %v363 = vrot.slane %v362, 6
        %vm364 = vcmask 154624
        %v365 = vsel %vm364, %v363, %v362
        %vm367 = vcmask 1041560
        %vm368 = vmor %vm271, %vm367
        %vm369 = vcmask 414724
        %vm370 = vmor %vm369, %vm368
        %371 = vst.msk [vmem:[%s268] sm:$0x3f] %vm370, %v365
      $region40: #{unet3d_decoder_forward.7} parent=35 // pred_fallthru
        _
      %p372 = scmp.lt.s32.totalorder %s19, 1
      %s373 = scalar_select %p372, %s19, 1
      %p374 = scmp.lt.s32.totalorder %s20, 17
      %s375 = scalar_select %p374, %s20, 17
      %s376 = smul.addr %s375, 3
      %s377 = smul.addr %s373, 54
      %s378 = sadd.s32 %s376, %s377
      %s379 = smul.addr %s378, 2
      %s380 = scalar_lea.vmem %s4, %s379
      // Predicated region
      $region41: #{unet3d_decoder_forward.7} parent=35 // pred_check
        %p381 = pneg %p148
      $region42: #{unet3d_decoder_forward.7} parent=35 // pred_check_branch
        %383 = sbr.rel (%p381) target = $region44
      $region43: #{unet3d_decoder_forward.7} parent=35 // pred_region
        _
      $region44: #{unet3d_decoder_forward.7} parent=35 // pred_fallthru
        _
    $region36: #{unet3d_decoder_forward.7} parent=5 // pred_fallthru
      _
    %p384 = scmp.le.s32.totalorder 2, %s10
    // Predicated region
    $region45: #{unet3d_decoder_forward.7} parent=5 // pred_check
      %p385 = pneg %p384
    $region46: #{unet3d_decoder_forward.7} parent=5 // pred_check_branch
      %387 = sbr.rel (%p385) target = $region48
    $region47: #{unet3d_decoder_forward.7} parent=5 // pred_region
      %s388 = ssub.s32 %s10, 2
      // Predicated region
      $region49: #{unet3d_decoder_forward.7} parent=47 // pred_check
        %p389 = pneg %p154
      $region50: #{unet3d_decoder_forward.7} parent=47 // pred_check_branch
        %391 = sbr.rel (%p389) target = $region52
      $region51: #{unet3d_decoder_forward.7} parent=47 // pred_region
        %p392 = scmp.lt.s32.totalorder %s21, 1
        %s393 = scalar_select %p392, %s21, 1
        %p394 = scmp.lt.s32.totalorder %s22, 17
        %s395 = scalar_select %p394, %s22, 17
        %s396 = smul.addr %s395, 3
        %s397 = smul.addr %s393, 54
        %s398 = sadd.s32 %s396, %s397
        %s399 = smul.addr %s398, 2
        %s400 = scalar_lea.vmem %s4, %s399
      $region52: #{unet3d_decoder_forward.7} parent=47 // pred_fallthru
        _
    $region48: #{unet3d_decoder_forward.7} parent=5 // pred_fallthru
      _
  $region6: #{unet3d_decoder_forward.7} parent=0 // loop_footer
    %s14 = sadd.s32 1, %s10
  $region7: #{unet3d_decoder_forward.7} parent=0 // loop_footer_branch
    %9 = sbr.rel target = $region3
  $region8: #{unet3d_decoder_forward.7} parent=0 // loop_exit
    _

// kernel: unet3d_decoder_forward.6
$region0: #{unet3d_decoder_forward.6}
  #allocation0 [shape = 'u32[]', space=smem, size = 0x4, offset = 0x4, fixed_abs, tag = 'smem constant byte address 0x4 - core index']
  #allocation1 [shape = 'u32[144,128]{1,0:T(1,128)}', space=vmem, size = 0x12000, scoped, tag = 'internal scratch']
  #allocation2 [shape = 'f32[4,288]{1,0:T(4,128)}', space=vmem, size = 0x1800, scoped, tag = 'scratch operand']
  %s0 = inlined_call_operand.vmem [shape: bf16[2,18,8,342], index: 0, kind: input, shape index: {}]
  %s1 = inlined_call_operand.vmem [shape: bf16[3,9,4,8], index: 1, kind: input, shape index: {}]
  %s2 = inlined_call_operand.vmem [shape: f32[4,1], index: 2, kind: input, shape index: {}]
  %s3 = inlined_call_operand.vmem [shape: f32[1,288], index: 3, kind: input, shape index: {}]
  %s4 = inlined_call_operand.vmem [shape: bf16[2,16,4,288], index: 4, kind: output, shape index: {0}]
  %s5 = inlined_call_operand.vmem [shape: f32[2,16,4,1], index: 5, kind: output, shape index: {1}]
  %s6 = inlined_call_operand.vmem [shape: f32[2,16,4,1], index: 6, kind: output, shape index: {2}]
  %7 = xla_tuple %s4, %s5, %s6
  %s8 = sld [smem:[#allocation0]]
  $region73: #{unet3d_decoder_forward.6} parent=0
    _
  %s10 = ssub.s32 1, %s8
  %s11 = scalar_select 0, %s10, %s8
  loop: start=0, step=1, limit=98
  $region2: #{unet3d_decoder_forward.6} parent=0 // loop_pre_header
    _
  $region3: #{unet3d_decoder_forward.6} parent=0 // loop_header
    %s13 = sphi 0, %s17
    %p14 = scmp.ge.s32.totalorder %s13, 98
    %s20 = sphi 0, %s39
    %s21 = sphi 0, %s35
    %s22 = sphi 0, %s31
    %s23 = sphi 0, %s20
    %s24 = sphi 0, %s21
    %s25 = sphi 0, %s22
    %s26 = sphi 0, %s23
    %s27 = sphi 0, %s24
    %s28 = sphi 0, %s25
    %s46 = sphi 0, %s48
    %s49 = sphi 0, %s46
    %s50 = sphi 0, %s49
    %s66 = sphi 0, %s50
    %s72 = sphi 0, %s74
    %s75 = sphi 0, %s72
    %s76 = sphi 0, %s75
    %s92 = sphi 0, %s76
    %s96 = sphi 0, %s96
    %s98 = sphi 0, %s96
    %s99 = sphi 0, %s98
    %s113 = sphi 0, %s99
    %s117 = sphi 0, %s117
    %s119 = sphi 0, %s117
    %s120 = sphi 0, %s119
    %s134 = sphi 0, %s120
    %s142 = sphi 0, %s144
    %s145 = sphi 0, %s142
    %s146 = sphi 0, %s145
    %s162 = sphi 0, %s146
    %s170 = sphi 0, %s172
    %s173 = sphi 0, %s170
    %s174 = sphi 0, %s173
    %s190 = sphi 0, %s174
    %s198 = sphi 0, %s200
    %s201 = sphi 0, %s198
    %s202 = sphi 0, %s201
    %s218 = sphi 0, %s202
  $region4: #{unet3d_decoder_forward.6} parent=0 // loop_header_branch
    %16 = sbr.rel (%p14) target = $region8
  $region5: #{unet3d_decoder_forward.6} parent=0 // loop_body
    %s18 = ssub.s32 %s13, 1
    %s19 = ssub.s32 %s13, 2
    %s29 = sadd.s32 1, %s22
    %p30 = scmp.ge.s32.totalorder %s29, 3
    %s31 = scalar_select %p30, 0, %s29
    %s32 = sadd.s32 1, %s21
    %s33 = scalar_select %p30, %s32, %s21
    %p34 = scmp.ge.s32.totalorder %s33, 16
    %s35 = scalar_select %p34, 0, %s33
    %s36 = sadd.s32 1, %s20
    %s37 = scalar_select %p34, %s36, %s20
    %p38 = scmp.ge.s32.totalorder %s37, 2
    %s39 = scalar_select %p38, 0, %s37
    %s40 = sadd.s32 %s21, %s22
    %s41 = sadd.s32 %s35, %s31
    %s42 = ssub.s32 %s20, %s39
    %s43 = ssub.s32 %s40, %s41
    %s44 = sor.u32 %s42, %s43
    %p45 = scmp.eq.s32.totalorder %s44, 0
    %s47 = sadd.s32 %s46, 1
    %s48 = scalar_select %p45, %s46, %s47
    %p51 = pneg %p45
    %p52 = scmp.eq.s32.totalorder %s13, 95
    %p53 = por %p51, %p52
    %p54 = scmp.ne.s32.totalorder %s46, %s49
    %p55 = scmp.eq.s32.totalorder %s13, 0
    %p56 = por %p54, %p55
    %p57 = scmp.ne.s32.totalorder %s46, %s49
    %p58 = scmp.eq.s32.totalorder %s18, 95
    %p59 = por %p57, %p58
    %p60 = scmp.ne.s32.totalorder %s49, %s50
    %p61 = scmp.eq.s32.totalorder %s18, 0
    %p62 = por %p60, %p61
    %p63 = scmp.ne.s32.totalorder %s49, %s50
    %p64 = scmp.eq.s32.totalorder %s19, 95
    %p65 = por %p63, %p64
    %p67 = scmp.ne.s32.totalorder %s50, %s66
    %p68 = scmp.eq.s32.totalorder %s19, 0
    %p69 = por %p67, %p68
    %s70 = ssub.s32 %s22, %s31
    %p71 = scmp.eq.s32.totalorder %s70, 0
    %s73 = sadd.s32 %s72, 1
    %s74 = scalar_select %p71, %s72, %s73
    %p77 = pneg %p71
    %p78 = scmp.eq.s32.totalorder %s13, 95
    %p79 = por %p77, %p78
    %p80 = scmp.ne.s32.totalorder %s72, %s75
    %p81 = scmp.eq.s32.totalorder %s13, 0
    %p82 = por %p80, %p81
    %p83 = scmp.ne.s32.totalorder %s72, %s75
    %p84 = scmp.eq.s32.totalorder %s18, 95
    %p85 = por %p83, %p84
    %p86 = scmp.ne.s32.totalorder %s75, %s76
    %p87 = scmp.eq.s32.totalorder %s18, 0
    %p88 = por %p86, %p87
    %p89 = scmp.ne.s32.totalorder %s75, %s76
    %p90 = scmp.eq.s32.totalorder %s19, 95
    %p91 = por %p89, %p90
    %p93 = scmp.ne.s32.totalorder %s76, %s92
    %p94 = scmp.eq.s32.totalorder %s19, 0
    %p95 = por %p93, %p94
    %s97 = sadd.s32 %s96, 1
    %p100 = scmp.eq.s32.totalorder %s13, 95
    %p101 = scmp.ne.s32.totalorder %s96, %s98
    %p102 = scmp.eq.s32.totalorder %s13, 0
    %p103 = por %p101, %p102
    %p104 = scmp.ne.s32.totalorder %s96, %s98
    %p105 = scmp.eq.s32.totalorder %s18, 95
    %p106 = por %p104, %p105
    %p107 = scmp.ne.s32.totalorder %s98, %s99
    %p108 = scmp.eq.s32.totalorder %s18, 0
    %p109 = por %p107, %p108
    %p110 = scmp.ne.s32.totalorder %s98, %s99
    %p111 = scmp.eq.s32.totalorder %s19, 95
    %p112 = por %p110, %p111
    %p114 = scmp.ne.s32.totalorder %s99, %s113
    %p115 = scmp.eq.s32.totalorder %s19, 0
    %p116 = por %p114, %p115
    %s118 = sadd.s32 %s117, 1
    %p121 = scmp.eq.s32.totalorder %s13, 95
    %p122 = scmp.ne.s32.totalorder %s117, %s119
    %p123 = scmp.eq.s32.totalorder %s13, 0
    %p124 = por %p122, %p123
    %p125 = scmp.ne.s32.totalorder %s117, %s119
    %p126 = scmp.eq.s32.totalorder %s18, 95
    %p127 = por %p125, %p126
    %p128 = scmp.ne.s32.totalorder %s119, %s120
    %p129 = scmp.eq.s32.totalorder %s18, 0
    %p130 = por %p128, %p129
    %p131 = scmp.ne.s32.totalorder %s119, %s120
    %p132 = scmp.eq.s32.totalorder %s19, 95
    %p133 = por %p131, %p132
    %p135 = scmp.ne.s32.totalorder %s120, %s134
    %p136 = scmp.eq.s32.totalorder %s19, 0
    %p137 = por %p135, %p136
    %s138 = ssub.s32 %s20, %s39
    %s139 = ssub.s32 %s21, %s35
    %s140 = sor.u32 %s138, %s139
    %p141 = scmp.eq.s32.totalorder %s140, 0
    %s143 = sadd.s32 %s142, 1
    %s144 = scalar_select %p141, %s142, %s143
    %p147 = pneg %p141
    %p148 = scmp.eq.s32.totalorder %s13, 95
    %p149 = por %p147, %p148
    %p150 = scmp.ne.s32.totalorder %s142, %s145
    %p151 = scmp.eq.s32.totalorder %s13, 0
    %p152 = por %p150, %p151
    %p153 = scmp.ne.s32.totalorder %s142, %s145
    %p154 = scmp.eq.s32.totalorder %s18, 95
    %p155 = por %p153, %p154
    %p156 = scmp.ne.s32.totalorder %s145, %s146
    %p157 = scmp.eq.s32.totalorder %s18, 0
    %p158 = por %p156, %p157
    %p159 = scmp.ne.s32.totalorder %s145, %s146
    %p160 = scmp.eq.s32.totalorder %s19, 95
    %p161 = por %p159, %p160
    %p163 = scmp.ne.s32.totalorder %s146, %s162
    %p164 = scmp.eq.s32.totalorder %s19, 0
    %p165 = por %p163, %p164
    %s166 = ssub.s32 %s20, %s39
    %s167 = ssub.s32 %s21, %s35
    %s168 = sor.u32 %s166, %s167
    %p169 = scmp.eq.s32.totalorder %s168, 0
    %s171 = sadd.s32 %s170, 1
    %s172 = scalar_select %p169, %s170, %s171
    %p175 = pneg %p169
    %p176 = scmp.eq.s32.totalorder %s13, 95
    %p177 = por %p175, %p176
    %p178 = scmp.ne.s32.totalorder %s170, %s173
    %p179 = scmp.eq.s32.totalorder %s13, 0
    %p180 = por %p178, %p179
    %p181 = scmp.ne.s32.totalorder %s170, %s173
    %p182 = scmp.eq.s32.totalorder %s18, 95
    %p183 = por %p181, %p182
    %p184 = scmp.ne.s32.totalorder %s173, %s174
    %p185 = scmp.eq.s32.totalorder %s18, 0
    %p186 = por %p184, %p185
    %p187 = scmp.ne.s32.totalorder %s173, %s174
    %p188 = scmp.eq.s32.totalorder %s19, 95
    %p189 = por %p187, %p188
    %p191 = scmp.ne.s32.totalorder %s174, %s190
    %p192 = scmp.eq.s32.totalorder %s19, 0
    %p193 = por %p191, %p192
    %s194 = ssub.s32 %s20, %s39
    %s195 = ssub.s32 %s21, %s35
    %s196 = sor.u32 %s194, %s195
    %p197 = scmp.eq.s32.totalorder %s196, 0
    %s199 = sadd.s32 %s198, 1
    %s200 = scalar_select %p197, %s198, %s199
    %p203 = pneg %p197
    %p204 = scmp.eq.s32.totalorder %s13, 95
    %p205 = por %p203, %p204
    %p206 = scmp.ne.s32.totalorder %s198, %s201
    %p207 = scmp.eq.s32.totalorder %s13, 0
    %p208 = por %p206, %p207
    %p209 = scmp.ne.s32.totalorder %s198, %s201
    %p210 = scmp.eq.s32.totalorder %s18, 95
    %p211 = por %p209, %p210
    %p212 = scmp.ne.s32.totalorder %s201, %s202
    %p213 = scmp.eq.s32.totalorder %s18, 0
    %p214 = por %p212, %p213
    %p215 = scmp.ne.s32.totalorder %s201, %s202
    %p216 = scmp.eq.s32.totalorder %s19, 95
    %p217 = por %p215, %p216
    %p219 = scmp.ne.s32.totalorder %s202, %s218
    %p220 = scmp.eq.s32.totalorder %s19, 0
    %p221 = por %p219, %p220
    %p222 = scmp.le.s32.totalorder 1, %s13
    %p223 = scmp.lt.s32.totalorder %s13, 97
    %p224 = pnand %p222, %p223
    %p225 = pneg %p224
    // Predicated region
    $region9: #{unet3d_decoder_forward.6} parent=5 // pred_check
      _
    $region10: #{unet3d_decoder_forward.6} parent=5 // pred_check_branch
      %227 = sbr.rel (%p224) target = $region12
    $region11: #{unet3d_decoder_forward.6} parent=5 // pred_region
      %s228 = ssub.s32 %s13, 1
      // Predicated region
      $region13: #{unet3d_decoder_forward.6} parent=11 // pred_check
        %p229 = pneg %p109
      $region14: #{unet3d_decoder_forward.6} parent=11 // pred_check_branch
        %231 = sbr.rel (%p229) target = $region16
      $region15: #{unet3d_decoder_forward.6} parent=11 // pred_region
        _
      $region16: #{unet3d_decoder_forward.6} parent=11 // pred_fallthru
        _
      // Predicated region
      $region17: #{unet3d_decoder_forward.6} parent=11 // pred_check
        %p232 = pneg %p130
      $region18: #{unet3d_decoder_forward.6} parent=11 // pred_check_branch
        %234 = sbr.rel (%p232) target = $region20
      $region19: #{unet3d_decoder_forward.6} parent=11 // pred_region
        _
      $region20: #{unet3d_decoder_forward.6} parent=11 // pred_fallthru
        _
    $region12: #{unet3d_decoder_forward.6} parent=5 // pred_fallthru
      _
    %p235 = scmp.lt.s32.totalorder %s13, 96
    // Predicated region
    $region21: #{unet3d_decoder_forward.6} parent=5 // pred_check
      %p236 = pneg %p235
    $region22: #{unet3d_decoder_forward.6} parent=5 // pred_check_branch
      %238 = sbr.rel (%p236) target = $region24
    $region23: #{unet3d_decoder_forward.6} parent=5 // pred_region
      // Predicated region
      $region25: #{unet3d_decoder_forward.6} parent=23 // pred_check
        %p239 = pneg %p56
      $region26: #{unet3d_decoder_forward.6} parent=23 // pred_check_branch
        %241 = sbr.rel (%p239) target = $region28
      $region27: #{unet3d_decoder_forward.6} parent=23 // pred_region
        %s242 = sadd.s32 %s21, %s22
        %p243 = scmp.lt.s32.totalorder %s20, 1
        %s244 = scalar_select %p243, %s20, 1
        %p245 = scmp.lt.s32.totalorder %s242, 17
        %s246 = scalar_select %p245, %s242, 17
        %s247 = smul.addr %s246, 3
        %s248 = smul.addr %s244, 54
        %s249 = sadd.s32 %s247, %s248
        %s250 = smul.addr %s249, 4
        %s251 = scalar_lea.vmem %s0, %s250
        %s252 = sadd.s32 %s21, %s22
      $region28: #{unet3d_decoder_forward.6} parent=23 // pred_fallthru
        _
      // Predicated region
      $region29: #{unet3d_decoder_forward.6} parent=23 // pred_check
        %p253 = pneg %p82
      $region30: #{unet3d_decoder_forward.6} parent=23 // pred_check_branch
        %255 = sbr.rel (%p253) target = $region32
      $region31: #{unet3d_decoder_forward.6} parent=23 // pred_region
        %p256 = scmp.lt.s32.totalorder %s22, 2
        %s257 = scalar_select %p256, %s22, 2
        %s258 = smul.addr %s257, 9
        %s259 = smul.addr %s258, 2
        %s260 = scalar_lea.vmem %s1, %s259
      $region32: #{unet3d_decoder_forward.6} parent=23 // pred_fallthru
        _
    $region24: #{unet3d_decoder_forward.6} parent=5 // pred_fallthru
      _
    %p261 = scmp.le.s32.totalorder 1, %s13
    %p262 = scmp.lt.s32.totalorder %s13, 97
    %p263 = pnand %p261, %p262
    %p264 = pneg %p263
    // Predicated region
    $region33: #{unet3d_decoder_forward.6} parent=5 // pred_check
      _
    $region34: #{unet3d_decoder_forward.6} parent=5 // pred_check_branch
      %266 = sbr.rel (%p263) target = $region36
    $region35: #{unet3d_decoder_forward.6} parent=5 // pred_region
      %s267 = ssub.s32 %s13, 1
      %s268 = sadd.s32 %s24, %s25
      %p269 = scmp.lt.s32.totalorder %s23, 1
      %s270 = scalar_select %p269, %s23, 1
      %p271 = scmp.lt.s32.totalorder %s268, 17
      %s272 = scalar_select %p271, %s268, 17
      %s273 = smul.addr %s272, 3
      %s274 = smul.addr %s270, 54
      %s275 = sadd.s32 %s273, %s274
      %s276 = smul.addr %s275, 4
      %s277 = scalar_lea.vmem %s0, %s276
      %p278 = pneg %p62
      %p279 = pneg %p59
      %p280 = scmp.lt.s32.totalorder %s25, 2
      %s281 = scalar_select %p280, %s25, 2
      %s282 = smul.addr %s281, 9
      %s283 = smul.addr %s282, 2
      %s284 = scalar_lea.vmem %s1, %s283
      %p285 = pneg %p88
      %p286 = pneg %p85
      %p287 = pneg %p109
      %p288 = pneg %p106
      %p289 = pneg %p130
      %p290 = pneg %p127
      %p291 = pneg %p158
      %p292 = pneg %p155
      %p293 = scmp.lt.s32.totalorder %s23, 1
      %s294 = scalar_select %p293, %s23, 1
      %p295 = scmp.lt.s32.totalorder %s24, 15
      %s296 = scalar_select %p295, %s24, 15
      %s297 = smul.addr %s296, 3
      %s298 = smul.addr %s294, 48
      %s299 = sadd.s32 %s297, %s298
      %s300 = smul.addr %s299, 2
      %s301 = scalar_lea.vmem %s4, %s300
      %p302 = pneg %p186
      %p303 = pneg %p183
      %p304 = scmp.lt.s32.totalorder %s23, 1
      %s305 = scalar_select %p304, %s23, 1
      %p306 = scmp.lt.s32.totalorder %s24, 15
      %s307 = scalar_select %p306, %s24, 15
      %s308 = smul.addr %s305, 16
      %s309 = sadd.s32 %s307, %s308
      %s310 = smul.addr %s309, 4
      %s311 = scalar_lea.vmem %s5, %s310
      %p312 = pneg %p214
      %p313 = pneg %p211
      %p314 = scmp.lt.s32.totalorder %s23, 1
      %s315 = scalar_select %p314, %s23, 1
      %p316 = scmp.lt.s32.totalorder %s24, 15
      %s317 = scalar_select %p316, %s24, 15
      %s318 = smul.addr %s315, 16
      %s319 = sadd.s32 %s317, %s318
      %s320 = smul.addr %s319, 4
      %s321 = scalar_lea.vmem %s6, %s320
      %s322 = sadd.s32 %s24, %s25
      %p323 = scmp.lt.s32.totalorder %s23, 1
      %s324 = scalar_select %p323, %s23, 1
      %p325 = scmp.lt.s32.totalorder %s322, 17
      %s326 = scalar_select %p325, %s322, 17
      %s327 = smul.addr %s326, 3
      %s328 = smul.addr %s324, 54
      %s329 = sadd.s32 %s327, %s328
      %s330 = smul.addr %s329, 4
      %s331 = scalar_lea.vmem %s0, %s330
      %s332 = sadd.s32 %s24, %s25
      %p333 = scmp.lt.s32.totalorder %s25, 2
      %s334 = scalar_select %p333, %s25, 2
      %s335 = smul.addr %s334, 9
      %s336 = smul.addr %s335, 2
      %s337 = scalar_lea.vmem %s1, %s336
      %p338 = scmp.lt.s32.totalorder %s23, 1
      %s339 = scalar_select %p338, %s23, 1
      %p340 = scmp.lt.s32.totalorder %s24, 15
      %s341 = scalar_select %p340, %s24, 15
      %s342 = smul.addr %s341, 3
      %s343 = smul.addr %s339, 48
      %s344 = sadd.s32 %s342, %s343
      %s345 = smul.addr %s344, 2
      %s346 = scalar_lea.vmem %s4, %s345
      %p347 = scmp.lt.s32.totalorder %s23, 1
      %s348 = scalar_select %p347, %s23, 1
      %p349 = scmp.lt.s32.totalorder %s24, 15
      %s350 = scalar_select %p349, %s24, 15
      %s351 = smul.addr %s348, 16
      %s352 = sadd.s32 %s350, %s351
      %s353 = smul.addr %s352, 4
      %s354 = scalar_lea.vmem %s5, %s353
      %p355 = scmp.lt.s32.totalorder %s23, 1
      %s356 = scalar_select %p355, %s23, 1
      %p357 = scmp.lt.s32.totalorder %s24, 15
      %s358 = scalar_select %p357, %s24, 15
      %s359 = smul.addr %s356, 16
      %s360 = sadd.s32 %s358, %s359
      %s361 = smul.addr %s360, 4
      %s362 = scalar_lea.vmem %s6, %s361
      %p364 = scmp.eq.s32.totalorder %s25, 0
      // Predicated region
      $region37: #{unet3d_decoder_forward.6} parent=35 // pred_check
        %p365 = pneg %p364
      $region38: #{unet3d_decoder_forward.6} parent=35 // pred_check_branch
        %367 = sbr.rel (%p365) target = $region40
      $region39: #{unet3d_decoder_forward.6} parent=35 // pred_region
        %368 = vst [vmem:[#allocation2] sm:$0xff] 0.0
        %vm369 = vcmask 257024
        %370 = vst.msk [vmem:[#allocation2 + $0x8] sm:$0xf] %vm369, 0.0
      $region40: #{unet3d_decoder_forward.6} parent=35 // pred_fallthru
        _
      %v371 = vld [vmem:[#allocation2] sm:$0xff]
      %v372 = vld [vmem:[#allocation2 + $0x8] sm:$0xf]
      %v373 = vld [vmem:[%s337] sm:$0x3]
      %v374 = vld [vmem:[%s331] sm:$0xff]
      %v375 = vld [vmem:[%s331 + $0x8] sm:$0xf]
      %v378 = vunpack.c.l.b16 %v374
      %v379 = vunpack.c.h.b16 %v374
      %v380 = vunpack.c.l.b16 %v375
      %v381 = vpack.c.b16 %v378, %v378
      %v382 = vpack.c.b16 %v379, %v379
      %v383 = vpack.c.b16 %v380, %v380
      %vm384 = vcmask 64512
      %v386 = vsel %vm384, %v373, 0
      %vm388 = vcmask 1043456
      %v390 = vsel %vm388, %v381, 0
      %v393 = vsel %vm388, %v382, 0
      %v396 = vsel %vm388, %v383, 0
      %398 = vmatprep.subr.bf16.mxu0 0
      %399 = vmatpush1.bf16.msra.mxu0 0
      %400 = vmatprep.subr.bf16.mxu0 0
      %401 = vmatpush1.bf16.msra.mxu0 0
      %402 = vmatprep.subr.bf16.mxu0 0
      %403 = vmatpush1.bf16.msra.mxu0 0
      %404 = vmatprep.subr.bf16.mxu0 0
      %405 = vmatpush1.bf16.msra.mxu0 0
      %406 = vmatprep.subr.bf16.mxu0 0
      %407 = vmatpush1.bf16.msra.mxu0 0
      %408 = vmatprep.subr.bf16.mxu0 0
      %409 = vmatpush1.bf16.msra.mxu0 0
      %410 = vmatprep.subr.bf16.mxu0 0
      %411 = vmatpush1.bf16.msra.mxu0 0
      %412 = vmatprep.subr.bf16.mxu0 %v393
      %413 = vmatpush1.bf16.msra.mxu0 %v390
      %414 = vmatprep.subr.bf16.mxu0 0
      %415 = vmatpush2.bf16.msra.mxu0 0
      %416 = vmatprep.subr.bf16.mxu0 0
      %417 = vmatpush2.bf16.msra.mxu0 0
      %418 = vmatprep.subr.bf16.mxu0 0
      %419 = vmatpush2.bf16.msra.mxu0 0
      %420 = vmatprep.subr.bf16.mxu0 0
      %421 = vmatpush2.bf16.msra.mxu0 0
      %422 = vmatprep.subr.bf16.mxu0 0
      %423 = vmatpush2.bf16.msra.mxu0 0
      %424 = vmatprep.subr.bf16.mxu0 0
      %425 = vmatpush2.bf16.msra.mxu0 0
      %426 = vmatprep.subr.bf16.mxu0 0
      %427 = vmatpush2.bf16.msra.mxu0 0
      %428 = vmatprep.subr.bf16.mxu0 0
      %429 = vmatpush2.bf16.msra.mxu0 0
      %430 = vmatprep.mubr.bf16.mxu0 0
      %431 = vmatmul.mubr.bf16.gmra.mxu0 %v386
      %v432 = vpop.f32.mrf.mxu0
      %v433 = vadd.f32 0.0, %v432
      %v434 = vpop.f32.mrf.mxu0
      %v435 = vadd.f32 0.0, %v434
      %v436 = vpop.f32.mrf.mxu0
      %v437 = vpop.f32.mrf.mxu0
      %438 = vdwg.mxu0
      %439 = vmatprep.subr.bf16.mxu0 0
      %440 = vmatpush1.bf16.msra.mxu0 0
      %441 = vmatprep.subr.bf16.mxu0 0
      %442 = vmatpush1.bf16.msra.mxu0 0
      %443 = vmatprep.subr.bf16.mxu0 0
      %444 = vmatpush1.bf16.msra.mxu0 0
      %445 = vmatprep.subr.bf16.mxu0 0
      %446 = vmatpush1.bf16.msra.mxu0 0
      %447 = vmatprep.subr.bf16.mxu0 0
      %448 = vmatpush1.bf16.msra.mxu0 0
      %449 = vmatprep.subr.bf16.mxu0 0
      %450 = vmatpush1.bf16.msra.mxu0 0
      %451 = vmatprep.subr.bf16.mxu0 0
      %452 = vmatpush1.bf16.msra.mxu0 0
      %453 = vmatprep.subr.bf16.mxu0 0
      %454 = vmatpush1.bf16.msra.mxu0 %v396
      %455 = vmatprep.subr.bf16.mxu0 0
      %456 = vmatpush2.bf16.msra.mxu0 0
      %457 = vmatprep.subr.bf16.mxu0 0
      %458 = vmatpush2.bf16.msra.mxu0 0
      %459 = vmatprep.subr.bf16.mxu0 0
      %460 = vmatpush2.bf16.msra.mxu0 0
      %461 = vmatprep.subr.bf16.mxu0 0
      %462 = vmatpush2.bf16.msra.mxu0 0
      %463 = vmatprep.subr.bf16.mxu0 0
      %464 = vmatpush2.bf16.msra.mxu0 0
      %465 = vmatprep.subr.bf16.mxu0 0
      %466 = vmatpush2.bf16.msra.mxu0 0
      %467 = vmatprep.subr.bf16.mxu0 0
      %468 = vmatpush2.bf16.msra.mxu0 0
      %469 = vmatprep.subr.bf16.mxu0 0
      %470 = vmatpush2.bf16.msra.mxu0 0
      %471 = vmatprep.mubr.bf16.mxu0 0
      %472 = vmatmul.mubr.bf16.gmra.mxu0 %v386
      %v473 = vpop.f32.mrf.mxu0
      %v474 = vadd.f32 0.0, %v473
      %v475 = vpop.f32.mrf.mxu0
      %v476 = vpop.f32.mrf.mxu0
      %v477 = vpop.f32.mrf.mxu0
      %478 = vdwg.mxu0
      %v481 = vcombine.low %v433, %v435
      %v483 = vadd.f32 %v371, %v481
      %v484 = vadd.f32 %v372, %v474
      %s485 = scalar_lea.vmem %s337, 2
      %v486 = vld [vmem:[%s485] sm:$0x3]
      %v487 = vld [vmem:[%s331] sm:$0xff]
      %v488 = vld [vmem:[%s331 + $0x8] sm:$0xf]
      %v491 = vunpack.c.l.b16 %v487
      %v492 = vunpack.c.h.b16 %v487
      %v493 = vunpack.c.l.b16 %v488
      %v494 = vpack.c.b16 %v491, %v491
      %v495 = vpack.c.b16 %v492, %v492
      %v496 = vpack.c.b16 %v493, %v493
      %497 = vrot.lane.b32.xlu0 %v494, 127
      %v498 = vpop.permute.xlu0 %497
      %499 = vrot.lane.b32.xlu0 %v495, 127
      %v500 = vpop.permute.xlu0 %499
      %501 = vrot.lane.b32.xlu0 %v496, 127
      %v502 = vpop.permute.xlu0 %501
      %vm503 = vcmask 1039360
      %v504 = vsel %vm503, %v498, %v500
      %v505 = vsel %vm503, %v500, %v502
      %v507 = vsel %vm384, %v486, 0
      %v510 = vsel %vm388, %v504, 0
      %v513 = vsel %vm388, %v505, 0
      %v516 = vsel %vm388, %v502, 0
      %518 = vmatprep.subr.bf16.mxu0 0
      %519 = vmatpush1.bf16.msra.mxu0 0
      %520 = vmatprep.subr.bf16.mxu0 0
      %521 = vmatpush1.bf16.msra.mxu0 0
      %522 = vmatprep.subr.bf16.mxu0 0
      %523 = vmatpush1.bf16.msra.mxu0 0
      %524 = vmatprep.subr.bf16.mxu0 0
      %525 = vmatpush1.bf16.msra.mxu0 0
      %526 = vmatprep.subr.bf16.mxu0 0
      %527 = vmatpush1.bf16.msra.mxu0 0
      %528 = vmatprep.subr.bf16.mxu0 0
      %529 = vmatpush1.bf16.msra.mxu0 0
      %530 = vmatprep.subr.bf16.mxu0 0
      %531 = vmatpush1.bf16.msra.mxu0 0
      %532 = vmatprep.subr.bf16.mxu0 %v513
      %533 = vmatpush1.bf16.msra.mxu0 %v510
      %534 = vmatprep.subr.bf16.mxu0 0
      %535 = vmatpush2.bf16.msra.mxu0 0
      %536 = vmatprep.subr.bf16.mxu0 0
      %537 = vmatpush2.bf16.msra.mxu0 0
      %538 = vmatprep.subr.bf16.mxu0 0
      %539 = vmatpush2.bf16.msra.mxu0 0
      %540 = vmatprep.subr.bf16.mxu0 0
      %541 = vmatpush2.bf16.msra.mxu0 0
      %542 = vmatprep.subr.bf16.mxu0 0
      %543 = vmatpush2.bf16.msra.mxu0 0
      %544 = vmatprep.subr.bf16.mxu0 0
      %545 = vmatpush2.bf16.msra.mxu0 0
      %546 = vmatprep.subr.bf16.mxu0 0
      %547 = vmatpush2.bf16.msra.mxu0 0
      %548 = vmatprep.subr.bf16.mxu0 0
      %549 = vmatpush2.bf16.msra.mxu0 0
      %550 = vmatprep.mubr.bf16.mxu0 0
      %551 = vmatmul.mubr.bf16.gmra.mxu0 %v507
      %v552 = vpop.f32.mrf.mxu0
      %v553 = vadd.f32 0.0, %v552
      %v554 = vpop.f32.mrf.mxu0
      %v555 = vadd.f32 0.0, %v554
      %v556 = vpop.f32.mrf.mxu0
      %v557 = vpop.f32.mrf.mxu0
      %558 = vdwg.mxu0
      %559 = vmatprep.subr.bf16.mxu0 0
      %560 = vmatpush1.bf16.msra.mxu0 0
      %561 = vmatprep.subr.bf16.mxu0 0
      %562 = vmatpush1.bf16.msra.mxu0 0
      %563 = vmatprep.subr.bf16.mxu0 0
      %564 = vmatpush1.bf16.msra.mxu0 0
      %565 = vmatprep.subr.bf16.mxu0 0
      %566 = vmatpush1.bf16.msra.mxu0 0
      %567 = vmatprep.subr.bf16.mxu0 0
      %568 = vmatpush1.bf16.msra.mxu0 0
      %569 = vmatprep.subr.bf16.mxu0 0
      %570 = vmatpush1.bf16.msra.mxu0 0
      %571 = vmatprep.subr.bf16.mxu0 0
      %572 = vmatpush1.bf16.msra.mxu0 0
      %573 = vmatprep.subr.bf16.mxu0 0
      %574 = vmatpush1.bf16.msra.mxu0 %v516
      %575 = vmatprep.subr.bf16.mxu0 0
      %576 = vmatpush2.bf16.msra.mxu0 0
      %577 = vmatprep.subr.bf16.mxu0 0
      %578 = vmatpush2.bf16.msra.mxu0 0
      %579 = vmatprep.subr.bf16.mxu0 0
      %580 = vmatpush2.bf16.msra.mxu0 0
      %581 = vmatprep.subr.bf16.mxu0 0
      %582 = vmatpush2.bf16.msra.mxu0 0
      %583 = vmatprep.subr.bf16.mxu0 0
      %584 = vmatpush2.bf16.msra.mxu0 0
      %585 = vmatprep.subr.bf16.mxu0 0
      %586 = vmatpush2.bf16.msra.mxu0 0
      %587 = vmatprep.subr.bf16.mxu0 0
      %588 = vmatpush2.bf16.msra.mxu0 0
      %589 = vmatprep.subr.bf16.mxu0 0
      %590 = vmatpush2.bf16.msra.mxu0 0
      %591 = vmatprep.mubr.bf16.mxu0 0
      %592 = vmatmul.mubr.bf16.gmra.mxu0 %v507
      %v593 = vpop.f32.mrf.mxu0
      %v594 = vadd.f32 0.0, %v593
      %v595 = vpop.f32.mrf.mxu0
      %v596 = vpop.f32.mrf.mxu0
      %v597 = vpop.f32.mrf.mxu0
      %598 = vdwg.mxu0
      %v601 = vcombine.low %v553, %v555
      %v603 = vadd.f32 %v483, %v601
      %v604 = vadd.f32 %v484, %v594
      %s605 = scalar_lea.vmem %s337, 4
      %v606 = vld [vmem:[%s605] sm:$0x3]
      %v607 = vld [vmem:[%s331] sm:$0xff]
      %v608 = vld [vmem:[%s331 + $0x8] sm:$0xf]
      %v611 = vunpack.c.l.b16 %v607
      %v612 = vunpack.c.h.b16 %v607
      %v613 = vunpack.c.l.b16 %v608
      %v614 = vpack.c.b16 %v611, %v611
      %v615 = vpack.c.b16 %v612, %v612
      %v616 = vpack.c.b16 %v613, %v613
      %617 = vrot.lane.b32.xlu0 %v614, 126
      %v618 = vpop.permute.xlu0 %617
      %619 = vrot.lane.b32.xlu0 %v615, 126
      %v620 = vpop.permute.xlu0 %619
      %621 = vrot.lane.b32.xlu0 %v616, 126
      %v622 = vpop.permute.xlu0 %621
      %vm623 = vcmask 1031168
      %v624 = vsel %vm623, %v618, %v620
      %v625 = vsel %vm623, %v620, %v622
      %v627 = vsel %vm384, %v606, 0
      %v630 = vsel %vm388, %v624, 0
      %v633 = vsel %vm388, %v625, 0
      %v636 = vsel %vm388, %v622, 0
      %638 = vmatprep.subr.bf16.mxu0 0
      %639 = vmatpush1.bf16.msra.mxu0 0
      %640 = vmatprep.subr.bf16.mxu0 0
      %641 = vmatpush1.bf16.msra.mxu0 0
      %642 = vmatprep.subr.bf16.mxu0 0
      %643 = vmatpush1.bf16.msra.mxu0 0
      %644 = vmatprep.subr.bf16.mxu0 0
      %645 = vmatpush1.bf16.msra.mxu0 0
      %646 = vmatprep.subr.bf16.mxu0 0
      %647 = vmatpush1.bf16.msra.mxu0 0
      %648 = vmatprep.subr.bf16.mxu0 0
      %649 = vmatpush1.bf16.msra.mxu0 0
      %650 = vmatprep.subr.bf16.mxu0 0
      %651 = vmatpush1.bf16.msra.mxu0 0
      %652 = vmatprep.subr.bf16.mxu0 %v633
      %653 = vmatpush1.bf16.msra.mxu0 %v630
      %654 = vmatprep.subr.bf16.mxu0 0
      %655 = vmatpush2.bf16.msra.mxu0 0
      %656 = vmatprep.subr.bf16.mxu0 0
      %657 = vmatpush2.bf16.msra.mxu0 0
      %658 = vmatprep.subr.bf16.mxu0 0
      %659 = vmatpush2.bf16.msra.mxu0 0
      %660 = vmatprep.subr.bf16.mxu0 0
      %661 = vmatpush2.bf16.msra.mxu0 0
      %662 = vmatprep.subr.bf16.mxu0 0
      %663 = vmatpush2.bf16.msra.mxu0 0
      %664 = vmatprep.subr.bf16.mxu0 0
      %665 = vmatpush2.bf16.msra.mxu0 0
      %666 = vmatprep.subr.bf16.mxu0 0
      %667 = vmatpush2.bf16.msra.mxu0 0
      %668 = vmatprep.subr.bf16.mxu0 0
      %669 = vmatpush2.bf16.msra.mxu0 0
      %670 = vmatprep.mubr.bf16.mxu0 0
      %671 = vmatmul.mubr.bf16.gmra.mxu0 %v627
      %v672 = vpop.f32.mrf.mxu0
      %v673 = vadd.f32 0.0, %v672
      %v674 = vpop.f32.mrf.mxu0
      %v675 = vadd.f32 0.0, %v674
      %v676 = vpop.f32.mrf.mxu0
      %v677 = vpop.f32.mrf.mxu0
      %678 = vdwg.mxu0
      %679 = vmatprep.subr.bf16.mxu0 0
      %680 = vmatpush1.bf16.msra.mxu0 0
      %681 = vmatprep.subr.bf16.mxu0 0
      %682 = vmatpush1.bf16.msra.mxu0 0
      %683 = vmatprep.subr.bf16.mxu0 0
      %684 = vmatpush1.bf16.msra.mxu0 0
      %685 = vmatprep.subr.bf16.mxu0 0
      %686 = vmatpush1.bf16.msra.mxu0 0
      %687 = vmatprep.subr.bf16.mxu0 0
      %688 = vmatpush1.bf16.msra.mxu0 0
      %689 = vmatprep.subr.bf16.mxu0 0
      %690 = vmatpush1.bf16.msra.mxu0 0
      %691 = vmatprep.subr.bf16.mxu0 0
      %692 = vmatpush1.bf16.msra.mxu0 0
      %693 = vmatprep.subr.bf16.mxu0 0
      %694 = vmatpush1.bf16.msra.mxu0 %v636
      %695 = vmatprep.subr.bf16.mxu0 0
      %696 = vmatpush2.bf16.msra.mxu0 0
      %697 = vmatprep.subr.bf16.mxu0 0
      %698 = vmatpush2.bf16.msra.mxu0 0
      %699 = vmatprep.subr.bf16.mxu0 0
      %700 = vmatpush2.bf16.msra.mxu0 0
      %701 = vmatprep.subr.bf16.mxu0 0
      %702 = vmatpush2.bf16.msra.mxu0 0
      %703 = vmatprep.subr.bf16.mxu0 0
      %704 = vmatpush2.bf16.msra.mxu0 0
      %705 = vmatprep.subr.bf16.mxu0 0
      %706 = vmatpush2.bf16.msra.mxu0 0
      %707 = vmatprep.subr.bf16.mxu0 0
      %708 = vmatpush2.bf16.msra.mxu0 0
      %709 = vmatprep.subr.bf16.mxu0 0
      %710 = vmatpush2.bf16.msra.mxu0 0
      %711 = vmatprep.mubr.bf16.mxu0 0
      %712 = vmatmul.mubr.bf16.gmra.mxu0 %v627
      %v713 = vpop.f32.mrf.mxu0
      %v714 = vadd.f32 0.0, %v713
      %v715 = vpop.f32.mrf.mxu0
      %v716 = vpop.f32.mrf.mxu0
      %v717 = vpop.f32.mrf.mxu0
      %718 = vdwg.mxu0
      %v721 = vcombine.low %v673, %v675
      %v723 = vadd.f32 %v603, %v721
      %v724 = vadd.f32 %v604, %v714
      %s725 = scalar_lea.vmem %s337, 6
      %v726 = vld [vmem:[%s725] sm:$0x3]
      %v727 = vld [vmem:[%s331] sm:$0xff]
      %v728 = vld [vmem:[%s331 + $0x8] sm:$0xf]
      %v731 = vunpack.c.l.b16 %v727
      %v732 = vunpack.c.h.b16 %v727
      %v733 = vunpack.c.l.b16 %v728
      %v734 = vpack.c.b16 %v731, %v731
      %v735 = vpack.c.b16 %v732, %v732
      %v736 = vpack.c.b16 %v733, %v733
      %737 = vrot.lane.b32.xlu0 %v734, 110
      %v738 = vpop.permute.xlu0 %737
      %739 = vrot.lane.b32.xlu0 %v735, 110
      %v740 = vpop.permute.xlu0 %739
      %741 = vrot.lane.b32.xlu0 %v736, 110
      %v742 = vpop.permute.xlu0 %741
      %vm743 = vcmask 900096
      %v744 = vsel %vm743, %v738, %v740
      %v745 = vsel %vm743, %v740, %v742
      %v747 = vsel %vm384, %v726, 0
      %v750 = vsel %vm388, %v744, 0
      %v753 = vsel %vm388, %v745, 0
      %v756 = vsel %vm388, %v742, 0
      %758 = vmatprep.subr.bf16.mxu0 0
      %759 = vmatpush1.bf16.msra.mxu0 0
      %760 = vmatprep.subr.bf16.mxu0 0
      %761 = vmatpush1.bf16.msra.mxu0 0
      %762 = vmatprep.subr.bf16.mxu0 0
      %763 = vmatpush1.bf16.msra.mxu0 0
      %764 = vmatprep.subr.bf16.mxu0 0
      %765 = vmatpush1.bf16.msra.mxu0 0
      %766 = vmatprep.subr.bf16.mxu0 0
      %767 = vmatpush1.bf16.msra.mxu0 0
      %768 = vmatprep.subr.bf16.mxu0 0
      %769 = vmatpush1.bf16.msra.mxu0 0
      %770 = vmatprep.subr.bf16.mxu0 0
      %771 = vmatpush1.bf16.msra.mxu0 0
      %772 = vmatprep.subr.bf16.mxu0 %v753
      %773 = vmatpush1.bf16.msra.mxu0 %v750
      %774 = vmatprep.subr.bf16.mxu0 0
      %775 = vmatpush2.bf16.msra.mxu0 0
      %776 = vmatprep.subr.bf16.mxu0 0
      %777 = vmatpush2.bf16.msra.mxu0 0
      %778 = vmatprep.subr.bf16.mxu0 0
      %779 = vmatpush2.bf16.msra.mxu0 0
      %780 = vmatprep.subr.bf16.mxu0 0
      %781 = vmatpush2.bf16.msra.mxu0 0
      %782 = vmatprep.subr.bf16.mxu0 0
      %783 = vmatpush2.bf16.msra.mxu0 0
      %784 = vmatprep.subr.bf16.mxu0 0
      %785 = vmatpush2.bf16.msra.mxu0 0
      %786 = vmatprep.subr.bf16.mxu0 0
      %787 = vmatpush2.bf16.msra.mxu0 0
      %788 = vmatprep.subr.bf16.mxu0 0
      %789 = vmatpush2.bf16.msra.mxu0 0
      %790 = vmatprep.mubr.bf16.mxu0 0
      %791 = vmatmul.mubr.bf16.gmra.mxu0 %v747
      %v792 = vpop.f32.mrf.mxu0
      %v793 = vadd.f32 0.0, %v792
      %v794 = vpop.f32.mrf.mxu0
      %v795 = vadd.f32 0.0, %v794
      %v796 = vpop.f32.mrf.mxu0
      %v797 = vpop.f32.mrf.mxu0
      %798 = vdwg.mxu0
      %799 = vmatprep.subr.bf16.mxu0 0
      %800 = vmatpush1.bf16.msra.mxu0 0
      %801 = vmatprep.subr.bf16.mxu0 0
      %802 = vmatpush1.bf16.msra.mxu0 0
      %803 = vmatprep.subr.bf16.mxu0 0
      %804 = vmatpush1.bf16.msra.mxu0 0
      %805 = vmatprep.subr.bf16.mxu0 0
      %806 = vmatpush1.bf16.msra.mxu0 0
      %807 = vmatprep.subr.bf16.mxu0 0
      %808 = vmatpush1.bf16.msra.mxu0 0
      %809 = vmatprep.subr.bf16.mxu0 0
      %810 = vmatpush1.bf16.msra.mxu0 0
      %811 = vmatprep.subr.bf16.mxu0 0
      %812 = vmatpush1.bf16.msra.mxu0 0
      %813 = vmatprep.subr.bf16.mxu0 0
      %814 = vmatpush1.bf16.msra.mxu0 %v756
      %815 = vmatprep.subr.bf16.mxu0 0
      %816 = vmatpush2.bf16.msra.mxu0 0
      %817 = vmatprep.subr.bf16.mxu0 0
      %818 = vmatpush2.bf16.msra.mxu0 0
      %819 = vmatprep.subr.bf16.mxu0 0
      %820 = vmatpush2.bf16.msra.mxu0 0
      %821 = vmatprep.subr.bf16.mxu0 0
      %822 = vmatpush2.bf16.msra.mxu0 0
      %823 = vmatprep.subr.bf16.mxu0 0
      %824 = vmatpush2.bf16.msra.mxu0 0
      %825 = vmatprep.subr.bf16.mxu0 0
      %826 = vmatpush2.bf16.msra.mxu0 0
      %827 = vmatprep.subr.bf16.mxu0 0
      %828 = vmatpush2.bf16.msra.mxu0 0
      %829 = vmatprep.subr.bf16.mxu0 0
      %830 = vmatpush2.bf16.msra.mxu0 0
      %831 = vmatprep.mubr.bf16.mxu0 0
      %832 = vmatmul.mubr.bf16.gmra.mxu0 %v747
      %v833 = vpop.f32.mrf.mxu0
      %v834 = vadd.f32 0.0, %v833
      %v835 = vpop.f32.mrf.mxu0
      %v836 = vpop.f32.mrf.mxu0
      %v837 = vpop.f32.mrf.mxu0
      %838 = vdwg.mxu0
      %v841 = vcombine.low %v793, %v795
      %v843 = vadd.f32 %v723, %v841
      %v844 = vadd.f32 %v724, %v834
      %s845 = scalar_lea.vmem %s337, 8
      %v846 = vld [vmem:[%s845] sm:$0x3]
      %v847 = vld [vmem:[%s331] sm:$0xff]
      %v848 = vld [vmem:[%s331 + $0x8] sm:$0xf]
      %v851 = vunpack.c.l.b16 %v847
      %v852 = vunpack.c.h.b16 %v847
      %v853 = vunpack.c.l.b16 %v848
      %v854 = vpack.c.b16 %v851, %v851
      %v855 = vpack.c.b16 %v852, %v852
      %v856 = vpack.c.b16 %v853, %v853
      %857 = vrot.lane.b32.xlu0 %v854, 109
      %v858 = vpop.permute.xlu0 %857
      %859 = vrot.lane.b32.xlu0 %v855, 109
      %v860 = vpop.permute.xlu0 %859
      %861 = vrot.lane.b32.xlu0 %v856, 109
      %v862 = vpop.permute.xlu0 %861
      %vm863 = vcmask 891904
      %v864 = vsel %vm863, %v858, %v860
      %v865 = vsel %vm863, %v860, %v862
      %v867 = vsel %vm384, %v846, 0
      %v870 = vsel %vm388, %v864, 0
      %v873 = vsel %vm388, %v865, 0
      %v876 = vsel %vm388, %v862, 0
      %878 = vmatprep.subr.bf16.mxu0 0
      %879 = vmatpush1.bf16.msra.mxu0 0
      %880 = vmatprep.subr.bf16.mxu0 0
      %881 = vmatpush1.bf16.msra.mxu0 0
      %882 = vmatprep.subr.bf16.mxu0 0
      %883 = vmatpush1.bf16.msra.mxu0 0
      %884 = vmatprep.subr.bf16.mxu0 0
      %885 = vmatpush1.bf16.msra.mxu0 0
      %886 = vmatprep.subr.bf16.mxu0 0
      %887 = vmatpush1.bf16.msra.mxu0 0
      %888 = vmatprep.subr.bf16.mxu0 0
      %889 = vmatpush1.bf16.msra.mxu0 0
      %890 = vmatprep.subr.bf16.mxu0 0
      %891 = vmatpush1.bf16.msra.mxu0 0
      %892 = vmatprep.subr.bf16.mxu0 %v873
      %893 = vmatpush1.bf16.msra.mxu0 %v870
      %894 = vmatprep.subr.bf16.mxu0 0
      %895 = vmatpush2.bf16.msra.mxu0 0
      %896 = vmatprep.subr.bf16.mxu0 0
      %897 = vmatpush2.bf16.msra.mxu0 0
      %898 = vmatprep.subr.bf16.mxu0 0
      %899 = vmatpush2.bf16.msra.mxu0 0
      %900 = vmatprep.subr.bf16.mxu0 0
      %901 = vmatpush2.bf16.msra.mxu0 0
      %902 = vmatprep.subr.bf16.mxu0 0
      %903 = vmatpush2.bf16.msra.mxu0 0
      %904 = vmatprep.subr.bf16.mxu0 0
      %905 = vmatpush2.bf16.msra.mxu0 0
      %906 = vmatprep.subr.bf16.mxu0 0
      %907 = vmatpush2.bf16.msra.mxu0 0
      %908 = vmatprep.subr.bf16.mxu0 0
      %909 = vmatpush2.bf16.msra.mxu0 0
      %910 = vmatprep.mubr.bf16.mxu0 0
      %911 = vmatmul.mubr.bf16.gmra.mxu0 %v867
      %v912 = vpop.f32.mrf.mxu0
      %v913 = vadd.f32 0.0, %v912
      %v914 = vpop.f32.mrf.mxu0
      %v915 = vadd.f32 0.0, %v914
      %v916 = vpop.f32.mrf.mxu0
      %v917 = vpop.f32.mrf.mxu0
      %918 = vdwg.mxu0
      %919 = vmatprep.subr.bf16.mxu0 0
      %920 = vmatpush1.bf16.msra.mxu0 0
      %921 = vmatprep.subr.bf16.mxu0 0
      %922 = vmatpush1.bf16.msra.mxu0 0
      %923 = vmatprep.subr.bf16.mxu0 0
      %924 = vmatpush1.bf16.msra.mxu0 0
      %925 = vmatprep.subr.bf16.mxu0 0
      %926 = vmatpush1.bf16.msra.mxu0 0
      %927 = vmatprep.subr.bf16.mxu0 0
      %928 = vmatpush1.bf16.msra.mxu0 0
      %929 = vmatprep.subr.bf16.mxu0 0
      %930 = vmatpush1.bf16.msra.mxu0 0
      %931 = vmatprep.subr.bf16.mxu0 0
      %932 = vmatpush1.bf16.msra.mxu0 0
      %933 = vmatprep.subr.bf16.mxu0 0
      %934 = vmatpush1.bf16.msra.mxu0 %v876
      %935 = vmatprep.subr.bf16.mxu0 0
      %936 = vmatpush2.bf16.msra.mxu0 0
      %937 = vmatprep.subr.bf16.mxu0 0
      %938 = vmatpush2.bf16.msra.mxu0 0
      %939 = vmatprep.subr.bf16.mxu0 0
      %940 = vmatpush2.bf16.msra.mxu0 0
      %941 = vmatprep.subr.bf16.mxu0 0
      %942 = vmatpush2.bf16.msra.mxu0 0
      %943 = vmatprep.subr.bf16.mxu0 0
      %944 = vmatpush2.bf16.msra.mxu0 0
      %945 = vmatprep.subr.bf16.mxu0 0
      %946 = vmatpush2.bf16.msra.mxu0 0
      %947 = vmatprep.subr.bf16.mxu0 0
      %948 = vmatpush2.bf16.msra.mxu0 0
      %949 = vmatprep.subr.bf16.mxu0 0
      %950 = vmatpush2.bf16.msra.mxu0 0
      %951 = vmatprep.mubr.bf16.mxu0 0
      %952 = vmatmul.mubr.bf16.gmra.mxu0 %v867
      %v953 = vpop.f32.mrf.mxu0
      %v954 = vadd.f32 0.0, %v953
      %v955 = vpop.f32.mrf.mxu0
      %v956 = vpop.f32.mrf.mxu0
      %v957 = vpop.f32.mrf.mxu0
      %958 = vdwg.mxu0
      %v961 = vcombine.low %v913, %v915
      %v963 = vadd.f32 %v843, %v961
      %v964 = vadd.f32 %v844, %v954
      %s965 = scalar_lea.vmem %s337, 10
      %v966 = vld [vmem:[%s965] sm:$0x3]
      %v967 = vld [vmem:[%s331] sm:$0xff]
      %v968 = vld [vmem:[%s331 + $0x8] sm:$0xf]
      %v971 = vunpack.c.l.b16 %v967
      %v972 = vunpack.c.h.b16 %v967
      %v973 = vunpack.c.l.b16 %v968
      %v974 = vpack.c.b16 %v971, %v971
      %v975 = vpack.c.b16 %v972, %v972
      %v976 = vpack.c.b16 %v973, %v973
      %977 = vrot.lane.b32.xlu0 %v974, 108
      %v978 = vpop.permute.xlu0 %977
      %979 = vrot.lane.b32.xlu0 %v975, 108
      %v980 = vpop.permute.xlu0 %979
      %981 = vrot.lane.b32.xlu0 %v976, 108
      %v982 = vpop.permute.xlu0 %981
      %vm983 = vcmask 883712
      %v984 = vsel %vm983, %v978, %v980
      %v985 = vsel %vm983, %v980, %v982
      %v987 = vsel %vm384, %v966, 0
      %v990 = vsel %vm388, %v984, 0
      %v993 = vsel %vm388, %v985, 0
      %v996 = vsel %vm388, %v982, 0
      %998 = vmatprep.subr.bf16.mxu0 0
      %999 = vmatpush1.bf16.msra.mxu0 0
      %1000 = vmatprep.subr.bf16.mxu0 0
      %1001 = vmatpush1.bf16.msra.mxu0 0
      %1002 = vmatprep.subr.bf16.mxu0 0
      %1003 = vmatpush1.bf16.msra.mxu0 0
      %1004 = vmatprep.subr.bf16.mxu0 0
      %1005 = vmatpush1.bf16.msra.mxu0 0
      %1006 = vmatprep.subr.bf16.mxu0 0
      %1007 = vmatpush1.bf16.msra.mxu0 0
      %1008 = vmatprep.subr.bf16.mxu0 0
      %1009 = vmatpush1.bf16.msra.mxu0 0
      %1010 = vmatprep.subr.bf16.mxu0 0
      %1011 = vmatpush1.bf16.msra.mxu0 0
      %1012 = vmatprep.subr.bf16.mxu0 %v993
      %1013 = vmatpush1.bf16.msra.mxu0 %v990
      %1014 = vmatprep.subr.bf16.mxu0 0
      %1015 = vmatpush2.bf16.msra.mxu0 0
      %1016 = vmatprep.subr.bf16.mxu0 0
      %1017 = vmatpush2.bf16.msra.mxu0 0
      %1018 = vmatprep.subr.bf16.mxu0 0
      %1019 = vmatpush2.bf16.msra.mxu0 0
      %1020 = vmatprep.subr.bf16.mxu0 0
      %1021 = vmatpush2.bf16.msra.mxu0 0
      %1022 = vmatprep.subr.bf16.mxu0 0
      %1023 = vmatpush2.bf16.msra.mxu0 0
      %1024 = vmatprep.subr.bf16.mxu0 0
      %1025 = vmatpush2.bf16.msra.mxu0 0
      %1026 = vmatprep.subr.bf16.mxu0 0
      %1027 = vmatpush2.bf16.msra.mxu0 0
      %1028 = vmatprep.subr.bf16.mxu0 0
      %1029 = vmatpush2.bf16.msra.mxu0 0
      %1030 = vmatprep.mubr.bf16.mxu0 0
      %1031 = vmatmul.mubr.bf16.gmra.mxu0 %v987
      %v1032 = vpop.f32.mrf.mxu0
      %v1033 = vadd.f32 0.0, %v1032
      %v1034 = vpop.f32.mrf.mxu0
      %v1035 = vadd.f32 0.0, %v1034
      %v1036 = vpop.f32.mrf.mxu0
      %v1037 = vpop.f32.mrf.mxu0
      %1038 = vdwg.mxu0
      %1039 = vmatprep.subr.bf16.mxu0 0
      %1040 = vmatpush1.bf16.msra.mxu0 0
      %1041 = vmatprep.subr.bf16.mxu0 0
      %1042 = vmatpush1.bf16.msra.mxu0 0
      %1043 = vmatprep.subr.bf16.mxu0 0
      %1044 = vmatpush1.bf16.msra.mxu0 0
      %1045 = vmatprep.subr.bf16.mxu0 0
      %1046 = vmatpush1.bf16.msra.mxu0 0
      %1047 = vmatprep.subr.bf16.mxu0 0
      %1048 = vmatpush1.bf16.msra.mxu0 0
      %1049 = vmatprep.subr.bf16.mxu0 0
      %1050 = vmatpush1.bf16.msra.mxu0 0
      %1051 = vmatprep.subr.bf16.mxu0 0
      %1052 = vmatpush1.bf16.msra.mxu0 0
      %1053 = vmatprep.subr.bf16.mxu0 0
      %1054 = vmatpush1.bf16.msra.mxu0 %v996
      %1055 = vmatprep.subr.bf16.mxu0 0
      %1056 = vmatpush2.bf16.msra.mxu0 0
      %1057 = vmatprep.subr.bf16.mxu0 0
      %1058 = vmatpush2.bf16.msra.mxu0 0
      %1059 = vmatprep.subr.bf16.mxu0 0
      %1060 = vmatpush2.bf16.msra.mxu0 0
      %1061 = vmatprep.subr.bf16.mxu0 0
      %1062 = vmatpush2.bf16.msra.mxu0 0
      %1063 = vmatprep.subr.bf16.mxu0 0
      %1064 = vmatpush2.bf16.msra.mxu0 0
      %1065 = vmatprep.subr.bf16.mxu0 0
      %1066 = vmatpush2.bf16.msra.mxu0 0
      %1067 = vmatprep.subr.bf16.mxu0 0
      %1068 = vmatpush2.bf16.msra.mxu0 0
      %1069 = vmatprep.subr.bf16.mxu0 0
      %1070 = vmatpush2.bf16.msra.mxu0 0
      %1071 = vmatprep.mubr.bf16.mxu0 0
      %1072 = vmatmul.mubr.bf16.gmra.mxu0 %v987
      %v1073 = vpop.f32.mrf.mxu0
      %v1074 = vadd.f32 0.0, %v1073
      %v1075 = vpop.f32.mrf.mxu0
      %v1076 = vpop.f32.mrf.mxu0
      %v1077 = vpop.f32.mrf.mxu0
      %1078 = vdwg.mxu0
      %v1081 = vcombine.low %v1033, %v1035
      %v1083 = vadd.f32 %v963, %v1081
      %v1084 = vadd.f32 %v964, %v1074
      %s1085 = scalar_lea.vmem %s337, 12
      %v1086 = vld [vmem:[%s1085] sm:$0x3]
      %v1087 = vld [vmem:[%s331] sm:$0xff]
      %v1088 = vld [vmem:[%s331 + $0x8] sm:$0xf]
      %v1091 = vunpack.c.l.b16 %v1087
      %v1092 = vunpack.c.h.b16 %v1087
      %v1093 = vunpack.c.l.b16 %v1088
      %v1094 = vpack.c.b16 %v1091, %v1091
      %v1095 = vpack.c.b16 %v1092, %v1092
      %v1096 = vpack.c.b16 %v1093, %v1093
      %1097 = vrot.lane.b32.xlu0 %v1094, 92
      %v1098 = vpop.permute.xlu0 %1097
      %1099 = vrot.lane.b32.xlu0 %v1095, 92
      %v1100 = vpop.permute.xlu0 %1099
      %1101 = vrot.lane.b32.xlu0 %v1096, 92
      %v1102 = vpop.permute.xlu0 %1101
      %vm1103 = vcmask 752640
      %v1104 = vsel %vm1103, %v1098, %v1100
      %v1105 = vsel %vm1103, %v1100, %v1102
      %v1107 = vsel %vm384, %v1086, 0
      %v1110 = vsel %vm388, %v1104, 0
      %v1113 = vsel %vm388, %v1105, 0
      %v1116 = vsel %vm388, %v1102, 0
      %1118 = vmatprep.subr.bf16.mxu0 0
      %1119 = vmatpush1.bf16.msra.mxu0 0
      %1120 = vmatprep.subr.bf16.mxu0 0
      %1121 = vmatpush1.bf16.msra.mxu0 0
      %1122 = vmatprep.subr.bf16.mxu0 0
      %1123 = vmatpush1.bf16.msra.mxu0 0
      %1124 = vmatprep.subr.bf16.mxu0 0
      %1125 = vmatpush1.bf16.msra.mxu0 0
      %1126 = vmatprep.subr.bf16.mxu0 0
      %1127 = vmatpush1.bf16.msra.mxu0 0
      %1128 = vmatprep.subr.bf16.mxu0 0
      %1129 = vmatpush1.bf16.msra.mxu0 0
      %1130 = vmatprep.subr.bf16.mxu0 0
      %1131 = vmatpush1.bf16.msra.mxu0 0
      %1132 = vmatprep.subr.bf16.mxu0 %v1113
      %1133 = vmatpush1.bf16.msra.mxu0 %v1110
      %1134 = vmatprep.subr.bf16.mxu0 0
      %1135 = vmatpush2.bf16.msra.mxu0 0
      %1136 = vmatprep.subr.bf16.mxu0 0
      %1137 = vmatpush2.bf16.msra.mxu0 0
      %1138 = vmatprep.subr.bf16.mxu0 0
      %1139 = vmatpush2.bf16.msra.mxu0 0
      %1140 = vmatprep.subr.bf16.mxu0 0
      %1141 = vmatpush2.bf16.msra.mxu0 0
      %1142 = vmatprep.subr.bf16.mxu0 0
      %1143 = vmatpush2.bf16.msra.mxu0 0
      %1144 = vmatprep.subr.bf16.mxu0 0
      %1145 = vmatpush2.bf16.msra.mxu0 0
      %1146 = vmatprep.subr.bf16.mxu0 0
      %1147 = vmatpush2.bf16.msra.mxu0 0
      %1148 = vmatprep.subr.bf16.mxu0 0
      %1149 = vmatpush2.bf16.msra.mxu0 0
      %1150 = vmatprep.mubr.bf16.mxu0 0
      %1151 = vmatmul.mubr.bf16.gmra.mxu0 %v1107
      %v1152 = vpop.f32.mrf.mxu0
      %v1153 = vadd.f32 0.0, %v1152
      %v1154 = vpop.f32.mrf.mxu0
      %v1155 = vadd.f32 0.0, %v1154
      %v1156 = vpop.f32.mrf.mxu0
      %v1157 = vpop.f32.mrf.mxu0
      %1158 = vdwg.mxu0
      %1159 = vmatprep.subr.bf16.mxu0 0
      %1160 = vmatpush1.bf16.msra.mxu0 0
      %1161 = vmatprep.subr.bf16.mxu0 0
      %1162 = vmatpush1.bf16.msra.mxu0 0
      %1163 = vmatprep.subr.bf16.mxu0 0
      %1164 = vmatpush1.bf16.msra.mxu0 0
      %1165 = vmatprep.subr.bf16.mxu0 0
      %1166 = vmatpush1.bf16.msra.mxu0 0
      %1167 = vmatprep.subr.bf16.mxu0 0
      %1168 = vmatpush1.bf16.msra.mxu0 0
      %1169 = vmatprep.subr.bf16.mxu0 0
      %1170 = vmatpush1.bf16.msra.mxu0 0
      %1171 = vmatprep.subr.bf16.mxu0 0
      %1172 = vmatpush1.bf16.msra.mxu0 0
      %1173 = vmatprep.subr.bf16.mxu0 0
      %1174 = vmatpush1.bf16.msra.mxu0 %v1116
      %1175 = vmatprep.subr.bf16.mxu0 0
      %1176 = vmatpush2.bf16.msra.mxu0 0
      %1177 = vmatprep.subr.bf16.mxu0 0
      %1178 = vmatpush2.bf16.msra.mxu0 0
      %1179 = vmatprep.subr.bf16.mxu0 0
      %1180 = vmatpush2.bf16.msra.mxu0 0
      %1181 = vmatprep.subr.bf16.mxu0 0
      %1182 = vmatpush2.bf16.msra.mxu0 0
      %1183 = vmatprep.subr.bf16.mxu0 0
      %1184 = vmatpush2.bf16.msra.mxu0 0
      %1185 = vmatprep.subr.bf16.mxu0 0
      %1186 = vmatpush2.bf16.msra.mxu0 0
      %1187 = vmatprep.subr.bf16.mxu0 0
      %1188 = vmatpush2.bf16.msra.mxu0 0
      %1189 = vmatprep.subr.bf16.mxu0 0
      %1190 = vmatpush2.bf16.msra.mxu0 0
      %1191 = vmatprep.mubr.bf16.mxu0 0
      %1192 = vmatmul.mubr.bf16.gmra.mxu0 %v1107
      %v1193 = vpop.f32.mrf.mxu0
      %v1194 = vadd.f32 0.0, %v1193
      %v1195 = vpop.f32.mrf.mxu0
      %v1196 = vpop.f32.mrf.mxu0
      %v1197 = vpop.f32.mrf.mxu0
      %1198 = vdwg.mxu0
      %v1201 = vcombine.low %v1153, %v1155
      %v1203 = vadd.f32 %v1083, %v1201
      %v1204 = vadd.f32 %v1084, %v1194
      %s1205 = scalar_lea.vmem %s337, 14
      %v1206 = vld [vmem:[%s1205] sm:$0x3]
      %v1207 = vld [vmem:[%s331] sm:$0xff]
      %v1208 = vld [vmem:[%s331 + $0x8] sm:$0xf]
      %v1211 = vunpack.c.l.b16 %v1207
      %v1212 = vunpack.c.h.b16 %v1207
      %v1213 = vunpack.c.l.b16 %v1208
      %v1214 = vpack.c.b16 %v1211, %v1211
      %v1215 = vpack.c.b16 %v1212, %v1212
      %v1216 = vpack.c.b16 %v1213, %v1213
      %1217 = vrot.lane.b32.xlu0 %v1214, 91
      %v1218 = vpop.permute.xlu0 %1217
      %1219 = vrot.lane.b32.xlu0 %v1215, 91
      %v1220 = vpop.permute.xlu0 %1219
      %1221 = vrot.lane.b32.xlu0 %v1216, 91
      %v1222 = vpop.permute.xlu0 %1221
      %vm1223 = vcmask 744448
      %v1224 = vsel %vm1223, %v1218, %v1220
      %v1225 = vsel %vm1223, %v1220, %v1222
      %v1227 = vsel %vm384, %v1206, 0
      %v1230 = vsel %vm388, %v1224, 0
      %v1233 = vsel %vm388, %v1225, 0
      %v1236 = vsel %vm388, %v1222, 0
      %1238 = vmatprep.subr.bf16.mxu0 0
      %1239 = vmatpush1.bf16.msra.mxu0 0
      %1240 = vmatprep.subr.bf16.mxu0 0
      %1241 = vmatpush1.bf16.msra.mxu0 0
      %1242 = vmatprep.subr.bf16.mxu0 0
      %1243 = vmatpush1.bf16.msra.mxu0 0
      %1244 = vmatprep.subr.bf16.mxu0 0
      %1245 = vmatpush1.bf16.msra.mxu0 0
      %1246 = vmatprep.subr.bf16.mxu0 0
      %1247 = vmatpush1.bf16.msra.mxu0 0
      %1248 = vmatprep.subr.bf16.mxu0 0
      %1249 = vmatpush1.bf16.msra.mxu0 0
      %1250 = vmatprep.subr.bf16.mxu0 0
      %1251 = vmatpush1.bf16.msra.mxu0 0
      %1252 = vmatprep.subr.bf16.mxu0 %v1233
      %1253 = vmatpush1.bf16.msra.mxu0 %v1230
      %1254 = vmatprep.subr.bf16.mxu0 0
      %1255 = vmatpush2.bf16.msra.mxu0 0
      %1256 = vmatprep.subr.bf16.mxu0 0
      %1257 = vmatpush2.bf16.msra.mxu0 0
      %1258 = vmatprep.subr.bf16.mxu0 0
      %1259 = vmatpush2.bf16.msra.mxu0 0
      %1260 = vmatprep.subr.bf16.mxu0 0
      %1261 = vmatpush2.bf16.msra.mxu0 0
      %1262 = vmatprep.subr.bf16.mxu0 0
      %1263 = vmatpush2.bf16.msra.mxu0 0
      %1264 = vmatprep.subr.bf16.mxu0 0
      %1265 = vmatpush2.bf16.msra.mxu0 0
      %1266 = vmatprep.subr.bf16.mxu0 0
      %1267 = vmatpush2.bf16.msra.mxu0 0
      %1268 = vmatprep.subr.bf16.mxu0 0
      %1269 = vmatpush2.bf16.msra.mxu0 0
      %1270 = vmatprep.mubr.bf16.mxu0 0
      %1271 = vmatmul.mubr.bf16.gmra.mxu0 %v1227
      %v1272 = vpop.f32.mrf.mxu0
      %v1273 = vadd.f32 0.0, %v1272
      %v1274 = vpop.f32.mrf.mxu0
      %v1275 = vadd.f32 0.0, %v1274
      %v1276 = vpop.f32.mrf.mxu0
      %v1277 = vpop.f32.mrf.mxu0
      %1278 = vdwg.mxu0
      %1279 = vmatprep.subr.bf16.mxu0 0
      %1280 = vmatpush1.bf16.msra.mxu0 0
      %1281 = vmatprep.subr.bf16.mxu0 0
      %1282 = vmatpush1.bf16.msra.mxu0 0
      %1283 = vmatprep.subr.bf16.mxu0 0
      %1284 = vmatpush1.bf16.msra.mxu0 0
      %1285 = vmatprep.subr.bf16.mxu0 0
      %1286 = vmatpush1.bf16.msra.mxu0 0
      %1287 = vmatprep.subr.bf16.mxu0 0
      %1288 = vmatpush1.bf16.msra.mxu0 0
      %1289 = vmatprep.subr.bf16.mxu0 0
      %1290 = vmatpush1.bf16.msra.mxu0 0
      %1291 = vmatprep.subr.bf16.mxu0 0
      %1292 = vmatpush1.bf16.msra.mxu0 0
      %1293 = vmatprep.subr.bf16.mxu0 0
      %1294 = vmatpush1.bf16.msra.mxu0 %v1236
      %1295 = vmatprep.subr.bf16.mxu0 0
      %1296 = vmatpush2.bf16.msra.mxu0 0
      %1297 = vmatprep.subr.bf16.mxu0 0
      %1298 = vmatpush2.bf16.msra.mxu0 0
      %1299 = vmatprep.subr.bf16.mxu0 0
      %1300 = vmatpush2.bf16.msra.mxu0 0
      %1301 = vmatprep.subr.bf16.mxu0 0
      %1302 = vmatpush2.bf16.msra.mxu0 0
      %1303 = vmatprep.subr.bf16.mxu0 0
      %1304 = vmatpush2.bf16.msra.mxu0 0
      %1305 = vmatprep.subr.bf16.mxu0 0
      %1306 = vmatpush2.bf16.msra.mxu0 0
      %1307 = vmatprep.subr.bf16.mxu0 0
      %1308 = vmatpush2.bf16.msra.mxu0 0
      %1309 = vmatprep.subr.bf16.mxu0 0
      %1310 = vmatpush2.bf16.msra.mxu0 0
      %1311 = vmatprep.mubr.bf16.mxu0 0
      %1312 = vmatmul.mubr.bf16.gmra.mxu0 %v1227
      %v1313 = vpop.f32.mrf.mxu0
      %v1314 = vadd.f32 0.0, %v1313
      %v1315 = vpop.f32.mrf.mxu0
      %v1316 = vpop.f32.mrf.mxu0
      %v1317 = vpop.f32.mrf.mxu0
      %1318 = vdwg.mxu0
      %v1321 = vcombine.low %v1273, %v1275
      %v1323 = vadd.f32 %v1203, %v1321
      %v1324 = vadd.f32 %v1204, %v1314
      %s1325 = scalar_lea.vmem %s337, 16
      %v1326 = vld [vmem:[%s1325] sm:$0x3]
      %v1327 = vld [vmem:[%s331] sm:$0xff]
      %v1328 = vld [vmem:[%s331 + $0x8] sm:$0xf]
      %v1331 = vunpack.c.l.b16 %v1327
      %v1332 = vunpack.c.h.b16 %v1327
      %v1333 = vunpack.c.l.b16 %v1328
      %v1334 = vpack.c.b16 %v1331, %v1331
      %v1335 = vpack.c.b16 %v1332, %v1332
      %v1336 = vpack.c.b16 %v1333, %v1333
      %1337 = vrot.lane.b32.xlu0 %v1334, 90
      %v1338 = vpop.permute.xlu0 %1337
      %1339 = vrot.lane.b32.xlu0 %v1335, 90
      %v1340 = vpop.permute.xlu0 %1339
      %1341 = vrot.lane.b32.xlu0 %v1336, 90
      %v1342 = vpop.permute.xlu0 %1341
      %vm1343 = vcmask 736256
      %v1344 = vsel %vm1343, %v1338, %v1340
      %v1345 = vsel %vm1343, %v1340, %v1342
      %v1347 = vsel %vm384, %v1326, 0
      %v1350 = vsel %vm388, %v1344, 0
      %v1353 = vsel %vm388, %v1345, 0
      %v1356 = vsel %vm388, %v1342, 0
      %1358 = vmatprep.subr.bf16.mxu0 0
      %1359 = vmatpush1.bf16.msra.mxu0 0
      %1360 = vmatprep.subr.bf16.mxu0 0
      %1361 = vmatpush1.bf16.msra.mxu0 0
      %1362 = vmatprep.subr.bf16.mxu0 0
      %1363 = vmatpush1.bf16.msra.mxu0 0
      %1364 = vmatprep.subr.bf16.mxu0 0
      %1365 = vmatpush1.bf16.msra.mxu0 0
      %1366 = vmatprep.subr.bf16.mxu0 0
      %1367 = vmatpush1.bf16.msra.mxu0 0
      %1368 = vmatprep.subr.bf16.mxu0 0
      %1369 = vmatpush1.bf16.msra.mxu0 0
      %1370 = vmatprep.subr.bf16.mxu0 0
      %1371 = vmatpush1.bf16.msra.mxu0 0
      %1372 = vmatprep.subr.bf16.mxu0 %v1353
      %1373 = vmatpush1.bf16.msra.mxu0 %v1350
      %1374 = vmatprep.subr.bf16.mxu0 0
      %1375 = vmatpush2.bf16.msra.mxu0 0
      %1376 = vmatprep.subr.bf16.mxu0 0
      %1377 = vmatpush2.bf16.msra.mxu0 0
      %1378 = vmatprep.subr.bf16.mxu0 0
      %1379 = vmatpush2.bf16.msra.mxu0 0
      %1380 = vmatprep.subr.bf16.mxu0 0
      %1381 = vmatpush2.bf16.msra.mxu0 0
      %1382 = vmatprep.subr.bf16.mxu0 0
      %1383 = vmatpush2.bf16.msra.mxu0 0
      %1384 = vmatprep.subr.bf16.mxu0 0
      %1385 = vmatpush2.bf16.msra.mxu0 0
      %1386 = vmatprep.subr.bf16.mxu0 0
      %1387 = vmatpush2.bf16.msra.mxu0 0
      %1388 = vmatprep.subr.bf16.mxu0 0
      %1389 = vmatpush2.bf16.msra.mxu0 0
      %1390 = vmatprep.mubr.bf16.mxu0 0
      %1391 = vmatmul.mubr.bf16.gmra.mxu0 %v1347
      %v1392 = vpop.f32.mrf.mxu0
      %v1393 = vadd.f32 0.0, %v1392
      %v1394 = vpop.f32.mrf.mxu0
      %v1395 = vadd.f32 0.0, %v1394
      %v1396 = vpop.f32.mrf.mxu0
      %v1397 = vpop.f32.mrf.mxu0
      %1398 = vdwg.mxu0
      %1399 = vmatprep.subr.bf16.mxu0 0
      %1400 = vmatpush1.bf16.msra.mxu0 0
      %1401 = vmatprep.subr.bf16.mxu0 0
      %1402 = vmatpush1.bf16.msra.mxu0 0
      %1403 = vmatprep.subr.bf16.mxu0 0
      %1404 = vmatpush1.bf16.msra.mxu0 0
      %1405 = vmatprep.subr.bf16.mxu0 0
      %1406 = vmatpush1.bf16.msra.mxu0 0
      %1407 = vmatprep.subr.bf16.mxu0 0
      %1408 = vmatpush1.bf16.msra.mxu0 0
      %1409 = vmatprep.subr.bf16.mxu0 0
      %1410 = vmatpush1.bf16.msra.mxu0 0
      %1411 = vmatprep.subr.bf16.mxu0 0
      %1412 = vmatpush1.bf16.msra.mxu0 0
      %1413 = vmatprep.subr.bf16.mxu0 0
      %1414 = vmatpush1.bf16.msra.mxu0 %v1356
      %1415 = vmatprep.subr.bf16.mxu0 0
      %1416 = vmatpush2.bf16.msra.mxu0 0
      %1417 = vmatprep.subr.bf16.mxu0 0
      %1418 = vmatpush2.bf16.msra.mxu0 0
      %1419 = vmatprep.subr.bf16.mxu0 0
      %1420 = vmatpush2.bf16.msra.mxu0 0
      %1421 = vmatprep.subr.bf16.mxu0 0
      %1422 = vmatpush2.bf16.msra.mxu0 0
      %1423 = vmatprep.subr.bf16.mxu0 0
      %1424 = vmatpush2.bf16.msra.mxu0 0
      %1425 = vmatprep.subr.bf16.mxu0 0
      %1426 = vmatpush2.bf16.msra.mxu0 0
      %1427 = vmatprep.subr.bf16.mxu0 0
      %1428 = vmatpush2.bf16.msra.mxu0 0
      %1429 = vmatprep.subr.bf16.mxu0 0
      %1430 = vmatpush2.bf16.msra.mxu0 0
      %1431 = vmatprep.mubr.bf16.mxu0 0
      %1432 = vmatmul.mubr.bf16.gmra.mxu0 %v1347
      %v1433 = vpop.f32.mrf.mxu0
      %v1434 = vadd.f32 0.0, %v1433
      %v1435 = vpop.f32.mrf.mxu0
      %v1436 = vpop.f32.mrf.mxu0
      %v1437 = vpop.f32.mrf.mxu0
      %1438 = vdwg.mxu0
      %v1441 = vcombine.low %v1393, %v1395
      %v1443 = vadd.f32 %v1323, %v1441
      %v1444 = vadd.f32 %v1324, %v1434
      %1445 = vst [vmem:[#allocation2] sm:$0xff] %v1443
      %vm1446 = vcmask 257024
      %1447 = vst.msk [vmem:[#allocation2 + $0x8] sm:$0xf] %vm1446, %v1444
      %p1448 = scmp.eq.s32.totalorder %s25, 2
      // Predicated region
      $region41: #{unet3d_decoder_forward.6} parent=35 // pred_check
        %p1449 = pneg %p1448
      $region42: #{unet3d_decoder_forward.6} parent=35 // pred_check_branch
        %1451 = sbr.rel (%p1449) target = $region44
      $region43: #{unet3d_decoder_forward.6} parent=35 // pred_region
        %v1452 = vld [vmem:[%s2] sm:$0xf]
        %1454 = vset.pattern.permute.xlu0 0
        %1455 = vperm.xlu0 %1454, %v1452
        %v1456 = vpop.permute.xlu0 %1455
        %v1458 = vunpack.c.l.s4 839922192
        %v1459 = vunpack.c.0.s8 %v1458
        %v1460 = vlaneseq
        %v1461 = vshrl.u32 %v1460, 7
        %v1462 = vsub.s32 %v1459, %v1461
        %v1463 = vrot.slane %v1456, %v1462
        %v1465 = vadd.f32 %v1443, %v1463
        %v1466 = vadd.f32 %v1444, %v1463
        %v1468 = vcombine.high %v1465, %v1465
        %v1470 = vpack.c.bf16 %v1465, %v1465
        %v1471 = vpack.c.bf16 %v1468, %v1468
        %v1472 = vpack.c.bf16 %v1466, %v1466
        %v1476 = vcombine.low %v1470, %v1471
        %v1478 = vunpack.c.l.s4 1983009808
        %v1479 = vunpack.c.0.s8 %v1478
        %v1480 = vlaneseq
        %v1481 = vshrl.u32 %v1480, 7
        %v1482 = vsub.s32 %v1479, %v1481
        %v1483 = vrot.slane %v1476, %v1482
        %v1485 = vunpack.c.l.s4 1983009808
        %v1486 = vunpack.c.0.s8 %v1485
        %v1487 = vlaneseq
        %v1488 = vshrl.u32 %v1487, 7
        %v1489 = vsub.s32 %v1486, %v1488
        %v1490 = vrot.slane %v1472, %v1489
        %v1491 = vcombine.low %v1483, %v1490
        %vm1493 = vcmask 1041408
        %vm1494 = vcmask 1043458
        %vm1495 = vmor %vm1494, %vm1493
        %vm1496 = vcmask 259076
        %vm1497 = vmor %vm1496, %vm1495
        %1498 = vst.msk [vmem:[%s346] sm:$0x3f] %vm1497, %v1491
        %v1499 = vld [vmem:[%s3] sm:$0x7]
        %v1501 = vlaneseq
        %v1502 = vshrl.u32 %v1501, 7
        %v1503 = vsub.s32 0, %v1502
        %v1504 = vrot.slane %v1499, %v1503
        %v1505 = vlaneseq
        %v1506 = vshrl.u32 %v1505, 7
        %v1507 = vsub.s32 1, %v1506
        %v1508 = vrot.slane %v1499, %v1507
        %v1509 = vlaneseq
        %v1510 = vshrl.u32 %v1509, 7
        %v1511 = vsub.s32 2, %v1510
        %v1512 = vrot.slane %v1499, %v1511
        %v1514 = vcombine.low %v1504, %v1508
        %v1516 = vmul.f32 %v1465, %v1514
        %v1517 = vmul.f32 %v1466, %v1512
        %v1519 = vcombine.high %v1516, %v1516
        %v1521 = vsel %vm388, %v1516, 0.0
        %v1522 = vsel %vm388, %v1519, 0.0
        %v1523 = vadd.f32 %v1521, %v1522
        %v1524 = vsel %vm1446, %v1517, 0.0
        %v1525 = vadd.f32 %v1523, %v1524
        %1526 = vadd.xlane.f32.xlu0 %v1525
        %v1527 = vpop.xlane.xlu0 %1526
        %vm1528 = vcmask 3072
        %1529 = vst.msk [vmem:[%s354] sm:$0xf] %vm1528, %v1527
        %v1530 = vmul.f32 %v1465, %v1465
        %v1531 = vmul.f32 %v1466, %v1466
        %v1532 = vmul.f32 %v1530, %v1514
        %v1533 = vmul.f32 %v1531, %v1512
        %v1535 = vcombine.high %v1532, %v1532
        %v1537 = vsel %vm388, %v1532, 0.0
        %v1538 = vsel %vm388, %v1535, 0.0
        %v1539 = vadd.f32 %v1537, %v1538
        %v1540 = vsel %vm1446, %v1533, 0.0
        %v1541 = vadd.f32 %v1539, %v1540
        %1542 = vadd.xlane.f32.xlu0 %v1541
        %v1543 = vpop.xlane.xlu0 %1542
        %1544 = vst.msk [vmem:[%s362] sm:$0xf] %vm1528, %v1543
      $region44: #{unet3d_decoder_forward.6} parent=35 // pred_fallthru
        _
      %p1545 = scmp.lt.s32.totalorder %s23, 1
      %s1546 = scalar_select %p1545, %s23, 1
      %p1547 = scmp.lt.s32.totalorder %s24, 15
      %s1548 = scalar_select %p1547, %s24, 15
      %s1549 = smul.addr %s1548, 3
      %s1550 = smul.addr %s1546, 48
      %s1551 = sadd.s32 %s1549, %s1550
      %s1552 = smul.addr %s1551, 2
      %s1553 = scalar_lea.vmem %s4, %s1552
      %p1554 = scmp.lt.s32.totalorder %s23, 1
      %s1555 = scalar_select %p1554, %s23, 1
      %p1556 = scmp.lt.s32.totalorder %s24, 15
      %s1557 = scalar_select %p1556, %s24, 15
      %s1558 = smul.addr %s1555, 16
      %s1559 = sadd.s32 %s1557, %s1558
      %s1560 = smul.addr %s1559, 4
      %s1561 = scalar_lea.vmem %s5, %s1560
      %p1562 = scmp.lt.s32.totalorder %s23, 1
      %s1563 = scalar_select %p1562, %s23, 1
      %p1564 = scmp.lt.s32.totalorder %s24, 15
      %s1565 = scalar_select %p1564, %s24, 15
      %s1566 = smul.addr %s1563, 16
      %s1567 = sadd.s32 %s1565, %s1566
      %s1568 = smul.addr %s1567, 4
      %s1569 = scalar_lea.vmem %s6, %s1568
      // Predicated region
      $region45: #{unet3d_decoder_forward.6} parent=35 // pred_check
        %p1570 = pneg %p155
      $region46: #{unet3d_decoder_forward.6} parent=35 // pred_check_branch
        %1572 = sbr.rel (%p1570) target = $region48
      $region47: #{unet3d_decoder_forward.6} parent=35 // pred_region
        _
      $region48: #{unet3d_decoder_forward.6} parent=35 // pred_fallthru
        _
      // Predicated region
      $region49: #{unet3d_decoder_forward.6} parent=35 // pred_check
        %p1573 = pneg %p183
      $region50: #{unet3d_decoder_forward.6} parent=35 // pred_check_branch
        %1575 = sbr.rel (%p1573) target = $region52
      $region51: #{unet3d_decoder_forward.6} parent=35 // pred_region
        _
      $region52: #{unet3d_decoder_forward.6} parent=35 // pred_fallthru
        _
      // Predicated region
      $region53: #{unet3d_decoder_forward.6} parent=35 // pred_check
        %p1576 = pneg %p211
      $region54: #{unet3d_decoder_forward.6} parent=35 // pred_check_branch
        %1578 = sbr.rel (%p1576) target = $region56
      $region55: #{unet3d_decoder_forward.6} parent=35 // pred_region
        _
      $region56: #{unet3d_decoder_forward.6} parent=35 // pred_fallthru
        _
    $region36: #{unet3d_decoder_forward.6} parent=5 // pred_fallthru
      _
    %p1579 = scmp.le.s32.totalorder 2, %s13
    // Predicated region
    $region57: #{unet3d_decoder_forward.6} parent=5 // pred_check
      %p1580 = pneg %p1579
    $region58: #{unet3d_decoder_forward.6} parent=5 // pred_check_branch
      %1582 = sbr.rel (%p1580) target = $region60
    $region59: #{unet3d_decoder_forward.6} parent=5 // pred_region
      %s1583 = ssub.s32 %s13, 2
      // Predicated region
      $region61: #{unet3d_decoder_forward.6} parent=59 // pred_check
        %p1584 = pneg %p161
      $region62: #{unet3d_decoder_forward.6} parent=59 // pred_check_branch
        %1586 = sbr.rel (%p1584) target = $region64
      $region63: #{unet3d_decoder_forward.6} parent=59 // pred_region
        %p1587 = scmp.lt.s32.totalorder %s26, 1
        %s1588 = scalar_select %p1587, %s26, 1
        %p1589 = scmp.lt.s32.totalorder %s27, 15
        %s1590 = scalar_select %p1589, %s27, 15
        %s1591 = smul.addr %s1590, 3
        %s1592 = smul.addr %s1588, 48
        %s1593 = sadd.s32 %s1591, %s1592
        %s1594 = smul.addr %s1593, 2
        %s1595 = scalar_lea.vmem %s4, %s1594
      $region64: #{unet3d_decoder_forward.6} parent=59 // pred_fallthru
        _
      // Predicated region
      $region65: #{unet3d_decoder_forward.6} parent=59 // pred_check
        %p1596 = pneg %p189
      $region66: #{unet3d_decoder_forward.6} parent=59 // pred_check_branch
        %1598 = sbr.rel (%p1596) target = $region68
      $region67: #{unet3d_decoder_forward.6} parent=59 // pred_region
        %p1599 = scmp.lt.s32.totalorder %s26, 1
        %s1600 = scalar_select %p1599, %s26, 1
        %p1601 = scmp.lt.s32.totalorder %s27, 15
        %s1602 = scalar_select %p1601, %s27, 15
        %s1603 = smul.addr %s1600, 16
        %s1604 = sadd.s32 %s1602, %s1603
        %s1605 = smul.addr %s1604, 4
        %s1606 = scalar_lea.vmem %s5, %s1605
      $region68: #{unet3d_decoder_forward.6} parent=59 // pred_fallthru
        _
      // Predicated region
      $region69: #{unet3d_decoder_forward.6} parent=59 // pred_check
        %p1607 = pneg %p217
      $region70: #{unet3d_decoder_forward.6} parent=59 // pred_check_branch
        %1609 = sbr.rel (%p1607) target = $region72
      $region71: #{unet3d_decoder_forward.6} parent=59 // pred_region
        %p1610 = scmp.lt.s32.totalorder %s26, 1
        %s1611 = scalar_select %p1610, %s26, 1
        %p1612 = scmp.lt.s32.totalorder %s27, 15
        %s1613 = scalar_select %p1612, %s27, 15
        %s1614 = smul.addr %s1611, 16
        %s1615 = sadd.s32 %s1613, %s1614
        %s1616 = smul.addr %s1615, 4
        %s1617 = scalar_lea.vmem %s6, %s1616
      $region72: #{unet3d_decoder_forward.6} parent=59 // pred_fallthru
        _
    $region60: #{unet3d_decoder_forward.6} parent=5 // pred_fallthru
      _
  $region6: #{unet3d_decoder_forward.6} parent=0 // loop_footer
    %s17 = sadd.s32 1, %s13
  $region7: #{unet3d_decoder_forward.6} parent=0 // loop_footer_branch
    %12 = sbr.rel target = $region3
  $region8: #{unet3d_decoder_forward.6} parent=0 // loop_exit
    _

// kernel: unet3d_decoder_forward.9
$region0: #{unet3d_decoder_forward.9}
  #allocation0 [shape = 'u32[]', space=smem, size = 0x4, offset = 0x4, fixed_abs, tag = 'smem constant byte address 0x4 - core index']
  #allocation1 [shape = 'u32[144,128]{1,0:T(1,128)}', space=vmem, size = 0x12000, scoped, tag = 'internal scratch']
  %s0 = inlined_call_operand.vmem [shape: bf16[2,16,4,288], index: 0, kind: input, shape index: {}]
  %s1 = inlined_call_operand.vmem [shape: f32[4,1], index: 1, kind: input, shape index: {}]
  %s2 = inlined_call_operand.vmem [shape: f32[4,1], index: 2, kind: input, shape index: {}]
  %s3 = inlined_call_operand.vmem [shape: f32[2,16,4,288], index: 3, kind: output, shape index: {}]
  %s4 = sld [smem:[#allocation0]]
  $region45: #{unet3d_decoder_forward.9} parent=0
    _
  %s6 = ssub.s32 1, %s4
  %s7 = scalar_select 0, %s6, %s4
  loop: start=0, step=1, limit=6
  $region2: #{unet3d_decoder_forward.9} parent=0 // loop_pre_header
    _
  $region3: #{unet3d_decoder_forward.9} parent=0 // loop_header
    %s9 = sphi 0, %s13
    %p10 = scmp.ge.s32.totalorder %s9, 6
    %s16 = sphi 0, %s28
    %s17 = sphi 0, %s24
    %s18 = sphi 0, %s16
    %s19 = sphi 0, %s17
    %s20 = sphi 0, %s18
    %s21 = sphi 0, %s19
    %s33 = sphi 0, %s35
    %s36 = sphi 0, %s33
    %s37 = sphi 0, %s36
    %s53 = sphi 0, %s37
    %s57 = sphi 0, %s57
    %s59 = sphi 0, %s57
    %s60 = sphi 0, %s59
    %s74 = sphi 0, %s60
    %s78 = sphi 0, %s78
    %s80 = sphi 0, %s78
    %s81 = sphi 0, %s80
    %s95 = sphi 0, %s81
    %s103 = sphi 0, %s105
    %s106 = sphi 0, %s103
    %s107 = sphi 0, %s106
    %s123 = sphi 0, %s107
  $region4: #{unet3d_decoder_forward.9} parent=0 // loop_header_branch
    %12 = sbr.rel (%p10) target = $region8
  $region5: #{unet3d_decoder_forward.9} parent=0 // loop_body
    %s14 = ssub.s32 %s9, 1
    %s15 = ssub.s32 %s9, 2
    %s22 = sadd.s32 1, %s17
    %p23 = scmp.ge.s32.totalorder %s22, 2
    %s24 = scalar_select %p23, 0, %s22
    %s25 = sadd.s32 1, %s16
    %s26 = scalar_select %p23, %s25, %s16
    %p27 = scmp.ge.s32.totalorder %s26, 2
    %s28 = scalar_select %p27, 0, %s26
    %s29 = ssub.s32 %s16, %s28
    %s30 = ssub.s32 %s17, %s24
    %s31 = sor.u32 %s29, %s30
    %p32 = scmp.eq.s32.totalorder %s31, 0
    %s34 = sadd.s32 %s33, 1
    %s35 = scalar_select %p32, %s33, %s34
    %p38 = pneg %p32
    %p39 = scmp.eq.s32.totalorder %s9, 3
    %p40 = por %p38, %p39
    %p41 = scmp.ne.s32.totalorder %s33, %s36
    %p42 = scmp.eq.s32.totalorder %s9, 0
    %p43 = por %p41, %p42
    %p44 = scmp.ne.s32.totalorder %s33, %s36
    %p45 = scmp.eq.s32.totalorder %s14, 3
    %p46 = por %p44, %p45
    %p47 = scmp.ne.s32.totalorder %s36, %s37
    %p48 = scmp.eq.s32.totalorder %s14, 0
    %p49 = por %p47, %p48
    %p50 = scmp.ne.s32.totalorder %s36, %s37
    %p51 = scmp.eq.s32.totalorder %s15, 3
    %p52 = por %p50, %p51
    %p54 = scmp.ne.s32.totalorder %s37, %s53
    %p55 = scmp.eq.s32.totalorder %s15, 0
    %p56 = por %p54, %p55
    %s58 = sadd.s32 %s57, 1
    %p61 = scmp.eq.s32.totalorder %s9, 3
    %p62 = scmp.ne.s32.totalorder %s57, %s59
    %p63 = scmp.eq.s32.totalorder %s9, 0
    %p64 = por %p62, %p63
    %p65 = scmp.ne.s32.totalorder %s57, %s59
    %p66 = scmp.eq.s32.totalorder %s14, 3
    %p67 = por %p65, %p66
    %p68 = scmp.ne.s32.totalorder %s59, %s60
    %p69 = scmp.eq.s32.totalorder %s14, 0
    %p70 = por %p68, %p69
    %p71 = scmp.ne.s32.totalorder %s59, %s60
    %p72 = scmp.eq.s32.totalorder %s15, 3
    %p73 = por %p71, %p72
    %p75 = scmp.ne.s32.totalorder %s60, %s74
    %p76 = scmp.eq.s32.totalorder %s15, 0
    %p77 = por %p75, %p76
    %s79 = sadd.s32 %s78, 1
    %p82 = scmp.eq.s32.totalorder %s9, 3
    %p83 = scmp.ne.s32.totalorder %s78, %s80
    %p84 = scmp.eq.s32.totalorder %s9, 0
    %p85 = por %p83, %p84
    %p86 = scmp.ne.s32.totalorder %s78, %s80
    %p87 = scmp.eq.s32.totalorder %s14, 3
    %p88 = por %p86, %p87
    %p89 = scmp.ne.s32.totalorder %s80, %s81
    %p90 = scmp.eq.s32.totalorder %s14, 0
    %p91 = por %p89, %p90
    %p92 = scmp.ne.s32.totalorder %s80, %s81
    %p93 = scmp.eq.s32.totalorder %s15, 3
    %p94 = por %p92, %p93
    %p96 = scmp.ne.s32.totalorder %s81, %s95
    %p97 = scmp.eq.s32.totalorder %s15, 0
    %p98 = por %p96, %p97
    %s99 = ssub.s32 %s16, %s28
    %s100 = ssub.s32 %s17, %s24
    %s101 = sor.u32 %s99, %s100
    %p102 = scmp.eq.s32.totalorder %s101, 0
    %s104 = sadd.s32 %s103, 1
    %s105 = scalar_select %p102, %s103, %s104
    %p108 = pneg %p102
    %p109 = scmp.eq.s32.totalorder %s9, 3
    %p110 = por %p108, %p109
    %p111 = scmp.ne.s32.totalorder %s103, %s106
    %p112 = scmp.eq.s32.totalorder %s9, 0
    %p113 = por %p111, %p112
    %p114 = scmp.ne.s32.totalorder %s103, %s106
    %p115 = scmp.eq.s32.totalorder %s14, 3
    %p116 = por %p114, %p115
    %p117 = scmp.ne.s32.totalorder %s106, %s107
    %p118 = scmp.eq.s32.totalorder %s14, 0
    %p119 = por %p117, %p118
    %p120 = scmp.ne.s32.totalorder %s106, %s107
    %p121 = scmp.eq.s32.totalorder %s15, 3
    %p122 = por %p120, %p121
    %p124 = scmp.ne.s32.totalorder %s107, %s123
    %p125 = scmp.eq.s32.totalorder %s15, 0
    %p126 = por %p124, %p125
    %p127 = scmp.le.s32.totalorder 1, %s9
    %p128 = scmp.lt.s32.totalorder %s9, 5
    %p129 = pnand %p127, %p128
    %p130 = pneg %p129
    // Predicated region
    $region9: #{unet3d_decoder_forward.9} parent=5 // pred_check
      _
    $region10: #{unet3d_decoder_forward.9} parent=5 // pred_check_branch
      %132 = sbr.rel (%p129) target = $region12
    $region11: #{unet3d_decoder_forward.9} parent=5 // pred_region
      %s133 = ssub.s32 %s9, 1
      // Predicated region
      $region13: #{unet3d_decoder_forward.9} parent=11 // pred_check
        %p134 = pneg %p70
      $region14: #{unet3d_decoder_forward.9} parent=11 // pred_check_branch
        %136 = sbr.rel (%p134) target = $region16
      $region15: #{unet3d_decoder_forward.9} parent=11 // pred_region
        _
      $region16: #{unet3d_decoder_forward.9} parent=11 // pred_fallthru
        _
      // Predicated region
      $region17: #{unet3d_decoder_forward.9} parent=11 // pred_check
        %p137 = pneg %p91
      $region18: #{unet3d_decoder_forward.9} parent=11 // pred_check_branch
        %139 = sbr.rel (%p137) target = $region20
      $region19: #{unet3d_decoder_forward.9} parent=11 // pred_region
        _
      $region20: #{unet3d_decoder_forward.9} parent=11 // pred_fallthru
        _
    $region12: #{unet3d_decoder_forward.9} parent=5 // pred_fallthru
      _
    %p140 = scmp.lt.s32.totalorder %s9, 4
    // Predicated region
    $region21: #{unet3d_decoder_forward.9} parent=5 // pred_check
      %p141 = pneg %p140
    $region22: #{unet3d_decoder_forward.9} parent=5 // pred_check_branch
      %143 = sbr.rel (%p141) target = $region24
    $region23: #{unet3d_decoder_forward.9} parent=5 // pred_region
      // Predicated region
      $region25: #{unet3d_decoder_forward.9} parent=23 // pred_check
        %p144 = pneg %p43
      $region26: #{unet3d_decoder_forward.9} parent=23 // pred_check_branch
        %146 = sbr.rel (%p144) target = $region28
      $region27: #{unet3d_decoder_forward.9} parent=23 // pred_region
        %s147 = smul.u32 8, %s17
        %p148 = scmp.lt.s32.totalorder %s16, 1
        %s149 = scalar_select %p148, %s16, 1
        %p150 = scmp.lt.s32.totalorder %s147, 15
        %s151 = scalar_select %p150, %s147, 15
        %s152 = smul.addr %s151, 3
        %s153 = smul.addr %s149, 48
        %s154 = sadd.s32 %s152, %s153
        %s155 = smul.addr %s154, 2
        %s156 = scalar_lea.vmem %s0, %s155
        %s157 = smul.u32 8, %s17
      $region28: #{unet3d_decoder_forward.9} parent=23 // pred_fallthru
        _
    $region24: #{unet3d_decoder_forward.9} parent=5 // pred_fallthru
      _
    %p158 = scmp.le.s32.totalorder 1, %s9
    %p159 = scmp.lt.s32.totalorder %s9, 5
    %p160 = pnand %p158, %p159
    %p161 = pneg %p160
    // Predicated region
    $region29: #{unet3d_decoder_forward.9} parent=5 // pred_check
      _
    $region30: #{unet3d_decoder_forward.9} parent=5 // pred_check_branch
      %163 = sbr.rel (%p160) target = $region32
    $region31: #{unet3d_decoder_forward.9} parent=5 // pred_region
      %s164 = ssub.s32 %s9, 1
      %s165 = smul.u32 8, %s19
      %p166 = scmp.lt.s32.totalorder %s18, 1
      %s167 = scalar_select %p166, %s18, 1
      %p168 = scmp.lt.s32.totalorder %s165, 15
      %s169 = scalar_select %p168, %s165, 15
      %s170 = smul.addr %s169, 3
      %s171 = smul.addr %s167, 48
      %s172 = sadd.s32 %s170, %s171
      %s173 = smul.addr %s172, 2
      %s174 = scalar_lea.vmem %s0, %s173
      %p175 = pneg %p49
      %p176 = pneg %p46
      %p177 = pneg %p70
      %p178 = pneg %p67
      %p179 = pneg %p91
      %p180 = pneg %p88
      %p181 = pneg %p119
      %p182 = pneg %p116
      %s183 = smul.u32 8, %s19
      %p184 = scmp.lt.s32.totalorder %s18, 1
      %s185 = scalar_select %p184, %s18, 1
      %p186 = scmp.lt.s32.totalorder %s183, 15
      %s187 = scalar_select %p186, %s183, 15
      %s188 = smul.addr %s187, 3
      %s189 = smul.addr %s185, 48
      %s190 = sadd.s32 %s188, %s189
      %s191 = smul.addr %s190, 4
      %s192 = scalar_lea.vmem %s3, %s191
      %s193 = smul.u32 8, %s19
      %p194 = scmp.lt.s32.totalorder %s18, 1
      %s195 = scalar_select %p194, %s18, 1
      %p196 = scmp.lt.s32.totalorder %s193, 15
      %s197 = scalar_select %p196, %s193, 15
      %s198 = smul.addr %s197, 3
      %s199 = smul.addr %s195, 48
      %s200 = sadd.s32 %s198, %s199
      %s201 = smul.addr %s200, 2
      %s202 = scalar_lea.vmem %s0, %s201
      %s203 = smul.u32 8, %s19
      %s204 = smul.u32 8, %s19
      %p205 = scmp.lt.s32.totalorder %s18, 1
      %s206 = scalar_select %p205, %s18, 1
      %p207 = scmp.lt.s32.totalorder %s204, 15
      %s208 = scalar_select %p207, %s204, 15
      %s209 = smul.addr %s208, 3
      %s210 = smul.addr %s206, 48
      %s211 = sadd.s32 %s209, %s210
      %s212 = smul.addr %s211, 4
      %s213 = scalar_lea.vmem %s3, %s212
      %s214 = smul.u32 8, %s19
      %v215 = vld [vmem:[%s202] sm:$0x3f]
      %v216 = vld [vmem:[%s202 + $0x6] sm:$0x3f]
      %v217 = vld [vmem:[%s202 + $0xc] sm:$0x3f]
      %v218 = vld [vmem:[%s202 + $0x12] sm:$0x3f]
      %v219 = vld [vmem:[%s202 + $0x18] sm:$0x3f]
      %v220 = vld [vmem:[%s202 + $0x1e] sm:$0x3f]
      %v221 = vld [vmem:[%s202 + $0x24] sm:$0x3f]
      %v222 = vld [vmem:[%s202 + $0x2a] sm:$0x3f]
      %v223 = vunpack.c.l.bf16 %v215
      %v224 = vunpack.c.h.bf16 %v215
      %v225 = vunpack.c.l.bf16 %v216
      %v226 = vunpack.c.h.bf16 %v216
      %v227 = vunpack.c.l.bf16 %v217
      %v228 = vunpack.c.h.bf16 %v217
      %v229 = vunpack.c.l.bf16 %v218
      %v230 = vunpack.c.h.bf16 %v218
      %v231 = vunpack.c.l.bf16 %v219
      %v232 = vunpack.c.h.bf16 %v219
      %v233 = vunpack.c.l.bf16 %v220
      %v234 = vunpack.c.h.bf16 %v220
      %v235 = vunpack.c.l.bf16 %v221
      %v236 = vunpack.c.h.bf16 %v221
      %v237 = vunpack.c.l.bf16 %v222
      %v238 = vunpack.c.h.bf16 %v222
      %v239 = vld [vmem:[%s1] sm:$0xf]
      %241 = vset.pattern.permute.xlu0 0
      %242 = vperm.xlu0 %241, %v239
      %v243 = vpop.permute.xlu0 %242
      %v245 = vunpack.c.l.s4 839922192
      %v246 = vunpack.c.0.s8 %v245
      %v247 = vlaneseq
      %v248 = vshrl.u32 %v247, 7
      %v249 = vsub.s32 %v246, %v248
      %v250 = vrot.slane %v243, %v249
      %v252 = vmul.f32 %v223, %v250
      %v253 = vmul.f32 %v224, %v250
      %v254 = vmul.f32 %v225, %v250
      %v255 = vmul.f32 %v226, %v250
      %v256 = vmul.f32 %v227, %v250
      %v257 = vmul.f32 %v228, %v250
      %v258 = vmul.f32 %v229, %v250
      %v259 = vmul.f32 %v230, %v250
      %v260 = vmul.f32 %v231, %v250
      %v261 = vmul.f32 %v232, %v250
      %v262 = vmul.f32 %v233, %v250
      %v263 = vmul.f32 %v234, %v250
      %v264 = vmul.f32 %v235, %v250
      %v265 = vmul.f32 %v236, %v250
      %v266 = vmul.f32 %v237, %v250
      %v267 = vmul.f32 %v238, %v250
      %v268 = vld [vmem:[%s2] sm:$0xf]
      %270 = vset.pattern.permute.xlu0 0
      %271 = vperm.xlu0 %270, %v268
      %v272 = vpop.permute.xlu0 %271
      %v274 = vunpack.c.l.s4 839922192
      %v275 = vunpack.c.0.s8 %v274
      %v276 = vlaneseq
      %v277 = vshrl.u32 %v276, 7
      %v278 = vsub.s32 %v275, %v277
      %v279 = vrot.slane %v272, %v278
      %v281 = vadd.f32 %v252, %v279
      %v282 = vadd.f32 %v253, %v279
      %v283 = vadd.f32 %v254, %v279
      %v284 = vadd.f32 %v255, %v279
      %v285 = vadd.f32 %v256, %v279
      %v286 = vadd.f32 %v257, %v279
      %v287 = vadd.f32 %v258, %v279
      %v288 = vadd.f32 %v259, %v279
      %v289 = vadd.f32 %v260, %v279
      %v290 = vadd.f32 %v261, %v279
      %v291 = vadd.f32 %v262, %v279
      %v292 = vadd.f32 %v263, %v279
      %v293 = vadd.f32 %v264, %v279
      %v294 = vadd.f32 %v265, %v279
      %v295 = vadd.f32 %v266, %v279
      %v296 = vadd.f32 %v267, %v279
      %v297 = vmax.f32 %v281, 0.0
      %v298 = vmax.f32 %v282, 0.0
      %v299 = vmax.f32 %v283, 0.0
      %v300 = vmax.f32 %v284, 0.0
      %v301 = vmax.f32 %v285, 0.0
      %v302 = vmax.f32 %v286, 0.0
      %v303 = vmax.f32 %v287, 0.0
      %v304 = vmax.f32 %v288, 0.0
      %v305 = vmax.f32 %v289, 0.0
      %v306 = vmax.f32 %v290, 0.0
      %v307 = vmax.f32 %v291, 0.0
      %v308 = vmax.f32 %v292, 0.0
      %v309 = vmax.f32 %v293, 0.0
      %v310 = vmax.f32 %v294, 0.0
      %v311 = vmax.f32 %v295, 0.0
      %v312 = vmax.f32 %v296, 0.0
      %313 = vst [vmem:[%s213] sm:$0xff] %v297
      %vm314 = vcmask 257024
      %315 = vst.msk [vmem:[%s213 + $0x8] sm:$0xf] %vm314, %v298
      %316 = vst [vmem:[%s213 + $0xc] sm:$0xff] %v299
      %317 = vst.msk [vmem:[%s213 + $0x14] sm:$0xf] %vm314, %v300
      %318 = vst [vmem:[%s213 + $0x18] sm:$0xff] %v301
      %319 = vst.msk [vmem:[%s213 + $0x20] sm:$0xf] %vm314, %v302
      %320 = vst [vmem:[%s213 + $0x24] sm:$0xff] %v303
      %321 = vst.msk [vmem:[%s213 + $0x2c] sm:$0xf] %vm314, %v304
      %322 = vst [vmem:[%s213 + $0x30] sm:$0xff] %v305
      %323 = vst.msk [vmem:[%s213 + $0x38] sm:$0xf] %vm314, %v306
      %324 = vst [vmem:[%s213 + $0x3c] sm:$0xff] %v307
      %325 = vst.msk [vmem:[%s213 + $0x44] sm:$0xf] %vm314, %v308
      %326 = vst [vmem:[%s213 + $0x48] sm:$0xff] %v309
      %327 = vst.msk [vmem:[%s213 + $0x50] sm:$0xf] %vm314, %v310
      %328 = vst [vmem:[%s213 + $0x54] sm:$0xff] %v311
      %329 = vst.msk [vmem:[%s213 + $0x5c] sm:$0xf] %vm314, %v312
      %s330 = smul.u32 8, %s19
      %p331 = scmp.lt.s32.totalorder %s18, 1
      %s332 = scalar_select %p331, %s18, 1
      %p333 = scmp.lt.s32.totalorder %s330, 15
      %s334 = scalar_select %p333, %s330, 15
      %s335 = smul.addr %s334, 3
      %s336 = smul.addr %s332, 48
      %s337 = sadd.s32 %s335, %s336
      %s338 = smul.addr %s337, 4
      %s339 = scalar_lea.vmem %s3, %s338
      // Predicated region
      $region33: #{unet3d_decoder_forward.9} parent=31 // pred_check
        %p340 = pneg %p116
      $region34: #{unet3d_decoder_forward.9} parent=31 // pred_check_branch
        %342 = sbr.rel (%p340) target = $region36
      $region35: #{unet3d_decoder_forward.9} parent=31 // pred_region
        %s343 = smul.u32 8, %s19
      $region36: #{unet3d_decoder_forward.9} parent=31 // pred_fallthru
        _
    $region32: #{unet3d_decoder_forward.9} parent=5 // pred_fallthru
      _
    %p344 = scmp.le.s32.totalorder 2, %s9
    // Predicated region
    $region37: #{unet3d_decoder_forward.9} parent=5 // pred_check
      %p345 = pneg %p344
    $region38: #{unet3d_decoder_forward.9} parent=5 // pred_check_branch
      %347 = sbr.rel (%p345) target = $region40
    $region39: #{unet3d_decoder_forward.9} parent=5 // pred_region
      %s348 = ssub.s32 %s9, 2
      // Predicated region
      $region41: #{unet3d_decoder_forward.9} parent=39 // pred_check
        %p349 = pneg %p122
      $region42: #{unet3d_decoder_forward.9} parent=39 // pred_check_branch
        %351 = sbr.rel (%p349) target = $region44
      $region43: #{unet3d_decoder_forward.9} parent=39 // pred_region
        %s352 = smul.u32 8, %s21
        %p353 = scmp.lt.s32.totalorder %s20, 1
        %s354 = scalar_select %p353, %s20, 1
        %p355 = scmp.lt.s32.totalorder %s352, 15
        %s356 = scalar_select %p355, %s352, 15
        %s357 = smul.addr %s356, 3
        %s358 = smul.addr %s354, 48
        %s359 = sadd.s32 %s357, %s358
        %s360 = smul.addr %s359, 4
        %s361 = scalar_lea.vmem %s3, %s360
      $region44: #{unet3d_decoder_forward.9} parent=39 // pred_fallthru
        _
    $region40: #{unet3d_decoder_forward.9} parent=5 // pred_fallthru
      _
  $region6: #{unet3d_decoder_forward.9} parent=0 // loop_footer
    %s13 = sadd.s32 1, %s9
  $region7: #{unet3d_decoder_forward.9} parent=0 // loop_footer_branch
    %8 = sbr.rel target = $region3
  $region8: #{unet3d_decoder_forward.9} parent=0 // loop_exit
    _

// kernel: unet3d_decoder_forward.8
$region0: #{unet3d_decoder_forward.8}
  #allocation0 [shape = 'u32[]', space=smem, size = 0x4, offset = 0x4, fixed_abs, tag = 'smem constant byte address 0x4 - core index']
  #allocation1 [shape = 'u32[144,128]{1,0:T(1,128)}', space=vmem, size = 0x12000, scoped, tag = 'internal scratch']
  #allocation2 [shape = 'f32[4,288]{1,0:T(4,128)}', space=vmem, size = 0x1800, scoped, tag = 'scratch operand']
  %s0 = inlined_call_operand.vmem [shape: bf16[2,18,4,342], index: 0, kind: input, shape index: {}]
  %s1 = inlined_call_operand.vmem [shape: bf16[3,9,4,4], index: 1, kind: input, shape index: {}]
  %s2 = inlined_call_operand.vmem [shape: f32[4,1], index: 2, kind: input, shape index: {}]
  %s3 = inlined_call_operand.vmem [shape: f32[1,288], index: 3, kind: input, shape index: {}]
  %s4 = inlined_call_operand.vmem [shape: bf16[2,16,4,288], index: 4, kind: output, shape index: {0}]
  %s5 = inlined_call_operand.vmem [shape: f32[2,16,4,1], index: 5, kind: output, shape index: {1}]
  %s6 = inlined_call_operand.vmem [shape: f32[2,16,4,1], index: 6, kind: output, shape index: {2}]
  %7 = xla_tuple %s4, %s5, %s6
  %s8 = sld [smem:[#allocation0]]
  $region73: #{unet3d_decoder_forward.8} parent=0
    _
  %s10 = ssub.s32 1, %s8
  %s11 = scalar_select 0, %s10, %s8
  loop: start=0, step=1, limit=98
  $region2: #{unet3d_decoder_forward.8} parent=0 // loop_pre_header
    _
  $region3: #{unet3d_decoder_forward.8} parent=0 // loop_header
    %s13 = sphi 0, %s17
    %p14 = scmp.ge.s32.totalorder %s13, 98
    %s20 = sphi 0, %s39
    %s21 = sphi 0, %s35
    %s22 = sphi 0, %s31
    %s23 = sphi 0, %s20
    %s24 = sphi 0, %s21
    %s25 = sphi 0, %s22
    %s26 = sphi 0, %s23
    %s27 = sphi 0, %s24
    %s28 = sphi 0, %s25
    %s46 = sphi 0, %s48
    %s49 = sphi 0, %s46
    %s50 = sphi 0, %s49
    %s66 = sphi 0, %s50
    %s72 = sphi 0, %s74
    %s75 = sphi 0, %s72
    %s76 = sphi 0, %s75
    %s92 = sphi 0, %s76
    %s96 = sphi 0, %s96
    %s98 = sphi 0, %s96
    %s99 = sphi 0, %s98
    %s113 = sphi 0, %s99
    %s117 = sphi 0, %s117
    %s119 = sphi 0, %s117
    %s120 = sphi 0, %s119
    %s134 = sphi 0, %s120
    %s142 = sphi 0, %s144
    %s145 = sphi 0, %s142
    %s146 = sphi 0, %s145
    %s162 = sphi 0, %s146
    %s170 = sphi 0, %s172
    %s173 = sphi 0, %s170
    %s174 = sphi 0, %s173
    %s190 = sphi 0, %s174
    %s198 = sphi 0, %s200
    %s201 = sphi 0, %s198
    %s202 = sphi 0, %s201
    %s218 = sphi 0, %s202
  $region4: #{unet3d_decoder_forward.8} parent=0 // loop_header_branch
    %16 = sbr.rel (%p14) target = $region8
  $region5: #{unet3d_decoder_forward.8} parent=0 // loop_body
    %s18 = ssub.s32 %s13, 1
    %s19 = ssub.s32 %s13, 2
    %s29 = sadd.s32 1, %s22
    %p30 = scmp.ge.s32.totalorder %s29, 3
    %s31 = scalar_select %p30, 0, %s29
    %s32 = sadd.s32 1, %s21
    %s33 = scalar_select %p30, %s32, %s21
    %p34 = scmp.ge.s32.totalorder %s33, 16
    %s35 = scalar_select %p34, 0, %s33
    %s36 = sadd.s32 1, %s20
    %s37 = scalar_select %p34, %s36, %s20
    %p38 = scmp.ge.s32.totalorder %s37, 2
    %s39 = scalar_select %p38, 0, %s37
    %s40 = sadd.s32 %s21, %s22
    %s41 = sadd.s32 %s35, %s31
    %s42 = ssub.s32 %s20, %s39
    %s43 = ssub.s32 %s40, %s41
    %s44 = sor.u32 %s42, %s43
    %p45 = scmp.eq.s32.totalorder %s44, 0
    %s47 = sadd.s32 %s46, 1
    %s48 = scalar_select %p45, %s46, %s47
    %p51 = pneg %p45
    %p52 = scmp.eq.s32.totalorder %s13, 95
    %p53 = por %p51, %p52
    %p54 = scmp.ne.s32.totalorder %s46, %s49
    %p55 = scmp.eq.s32.totalorder %s13, 0
    %p56 = por %p54, %p55
    %p57 = scmp.ne.s32.totalorder %s46, %s49
    %p58 = scmp.eq.s32.totalorder %s18, 95
    %p59 = por %p57, %p58
    %p60 = scmp.ne.s32.totalorder %s49, %s50
    %p61 = scmp.eq.s32.totalorder %s18, 0
    %p62 = por %p60, %p61
    %p63 = scmp.ne.s32.totalorder %s49, %s50
    %p64 = scmp.eq.s32.totalorder %s19, 95
    %p65 = por %p63, %p64
    %p67 = scmp.ne.s32.totalorder %s50, %s66
    %p68 = scmp.eq.s32.totalorder %s19, 0
    %p69 = por %p67, %p68
    %s70 = ssub.s32 %s22, %s31
    %p71 = scmp.eq.s32.totalorder %s70, 0
    %s73 = sadd.s32 %s72, 1
    %s74 = scalar_select %p71, %s72, %s73
    %p77 = pneg %p71
    %p78 = scmp.eq.s32.totalorder %s13, 95
    %p79 = por %p77, %p78
    %p80 = scmp.ne.s32.totalorder %s72, %s75
    %p81 = scmp.eq.s32.totalorder %s13, 0
    %p82 = por %p80, %p81
    %p83 = scmp.ne.s32.totalorder %s72, %s75
    %p84 = scmp.eq.s32.totalorder %s18, 95
    %p85 = por %p83, %p84
    %p86 = scmp.ne.s32.totalorder %s75, %s76
    %p87 = scmp.eq.s32.totalorder %s18, 0
    %p88 = por %p86, %p87
    %p89 = scmp.ne.s32.totalorder %s75, %s76
    %p90 = scmp.eq.s32.totalorder %s19, 95
    %p91 = por %p89, %p90
    %p93 = scmp.ne.s32.totalorder %s76, %s92
    %p94 = scmp.eq.s32.totalorder %s19, 0
    %p95 = por %p93, %p94
    %s97 = sadd.s32 %s96, 1
    %p100 = scmp.eq.s32.totalorder %s13, 95
    %p101 = scmp.ne.s32.totalorder %s96, %s98
    %p102 = scmp.eq.s32.totalorder %s13, 0
    %p103 = por %p101, %p102
    %p104 = scmp.ne.s32.totalorder %s96, %s98
    %p105 = scmp.eq.s32.totalorder %s18, 95
    %p106 = por %p104, %p105
    %p107 = scmp.ne.s32.totalorder %s98, %s99
    %p108 = scmp.eq.s32.totalorder %s18, 0
    %p109 = por %p107, %p108
    %p110 = scmp.ne.s32.totalorder %s98, %s99
    %p111 = scmp.eq.s32.totalorder %s19, 95
    %p112 = por %p110, %p111
    %p114 = scmp.ne.s32.totalorder %s99, %s113
    %p115 = scmp.eq.s32.totalorder %s19, 0
    %p116 = por %p114, %p115
    %s118 = sadd.s32 %s117, 1
    %p121 = scmp.eq.s32.totalorder %s13, 95
    %p122 = scmp.ne.s32.totalorder %s117, %s119
    %p123 = scmp.eq.s32.totalorder %s13, 0
    %p124 = por %p122, %p123
    %p125 = scmp.ne.s32.totalorder %s117, %s119
    %p126 = scmp.eq.s32.totalorder %s18, 95
    %p127 = por %p125, %p126
    %p128 = scmp.ne.s32.totalorder %s119, %s120
    %p129 = scmp.eq.s32.totalorder %s18, 0
    %p130 = por %p128, %p129
    %p131 = scmp.ne.s32.totalorder %s119, %s120
    %p132 = scmp.eq.s32.totalorder %s19, 95
    %p133 = por %p131, %p132
    %p135 = scmp.ne.s32.totalorder %s120, %s134
    %p136 = scmp.eq.s32.totalorder %s19, 0
    %p137 = por %p135, %p136
    %s138 = ssub.s32 %s20, %s39
    %s139 = ssub.s32 %s21, %s35
    %s140 = sor.u32 %s138, %s139
    %p141 = scmp.eq.s32.totalorder %s140, 0
    %s143 = sadd.s32 %s142, 1
    %s144 = scalar_select %p141, %s142, %s143
    %p147 = pneg %p141
    %p148 = scmp.eq.s32.totalorder %s13, 95
    %p149 = por %p147, %p148
    %p150 = scmp.ne.s32.totalorder %s142, %s145
    %p151 = scmp.eq.s32.totalorder %s13, 0
    %p152 = por %p150, %p151
    %p153 = scmp.ne.s32.totalorder %s142, %s145
    %p154 = scmp.eq.s32.totalorder %s18, 95
    %p155 = por %p153, %p154
    %p156 = scmp.ne.s32.totalorder %s145, %s146
    %p157 = scmp.eq.s32.totalorder %s18, 0
    %p158 = por %p156, %p157
    %p159 = scmp.ne.s32.totalorder %s145, %s146
    %p160 = scmp.eq.s32.totalorder %s19, 95
    %p161 = por %p159, %p160
    %p163 = scmp.ne.s32.totalorder %s146, %s162
    %p164 = scmp.eq.s32.totalorder %s19, 0
    %p165 = por %p163, %p164
    %s166 = ssub.s32 %s20, %s39
    %s167 = ssub.s32 %s21, %s35
    %s168 = sor.u32 %s166, %s167
    %p169 = scmp.eq.s32.totalorder %s168, 0
    %s171 = sadd.s32 %s170, 1
    %s172 = scalar_select %p169, %s170, %s171
    %p175 = pneg %p169
    %p176 = scmp.eq.s32.totalorder %s13, 95
    %p177 = por %p175, %p176
    %p178 = scmp.ne.s32.totalorder %s170, %s173
    %p179 = scmp.eq.s32.totalorder %s13, 0
    %p180 = por %p178, %p179
    %p181 = scmp.ne.s32.totalorder %s170, %s173
    %p182 = scmp.eq.s32.totalorder %s18, 95
    %p183 = por %p181, %p182
    %p184 = scmp.ne.s32.totalorder %s173, %s174
    %p185 = scmp.eq.s32.totalorder %s18, 0
    %p186 = por %p184, %p185
    %p187 = scmp.ne.s32.totalorder %s173, %s174
    %p188 = scmp.eq.s32.totalorder %s19, 95
    %p189 = por %p187, %p188
    %p191 = scmp.ne.s32.totalorder %s174, %s190
    %p192 = scmp.eq.s32.totalorder %s19, 0
    %p193 = por %p191, %p192
    %s194 = ssub.s32 %s20, %s39
    %s195 = ssub.s32 %s21, %s35
    %s196 = sor.u32 %s194, %s195
    %p197 = scmp.eq.s32.totalorder %s196, 0
    %s199 = sadd.s32 %s198, 1
    %s200 = scalar_select %p197, %s198, %s199
    %p203 = pneg %p197
    %p204 = scmp.eq.s32.totalorder %s13, 95
    %p205 = por %p203, %p204
    %p206 = scmp.ne.s32.totalorder %s198, %s201
    %p207 = scmp.eq.s32.totalorder %s13, 0
    %p208 = por %p206, %p207
    %p209 = scmp.ne.s32.totalorder %s198, %s201
    %p210 = scmp.eq.s32.totalorder %s18, 95
    %p211 = por %p209, %p210
    %p212 = scmp.ne.s32.totalorder %s201, %s202
    %p213 = scmp.eq.s32.totalorder %s18, 0
    %p214 = por %p212, %p213
    %p215 = scmp.ne.s32.totalorder %s201, %s202
    %p216 = scmp.eq.s32.totalorder %s19, 95
    %p217 = por %p215, %p216
    %p219 = scmp.ne.s32.totalorder %s202, %s218
    %p220 = scmp.eq.s32.totalorder %s19, 0
    %p221 = por %p219, %p220
    %p222 = scmp.le.s32.totalorder 1, %s13
    %p223 = scmp.lt.s32.totalorder %s13, 97
    %p224 = pnand %p222, %p223
    %p225 = pneg %p224
    // Predicated region
    $region9: #{unet3d_decoder_forward.8} parent=5 // pred_check
      _
    $region10: #{unet3d_decoder_forward.8} parent=5 // pred_check_branch
      %227 = sbr.rel (%p224) target = $region12
    $region11: #{unet3d_decoder_forward.8} parent=5 // pred_region
      %s228 = ssub.s32 %s13, 1
      // Predicated region
      $region13: #{unet3d_decoder_forward.8} parent=11 // pred_check
        %p229 = pneg %p109
      $region14: #{unet3d_decoder_forward.8} parent=11 // pred_check_branch
        %231 = sbr.rel (%p229) target = $region16
      $region15: #{unet3d_decoder_forward.8} parent=11 // pred_region
        _
      $region16: #{unet3d_decoder_forward.8} parent=11 // pred_fallthru
        _
      // Predicated region
      $region17: #{unet3d_decoder_forward.8} parent=11 // pred_check
        %p232 = pneg %p130
      $region18: #{unet3d_decoder_forward.8} parent=11 // pred_check_branch
        %234 = sbr.rel (%p232) target = $region20
      $region19: #{unet3d_decoder_forward.8} parent=11 // pred_region
        _
      $region20: #{unet3d_decoder_forward.8} parent=11 // pred_fallthru
        _
    $region12: #{unet3d_decoder_forward.8} parent=5 // pred_fallthru
      _
    %p235 = scmp.lt.s32.totalorder %s13, 96
    // Predicated region
    $region21: #{unet3d_decoder_forward.8} parent=5 // pred_check
      %p236 = pneg %p235
    $region22: #{unet3d_decoder_forward.8} parent=5 // pred_check_branch
      %238 = sbr.rel (%p236) target = $region24
    $region23: #{unet3d_decoder_forward.8} parent=5 // pred_region
      // Predicated region
      $region25: #{unet3d_decoder_forward.8} parent=23 // pred_check
        %p239 = pneg %p56
      $region26: #{unet3d_decoder_forward.8} parent=23 // pred_check_branch
        %241 = sbr.rel (%p239) target = $region28
      $region27: #{unet3d_decoder_forward.8} parent=23 // pred_region
        %s242 = sadd.s32 %s21, %s22
        %p243 = scmp.lt.s32.totalorder %s20, 1
        %s244 = scalar_select %p243, %s20, 1
        %p245 = scmp.lt.s32.totalorder %s242, 17
        %s246 = scalar_select %p245, %s242, 17
        %s247 = smul.addr %s246, 3
        %s248 = smul.addr %s244, 54
        %s249 = sadd.s32 %s247, %s248
        %s250 = smul.addr %s249, 2
        %s251 = scalar_lea.vmem %s0, %s250
        %s252 = sadd.s32 %s21, %s22
      $region28: #{unet3d_decoder_forward.8} parent=23 // pred_fallthru
        _
      // Predicated region
      $region29: #{unet3d_decoder_forward.8} parent=23 // pred_check
        %p253 = pneg %p82
      $region30: #{unet3d_decoder_forward.8} parent=23 // pred_check_branch
        %255 = sbr.rel (%p253) target = $region32
      $region31: #{unet3d_decoder_forward.8} parent=23 // pred_region
        %p256 = scmp.lt.s32.totalorder %s22, 2
        %s257 = scalar_select %p256, %s22, 2
        %s258 = smul.addr %s257, 9
        %s259 = smul.addr %s258, 2
        %s260 = scalar_lea.vmem %s1, %s259
      $region32: #{unet3d_decoder_forward.8} parent=23 // pred_fallthru
        _
    $region24: #{unet3d_decoder_forward.8} parent=5 // pred_fallthru
      _
    %p261 = scmp.le.s32.totalorder 1, %s13
    %p262 = scmp.lt.s32.totalorder %s13, 97
    %p263 = pnand %p261, %p262
    %p264 = pneg %p263
    // Predicated region
    $region33: #{unet3d_decoder_forward.8} parent=5 // pred_check
      _
    $region34: #{unet3d_decoder_forward.8} parent=5 // pred_check_branch
      %266 = sbr.rel (%p263) target = $region36
    $region35: #{unet3d_decoder_forward.8} parent=5 // pred_region
      %s267 = ssub.s32 %s13, 1
      %s268 = sadd.s32 %s24, %s25
      %p269 = scmp.lt.s32.totalorder %s23, 1
      %s270 = scalar_select %p269, %s23, 1
      %p271 = scmp.lt.s32.totalorder %s268, 17
      %s272 = scalar_select %p271, %s268, 17
      %s273 = smul.addr %s272, 3
      %s274 = smul.addr %s270, 54
      %s275 = sadd.s32 %s273, %s274
      %s276 = smul.addr %s275, 2
      %s277 = scalar_lea.vmem %s0, %s276
      %p278 = pneg %p62
      %p279 = pneg %p59
      %p280 = scmp.lt.s32.totalorder %s25, 2
      %s281 = scalar_select %p280, %s25, 2
      %s282 = smul.addr %s281, 9
      %s283 = smul.addr %s282, 2
      %s284 = scalar_lea.vmem %s1, %s283
      %p285 = pneg %p88
      %p286 = pneg %p85
      %p287 = pneg %p109
      %p288 = pneg %p106
      %p289 = pneg %p130
      %p290 = pneg %p127
      %p291 = pneg %p158
      %p292 = pneg %p155
      %p293 = scmp.lt.s32.totalorder %s23, 1
      %s294 = scalar_select %p293, %s23, 1
      %p295 = scmp.lt.s32.totalorder %s24, 15
      %s296 = scalar_select %p295, %s24, 15
      %s297 = smul.addr %s296, 3
      %s298 = smul.addr %s294, 48
      %s299 = sadd.s32 %s297, %s298
      %s300 = smul.addr %s299, 2
      %s301 = scalar_lea.vmem %s4, %s300
      %p302 = pneg %p186
      %p303 = pneg %p183
      %p304 = scmp.lt.s32.totalorder %s23, 1
      %s305 = scalar_select %p304, %s23, 1
      %p306 = scmp.lt.s32.totalorder %s24, 15
      %s307 = scalar_select %p306, %s24, 15
      %s308 = smul.addr %s305, 16
      %s309 = sadd.s32 %s307, %s308
      %s310 = smul.addr %s309, 4
      %s311 = scalar_lea.vmem %s5, %s310
      %p312 = pneg %p214
      %p313 = pneg %p211
      %p314 = scmp.lt.s32.totalorder %s23, 1
      %s315 = scalar_select %p314, %s23, 1
      %p316 = scmp.lt.s32.totalorder %s24, 15
      %s317 = scalar_select %p316, %s24, 15
      %s318 = smul.addr %s315, 16
      %s319 = sadd.s32 %s317, %s318
      %s320 = smul.addr %s319, 4
      %s321 = scalar_lea.vmem %s6, %s320
      %s322 = sadd.s32 %s24, %s25
      %p323 = scmp.lt.s32.totalorder %s23, 1
      %s324 = scalar_select %p323, %s23, 1
      %p325 = scmp.lt.s32.totalorder %s322, 17
      %s326 = scalar_select %p325, %s322, 17
      %s327 = smul.addr %s326, 3
      %s328 = smul.addr %s324, 54
      %s329 = sadd.s32 %s327, %s328
      %s330 = smul.addr %s329, 2
      %s331 = scalar_lea.vmem %s0, %s330
      %s332 = sadd.s32 %s24, %s25
      %p333 = scmp.lt.s32.totalorder %s25, 2
      %s334 = scalar_select %p333, %s25, 2
      %s335 = smul.addr %s334, 9
      %s336 = smul.addr %s335, 2
      %s337 = scalar_lea.vmem %s1, %s336
      %p338 = scmp.lt.s32.totalorder %s23, 1
      %s339 = scalar_select %p338, %s23, 1
      %p340 = scmp.lt.s32.totalorder %s24, 15
      %s341 = scalar_select %p340, %s24, 15
      %s342 = smul.addr %s341, 3
      %s343 = smul.addr %s339, 48
      %s344 = sadd.s32 %s342, %s343
      %s345 = smul.addr %s344, 2
      %s346 = scalar_lea.vmem %s4, %s345
      %p347 = scmp.lt.s32.totalorder %s23, 1
      %s348 = scalar_select %p347, %s23, 1
      %p349 = scmp.lt.s32.totalorder %s24, 15
      %s350 = scalar_select %p349, %s24, 15
      %s351 = smul.addr %s348, 16
      %s352 = sadd.s32 %s350, %s351
      %s353 = smul.addr %s352, 4
      %s354 = scalar_lea.vmem %s5, %s353
      %p355 = scmp.lt.s32.totalorder %s23, 1
      %s356 = scalar_select %p355, %s23, 1
      %p357 = scmp.lt.s32.totalorder %s24, 15
      %s358 = scalar_select %p357, %s24, 15
      %s359 = smul.addr %s356, 16
      %s360 = sadd.s32 %s358, %s359
      %s361 = smul.addr %s360, 4
      %s362 = scalar_lea.vmem %s6, %s361
      %p364 = scmp.eq.s32.totalorder %s25, 0
      // Predicated region
      $region37: #{unet3d_decoder_forward.8} parent=35 // pred_check
        %p365 = pneg %p364
      $region38: #{unet3d_decoder_forward.8} parent=35 // pred_check_branch
        %367 = sbr.rel (%p365) target = $region40
      $region39: #{unet3d_decoder_forward.8} parent=35 // pred_region
        %368 = vst [vmem:[#allocation2] sm:$0xff] 0.0
        %vm369 = vcmask 257024
        %370 = vst.msk [vmem:[#allocation2 + $0x8] sm:$0xf] %vm369, 0.0
      $region40: #{unet3d_decoder_forward.8} parent=35 // pred_fallthru
        _
      %v371 = vld [vmem:[#allocation2] sm:$0xff]
      %v372 = vld [vmem:[#allocation2 + $0x8] sm:$0xf]
      %v373 = vld [vmem:[%s337] sm:$0x3]
      %v374 = vld [vmem:[%s331] sm:$0x3f]
      %v376 = vcombine.high %v374, %v374
      %v378 = vunpack.c.l.s4 1983009808
      %v379 = vunpack.c.0.s8 %v378
      %v380 = vlaneseq
      %v381 = vshrl.u32 %v380, 7
      %v382 = vsub.s32 %v379, %v381
      %v383 = vrot.slane %v374, %v382
      %v385 = vunpack.c.l.s4 1983009808
      %v386 = vunpack.c.0.s8 %v385
      %v387 = vlaneseq
      %v388 = vshrl.u32 %v387, 7
      %v389 = vsub.s32 %v386, %v388
      %v390 = vrot.slane %v376, %v389
      %v391 = vcombine.high %v383, %v383
      %vm392 = vcmask 31744
      %v394 = vsel %vm392, %v373, 0
      %vm396 = vcmask 1041408
      %v398 = vsel %vm396, %v383, 0
      %v401 = vsel %vm396, %v391, 0
      %v404 = vsel %vm396, %v390, 0
      %406 = vmatprep.subr.bf16.mxu0 0
      %407 = vmatpush1.bf16.msra.mxu0 0
      %408 = vmatprep.subr.bf16.mxu0 0
      %409 = vmatpush1.bf16.msra.mxu0 0
      %410 = vmatprep.subr.bf16.mxu0 0
      %411 = vmatpush1.bf16.msra.mxu0 0
      %412 = vmatprep.subr.bf16.mxu0 0
      %413 = vmatpush1.bf16.msra.mxu0 0
      %414 = vmatprep.subr.bf16.mxu0 0
      %415 = vmatpush1.bf16.msra.mxu0 0
      %416 = vmatprep.subr.bf16.mxu0 0
      %417 = vmatpush1.bf16.msra.mxu0 0
      %418 = vmatprep.subr.bf16.mxu0 0
      %419 = vmatpush1.bf16.msra.mxu0 0
      %420 = vmatprep.subr.bf16.mxu0 %v401
      %421 = vmatpush1.bf16.msra.mxu0 %v398
      %422 = vmatprep.subr.bf16.mxu0 0
      %423 = vmatpush2.bf16.msra.mxu0 0
      %424 = vmatprep.subr.bf16.mxu0 0
      %425 = vmatpush2.bf16.msra.mxu0 0
      %426 = vmatprep.subr.bf16.mxu0 0
      %427 = vmatpush2.bf16.msra.mxu0 0
      %428 = vmatprep.subr.bf16.mxu0 0
      %429 = vmatpush2.bf16.msra.mxu0 0
      %430 = vmatprep.subr.bf16.mxu0 0
      %431 = vmatpush2.bf16.msra.mxu0 0
      %432 = vmatprep.subr.bf16.mxu0 0
      %433 = vmatpush2.bf16.msra.mxu0 0
      %434 = vmatprep.subr.bf16.mxu0 0
      %435 = vmatpush2.bf16.msra.mxu0 0
      %436 = vmatprep.subr.bf16.mxu0 0
      %437 = vmatpush2.bf16.msra.mxu0 0
      %438 = vmatprep.mubr.bf16.mxu0 0
      %439 = vmatmul.mubr.bf16.gmra.mxu0 %v394
      %v440 = vpop.f32.mrf.mxu0
      %v441 = vadd.f32 0.0, %v440
      %v442 = vpop.f32.mrf.mxu0
      %v443 = vadd.f32 0.0, %v442
      %v444 = vpop.f32.mrf.mxu0
      %v445 = vpop.f32.mrf.mxu0
      %446 = vdwg.mxu0
      %447 = vmatprep.subr.bf16.mxu0 0
      %448 = vmatpush1.bf16.msra.mxu0 0
      %449 = vmatprep.subr.bf16.mxu0 0
      %450 = vmatpush1.bf16.msra.mxu0 0
      %451 = vmatprep.subr.bf16.mxu0 0
      %452 = vmatpush1.bf16.msra.mxu0 0
      %453 = vmatprep.subr.bf16.mxu0 0
      %454 = vmatpush1.bf16.msra.mxu0 0
      %455 = vmatprep.subr.bf16.mxu0 0
      %456 = vmatpush1.bf16.msra.mxu0 0
      %457 = vmatprep.subr.bf16.mxu0 0
      %458 = vmatpush1.bf16.msra.mxu0 0
      %459 = vmatprep.subr.bf16.mxu0 0
      %460 = vmatpush1.bf16.msra.mxu0 0
      %461 = vmatprep.subr.bf16.mxu0 0
      %462 = vmatpush1.bf16.msra.mxu0 %v404
      %463 = vmatprep.subr.bf16.mxu0 0
      %464 = vmatpush2.bf16.msra.mxu0 0
      %465 = vmatprep.subr.bf16.mxu0 0
      %466 = vmatpush2.bf16.msra.mxu0 0
      %467 = vmatprep.subr.bf16.mxu0 0
      %468 = vmatpush2.bf16.msra.mxu0 0
      %469 = vmatprep.subr.bf16.mxu0 0
      %470 = vmatpush2.bf16.msra.mxu0 0
      %471 = vmatprep.subr.bf16.mxu0 0
      %472 = vmatpush2.bf16.msra.mxu0 0
      %473 = vmatprep.subr.bf16.mxu0 0
      %474 = vmatpush2.bf16.msra.mxu0 0
      %475 = vmatprep.subr.bf16.mxu0 0
      %476 = vmatpush2.bf16.msra.mxu0 0
      %477 = vmatprep.subr.bf16.mxu0 0
      %478 = vmatpush2.bf16.msra.mxu0 0
      %479 = vmatprep.mubr.bf16.mxu0 0
      %480 = vmatmul.mubr.bf16.gmra.mxu0 %v394
      %v481 = vpop.f32.mrf.mxu0
      %v482 = vadd.f32 0.0, %v481
      %v483 = vpop.f32.mrf.mxu0
      %v484 = vpop.f32.mrf.mxu0
      %v485 = vpop.f32.mrf.mxu0
      %486 = vdwg.mxu0
      %v489 = vcombine.low %v441, %v443
      %v491 = vadd.f32 %v371, %v489
      %v492 = vadd.f32 %v372, %v482
      %s493 = scalar_lea.vmem %s337, 2
      %v494 = vld [vmem:[%s493] sm:$0x3]
      %v495 = vld [vmem:[%s331] sm:$0x3f]
      %v497 = vcombine.high %v495, %v495
      %v499 = vunpack.c.l.s4 1983009808
      %v500 = vunpack.c.0.s8 %v499
      %v501 = vlaneseq
      %v502 = vshrl.u32 %v501, 7
      %v503 = vsub.s32 %v500, %v502
      %v504 = vrot.slane %v495, %v503
      %v506 = vunpack.c.l.s4 1983009808
      %v507 = vunpack.c.0.s8 %v506
      %v508 = vlaneseq
      %v509 = vshrl.u32 %v508, 7
      %v510 = vsub.s32 %v507, %v509
      %v511 = vrot.slane %v497, %v510
      %v512 = vcombine.high %v504, %v504
      %513 = vrot.lane.b32.xlu0 %v504, 127
      %v514 = vpop.permute.xlu0 %513
      %515 = vrot.lane.b32.xlu0 %v512, 127
      %v516 = vpop.permute.xlu0 %515
      %517 = vrot.lane.b32.xlu0 %v511, 127
      %v518 = vpop.permute.xlu0 %517
      %vm519 = vcmask 1039360
      %v520 = vsel %vm519, %v514, %v516
      %v521 = vsel %vm519, %v516, %v518
      %v523 = vsel %vm392, %v494, 0
      %v526 = vsel %vm396, %v520, 0
      %v529 = vsel %vm396, %v521, 0
      %v532 = vsel %vm396, %v518, 0
      %534 = vmatprep.subr.bf16.mxu0 0
      %535 = vmatpush1.bf16.msra.mxu0 0
      %536 = vmatprep.subr.bf16.mxu0 0
      %537 = vmatpush1.bf16.msra.mxu0 0
      %538 = vmatprep.subr.bf16.mxu0 0
      %539 = vmatpush1.bf16.msra.mxu0 0
      %540 = vmatprep.subr.bf16.mxu0 0
      %541 = vmatpush1.bf16.msra.mxu0 0
      %542 = vmatprep.subr.bf16.mxu0 0
      %543 = vmatpush1.bf16.msra.mxu0 0
      %544 = vmatprep.subr.bf16.mxu0 0
      %545 = vmatpush1.bf16.msra.mxu0 0
      %546 = vmatprep.subr.bf16.mxu0 0
      %547 = vmatpush1.bf16.msra.mxu0 0
      %548 = vmatprep.subr.bf16.mxu0 %v529
      %549 = vmatpush1.bf16.msra.mxu0 %v526
      %550 = vmatprep.subr.bf16.mxu0 0
      %551 = vmatpush2.bf16.msra.mxu0 0
      %552 = vmatprep.subr.bf16.mxu0 0
      %553 = vmatpush2.bf16.msra.mxu0 0
      %554 = vmatprep.subr.bf16.mxu0 0
      %555 = vmatpush2.bf16.msra.mxu0 0
      %556 = vmatprep.subr.bf16.mxu0 0
      %557 = vmatpush2.bf16.msra.mxu0 0
      %558 = vmatprep.subr.bf16.mxu0 0
      %559 = vmatpush2.bf16.msra.mxu0 0
      %560 = vmatprep.subr.bf16.mxu0 0
      %561 = vmatpush2.bf16.msra.mxu0 0
      %562 = vmatprep.subr.bf16.mxu0 0
      %563 = vmatpush2.bf16.msra.mxu0 0
      %564 = vmatprep.subr.bf16.mxu0 0
      %565 = vmatpush2.bf16.msra.mxu0 0
      %566 = vmatprep.mubr.bf16.mxu0 0
      %567 = vmatmul.mubr.bf16.gmra.mxu0 %v523
      %v568 = vpop.f32.mrf.mxu0
      %v569 = vadd.f32 0.0, %v568
      %v570 = vpop.f32.mrf.mxu0
      %v571 = vadd.f32 0.0, %v570
      %v572 = vpop.f32.mrf.mxu0
      %v573 = vpop.f32.mrf.mxu0
      %574 = vdwg.mxu0
      %575 = vmatprep.subr.bf16.mxu0 0
      %576 = vmatpush1.bf16.msra.mxu0 0
      %577 = vmatprep.subr.bf16.mxu0 0
      %578 = vmatpush1.bf16.msra.mxu0 0
      %579 = vmatprep.subr.bf16.mxu0 0
      %580 = vmatpush1.bf16.msra.mxu0 0
      %581 = vmatprep.subr.bf16.mxu0 0
      %582 = vmatpush1.bf16.msra.mxu0 0
      %583 = vmatprep.subr.bf16.mxu0 0
      %584 = vmatpush1.bf16.msra.mxu0 0
      %585 = vmatprep.subr.bf16.mxu0 0
      %586 = vmatpush1.bf16.msra.mxu0 0
      %587 = vmatprep.subr.bf16.mxu0 0
      %588 = vmatpush1.bf16.msra.mxu0 0
      %589 = vmatprep.subr.bf16.mxu0 0
      %590 = vmatpush1.bf16.msra.mxu0 %v532
      %591 = vmatprep.subr.bf16.mxu0 0
      %592 = vmatpush2.bf16.msra.mxu0 0
      %593 = vmatprep.subr.bf16.mxu0 0
      %594 = vmatpush2.bf16.msra.mxu0 0
      %595 = vmatprep.subr.bf16.mxu0 0
      %596 = vmatpush2.bf16.msra.mxu0 0
      %597 = vmatprep.subr.bf16.mxu0 0
      %598 = vmatpush2.bf16.msra.mxu0 0
      %599 = vmatprep.subr.bf16.mxu0 0
      %600 = vmatpush2.bf16.msra.mxu0 0
      %601 = vmatprep.subr.bf16.mxu0 0
      %602 = vmatpush2.bf16.msra.mxu0 0
      %603 = vmatprep.subr.bf16.mxu0 0
      %604 = vmatpush2.bf16.msra.mxu0 0
      %605 = vmatprep.subr.bf16.mxu0 0
      %606 = vmatpush2.bf16.msra.mxu0 0
      %607 = vmatprep.mubr.bf16.mxu0 0
      %608 = vmatmul.mubr.bf16.gmra.mxu0 %v523
      %v609 = vpop.f32.mrf.mxu0
      %v610 = vadd.f32 0.0, %v609
      %v611 = vpop.f32.mrf.mxu0
      %v612 = vpop.f32.mrf.mxu0
      %v613 = vpop.f32.mrf.mxu0
      %614 = vdwg.mxu0
      %v617 = vcombine.low %v569, %v571
      %v619 = vadd.f32 %v491, %v617
      %v620 = vadd.f32 %v492, %v610
      %s621 = scalar_lea.vmem %s337, 4
      %v622 = vld [vmem:[%s621] sm:$0x3]
      %v623 = vld [vmem:[%s331] sm:$0x3f]
      %v625 = vcombine.high %v623, %v623
      %v627 = vunpack.c.l.s4 1983009808
      %v628 = vunpack.c.0.s8 %v627
      %v629 = vlaneseq
      %v630 = vshrl.u32 %v629, 7
      %v631 = vsub.s32 %v628, %v630
      %v632 = vrot.slane %v623, %v631
      %v634 = vunpack.c.l.s4 1983009808
      %v635 = vunpack.c.0.s8 %v634
      %v636 = vlaneseq
      %v637 = vshrl.u32 %v636, 7
      %v638 = vsub.s32 %v635, %v637
      %v639 = vrot.slane %v625, %v638
      %v640 = vcombine.high %v632, %v632
      %641 = vrot.lane.b32.xlu0 %v632, 126
      %v642 = vpop.permute.xlu0 %641
      %643 = vrot.lane.b32.xlu0 %v640, 126
      %v644 = vpop.permute.xlu0 %643
      %645 = vrot.lane.b32.xlu0 %v639, 126
      %v646 = vpop.permute.xlu0 %645
      %vm647 = vcmask 1031168
      %v648 = vsel %vm647, %v642, %v644
      %v649 = vsel %vm647, %v644, %v646
      %v651 = vsel %vm392, %v622, 0
      %v654 = vsel %vm396, %v648, 0
      %v657 = vsel %vm396, %v649, 0
      %v660 = vsel %vm396, %v646, 0
      %662 = vmatprep.subr.bf16.mxu0 0
      %663 = vmatpush1.bf16.msra.mxu0 0
      %664 = vmatprep.subr.bf16.mxu0 0
      %665 = vmatpush1.bf16.msra.mxu0 0
      %666 = vmatprep.subr.bf16.mxu0 0
      %667 = vmatpush1.bf16.msra.mxu0 0
      %668 = vmatprep.subr.bf16.mxu0 0
      %669 = vmatpush1.bf16.msra.mxu0 0
      %670 = vmatprep.subr.bf16.mxu0 0
      %671 = vmatpush1.bf16.msra.mxu0 0
      %672 = vmatprep.subr.bf16.mxu0 0
      %673 = vmatpush1.bf16.msra.mxu0 0
      %674 = vmatprep.subr.bf16.mxu0 0
      %675 = vmatpush1.bf16.msra.mxu0 0
      %676 = vmatprep.subr.bf16.mxu0 %v657
      %677 = vmatpush1.bf16.msra.mxu0 %v654
      %678 = vmatprep.subr.bf16.mxu0 0
      %679 = vmatpush2.bf16.msra.mxu0 0
      %680 = vmatprep.subr.bf16.mxu0 0
      %681 = vmatpush2.bf16.msra.mxu0 0
      %682 = vmatprep.subr.bf16.mxu0 0
      %683 = vmatpush2.bf16.msra.mxu0 0
      %684 = vmatprep.subr.bf16.mxu0 0
      %685 = vmatpush2.bf16.msra.mxu0 0
      %686 = vmatprep.subr.bf16.mxu0 0
      %687 = vmatpush2.bf16.msra.mxu0 0
      %688 = vmatprep.subr.bf16.mxu0 0
      %689 = vmatpush2.bf16.msra.mxu0 0
      %690 = vmatprep.subr.bf16.mxu0 0
      %691 = vmatpush2.bf16.msra.mxu0 0
      %692 = vmatprep.subr.bf16.mxu0 0
      %693 = vmatpush2.bf16.msra.mxu0 0
      %694 = vmatprep.mubr.bf16.mxu0 0
      %695 = vmatmul.mubr.bf16.gmra.mxu0 %v651
      %v696 = vpop.f32.mrf.mxu0
      %v697 = vadd.f32 0.0, %v696
      %v698 = vpop.f32.mrf.mxu0
      %v699 = vadd.f32 0.0, %v698
      %v700 = vpop.f32.mrf.mxu0
      %v701 = vpop.f32.mrf.mxu0
      %702 = vdwg.mxu0
      %703 = vmatprep.subr.bf16.mxu0 0
      %704 = vmatpush1.bf16.msra.mxu0 0
      %705 = vmatprep.subr.bf16.mxu0 0
      %706 = vmatpush1.bf16.msra.mxu0 0
      %707 = vmatprep.subr.bf16.mxu0 0
      %708 = vmatpush1.bf16.msra.mxu0 0
      %709 = vmatprep.subr.bf16.mxu0 0
      %710 = vmatpush1.bf16.msra.mxu0 0
      %711 = vmatprep.subr.bf16.mxu0 0
      %712 = vmatpush1.bf16.msra.mxu0 0
      %713 = vmatprep.subr.bf16.mxu0 0
      %714 = vmatpush1.bf16.msra.mxu0 0
      %715 = vmatprep.subr.bf16.mxu0 0
      %716 = vmatpush1.bf16.msra.mxu0 0
      %717 = vmatprep.subr.bf16.mxu0 0
      %718 = vmatpush1.bf16.msra.mxu0 %v660
      %719 = vmatprep.subr.bf16.mxu0 0
      %720 = vmatpush2.bf16.msra.mxu0 0
      %721 = vmatprep.subr.bf16.mxu0 0
      %722 = vmatpush2.bf16.msra.mxu0 0
      %723 = vmatprep.subr.bf16.mxu0 0
      %724 = vmatpush2.bf16.msra.mxu0 0
      %725 = vmatprep.subr.bf16.mxu0 0
      %726 = vmatpush2.bf16.msra.mxu0 0
      %727 = vmatprep.subr.bf16.mxu0 0
      %728 = vmatpush2.bf16.msra.mxu0 0
      %729 = vmatprep.subr.bf16.mxu0 0
      %730 = vmatpush2.bf16.msra.mxu0 0
      %731 = vmatprep.subr.bf16.mxu0 0
      %732 = vmatpush2.bf16.msra.mxu0 0
      %733 = vmatprep.subr.bf16.mxu0 0
      %734 = vmatpush2.bf16.msra.mxu0 0
      %735 = vmatprep.mubr.bf16.mxu0 0
      %736 = vmatmul.mubr.bf16.gmra.mxu0 %v651
      %v737 = vpop.f32.mrf.mxu0
      %v738 = vadd.f32 0.0, %v737
      %v739 = vpop.f32.mrf.mxu0
      %v740 = vpop.f32.mrf.mxu0
      %v741 = vpop.f32.mrf.mxu0
      %742 = vdwg.mxu0
      %v745 = vcombine.low %v697, %v699
      %v747 = vadd.f32 %v619, %v745
      %v748 = vadd.f32 %v620, %v738
      %s749 = scalar_lea.vmem %s337, 6
      %v750 = vld [vmem:[%s749] sm:$0x3]
      %v751 = vld [vmem:[%s331] sm:$0x3f]
      %v753 = vcombine.high %v751, %v751
      %v755 = vunpack.c.l.s4 1983009808
      %v756 = vunpack.c.0.s8 %v755
      %v757 = vlaneseq
      %v758 = vshrl.u32 %v757, 7
      %v759 = vsub.s32 %v756, %v758
      %v760 = vrot.slane %v751, %v759
      %v762 = vunpack.c.l.s4 1983009808
      %v763 = vunpack.c.0.s8 %v762
      %v764 = vlaneseq
      %v765 = vshrl.u32 %v764, 7
      %v766 = vsub.s32 %v763, %v765
      %v767 = vrot.slane %v753, %v766
      %v768 = vcombine.high %v760, %v760
      %769 = vrot.lane.b32.xlu0 %v760, 110
      %v770 = vpop.permute.xlu0 %769
      %771 = vrot.lane.b32.xlu0 %v768, 110
      %v772 = vpop.permute.xlu0 %771
      %773 = vrot.lane.b32.xlu0 %v767, 110
      %v774 = vpop.permute.xlu0 %773
      %vm775 = vcmask 900096
      %v776 = vsel %vm775, %v770, %v772
      %v777 = vsel %vm775, %v772, %v774
      %v779 = vsel %vm392, %v750, 0
      %v782 = vsel %vm396, %v776, 0
      %v785 = vsel %vm396, %v777, 0
      %v788 = vsel %vm396, %v774, 0
      %790 = vmatprep.subr.bf16.mxu0 0
      %791 = vmatpush1.bf16.msra.mxu0 0
      %792 = vmatprep.subr.bf16.mxu0 0
      %793 = vmatpush1.bf16.msra.mxu0 0
      %794 = vmatprep.subr.bf16.mxu0 0
      %795 = vmatpush1.bf16.msra.mxu0 0
      %796 = vmatprep.subr.bf16.mxu0 0
      %797 = vmatpush1.bf16.msra.mxu0 0
      %798 = vmatprep.subr.bf16.mxu0 0
      %799 = vmatpush1.bf16.msra.mxu0 0
      %800 = vmatprep.subr.bf16.mxu0 0
      %801 = vmatpush1.bf16.msra.mxu0 0
      %802 = vmatprep.subr.bf16.mxu0 0
      %803 = vmatpush1.bf16.msra.mxu0 0
      %804 = vmatprep.subr.bf16.mxu0 %v785
      %805 = vmatpush1.bf16.msra.mxu0 %v782
      %806 = vmatprep.subr.bf16.mxu0 0
      %807 = vmatpush2.bf16.msra.mxu0 0
      %808 = vmatprep.subr.bf16.mxu0 0
      %809 = vmatpush2.bf16.msra.mxu0 0
      %810 = vmatprep.subr.bf16.mxu0 0
      %811 = vmatpush2.bf16.msra.mxu0 0
      %812 = vmatprep.subr.bf16.mxu0 0
      %813 = vmatpush2.bf16.msra.mxu0 0
      %814 = vmatprep.subr.bf16.mxu0 0
      %815 = vmatpush2.bf16.msra.mxu0 0
      %816 = vmatprep.subr.bf16.mxu0 0
      %817 = vmatpush2.bf16.msra.mxu0 0
      %818 = vmatprep.subr.bf16.mxu0 0
      %819 = vmatpush2.bf16.msra.mxu0 0
      %820 = vmatprep.subr.bf16.mxu0 0
      %821 = vmatpush2.bf16.msra.mxu0 0
      %822 = vmatprep.mubr.bf16.mxu0 0
      %823 = vmatmul.mubr.bf16.gmra.mxu0 %v779
      %v824 = vpop.f32.mrf.mxu0
      %v825 = vadd.f32 0.0, %v824
      %v826 = vpop.f32.mrf.mxu0
      %v827 = vadd.f32 0.0, %v826
      %v828 = vpop.f32.mrf.mxu0
      %v829 = vpop.f32.mrf.mxu0
      %830 = vdwg.mxu0
      %831 = vmatprep.subr.bf16.mxu0 0
      %832 = vmatpush1.bf16.msra.mxu0 0
      %833 = vmatprep.subr.bf16.mxu0 0
      %834 = vmatpush1.bf16.msra.mxu0 0
      %835 = vmatprep.subr.bf16.mxu0 0
      %836 = vmatpush1.bf16.msra.mxu0 0
      %837 = vmatprep.subr.bf16.mxu0 0
      %838 = vmatpush1.bf16.msra.mxu0 0
      %839 = vmatprep.subr.bf16.mxu0 0
      %840 = vmatpush1.bf16.msra.mxu0 0
      %841 = vmatprep.subr.bf16.mxu0 0
      %842 = vmatpush1.bf16.msra.mxu0 0
      %843 = vmatprep.subr.bf16.mxu0 0
      %844 = vmatpush1.bf16.msra.mxu0 0
      %845 = vmatprep.subr.bf16.mxu0 0
      %846 = vmatpush1.bf16.msra.mxu0 %v788
      %847 = vmatprep.subr.bf16.mxu0 0
      %848 = vmatpush2.bf16.msra.mxu0 0
      %849 = vmatprep.subr.bf16.mxu0 0
      %850 = vmatpush2.bf16.msra.mxu0 0
      %851 = vmatprep.subr.bf16.mxu0 0
      %852 = vmatpush2.bf16.msra.mxu0 0
      %853 = vmatprep.subr.bf16.mxu0 0
      %854 = vmatpush2.bf16.msra.mxu0 0
      %855 = vmatprep.subr.bf16.mxu0 0
      %856 = vmatpush2.bf16.msra.mxu0 0
      %857 = vmatprep.subr.bf16.mxu0 0
      %858 = vmatpush2.bf16.msra.mxu0 0
      %859 = vmatprep.subr.bf16.mxu0 0
      %860 = vmatpush2.bf16.msra.mxu0 0
      %861 = vmatprep.subr.bf16.mxu0 0
      %862 = vmatpush2.bf16.msra.mxu0 0
      %863 = vmatprep.mubr.bf16.mxu0 0
      %864 = vmatmul.mubr.bf16.gmra.mxu0 %v779
      %v865 = vpop.f32.mrf.mxu0
      %v866 = vadd.f32 0.0, %v865
      %v867 = vpop.f32.mrf.mxu0
      %v868 = vpop.f32.mrf.mxu0
      %v869 = vpop.f32.mrf.mxu0
      %870 = vdwg.mxu0
      %v873 = vcombine.low %v825, %v827
      %v875 = vadd.f32 %v747, %v873
      %v876 = vadd.f32 %v748, %v866
      %s877 = scalar_lea.vmem %s337, 8
      %v878 = vld [vmem:[%s877] sm:$0x3]
      %v879 = vld [vmem:[%s331] sm:$0x3f]
      %v881 = vcombine.high %v879, %v879
      %v883 = vunpack.c.l.s4 1983009808
      %v884 = vunpack.c.0.s8 %v883
      %v885 = vlaneseq
      %v886 = vshrl.u32 %v885, 7
      %v887 = vsub.s32 %v884, %v886
      %v888 = vrot.slane %v879, %v887
      %v890 = vunpack.c.l.s4 1983009808
      %v891 = vunpack.c.0.s8 %v890
      %v892 = vlaneseq
      %v893 = vshrl.u32 %v892, 7
      %v894 = vsub.s32 %v891, %v893
      %v895 = vrot.slane %v881, %v894
      %v896 = vcombine.high %v888, %v888
      %897 = vrot.lane.b32.xlu0 %v888, 109
      %v898 = vpop.permute.xlu0 %897
      %899 = vrot.lane.b32.xlu0 %v896, 109
      %v900 = vpop.permute.xlu0 %899
      %901 = vrot.lane.b32.xlu0 %v895, 109
      %v902 = vpop.permute.xlu0 %901
      %vm903 = vcmask 891904
      %v904 = vsel %vm903, %v898, %v900
      %v905 = vsel %vm903, %v900, %v902
      %v907 = vsel %vm392, %v878, 0
      %v910 = vsel %vm396, %v904, 0
      %v913 = vsel %vm396, %v905, 0
      %v916 = vsel %vm396, %v902, 0
      %918 = vmatprep.subr.bf16.mxu0 0
      %919 = vmatpush1.bf16.msra.mxu0 0
      %920 = vmatprep.subr.bf16.mxu0 0
      %921 = vmatpush1.bf16.msra.mxu0 0
      %922 = vmatprep.subr.bf16.mxu0 0
      %923 = vmatpush1.bf16.msra.mxu0 0
      %924 = vmatprep.subr.bf16.mxu0 0
      %925 = vmatpush1.bf16.msra.mxu0 0
      %926 = vmatprep.subr.bf16.mxu0 0
      %927 = vmatpush1.bf16.msra.mxu0 0
      %928 = vmatprep.subr.bf16.mxu0 0
      %929 = vmatpush1.bf16.msra.mxu0 0
      %930 = vmatprep.subr.bf16.mxu0 0
      %931 = vmatpush1.bf16.msra.mxu0 0
      %932 = vmatprep.subr.bf16.mxu0 %v913
      %933 = vmatpush1.bf16.msra.mxu0 %v910
      %934 = vmatprep.subr.bf16.mxu0 0
      %935 = vmatpush2.bf16.msra.mxu0 0
      %936 = vmatprep.subr.bf16.mxu0 0
      %937 = vmatpush2.bf16.msra.mxu0 0
      %938 = vmatprep.subr.bf16.mxu0 0
      %939 = vmatpush2.bf16.msra.mxu0 0
      %940 = vmatprep.subr.bf16.mxu0 0
      %941 = vmatpush2.bf16.msra.mxu0 0
      %942 = vmatprep.subr.bf16.mxu0 0
      %943 = vmatpush2.bf16.msra.mxu0 0
      %944 = vmatprep.subr.bf16.mxu0 0
      %945 = vmatpush2.bf16.msra.mxu0 0
      %946 = vmatprep.subr.bf16.mxu0 0
      %947 = vmatpush2.bf16.msra.mxu0 0
      %948 = vmatprep.subr.bf16.mxu0 0
      %949 = vmatpush2.bf16.msra.mxu0 0
      %950 = vmatprep.mubr.bf16.mxu0 0
      %951 = vmatmul.mubr.bf16.gmra.mxu0 %v907
      %v952 = vpop.f32.mrf.mxu0
      %v953 = vadd.f32 0.0, %v952
      %v954 = vpop.f32.mrf.mxu0
      %v955 = vadd.f32 0.0, %v954
      %v956 = vpop.f32.mrf.mxu0
      %v957 = vpop.f32.mrf.mxu0
      %958 = vdwg.mxu0
      %959 = vmatprep.subr.bf16.mxu0 0
      %960 = vmatpush1.bf16.msra.mxu0 0
      %961 = vmatprep.subr.bf16.mxu0 0
      %962 = vmatpush1.bf16.msra.mxu0 0
      %963 = vmatprep.subr.bf16.mxu0 0
      %964 = vmatpush1.bf16.msra.mxu0 0
      %965 = vmatprep.subr.bf16.mxu0 0
      %966 = vmatpush1.bf16.msra.mxu0 0
      %967 = vmatprep.subr.bf16.mxu0 0
      %968 = vmatpush1.bf16.msra.mxu0 0
      %969 = vmatprep.subr.bf16.mxu0 0
      %970 = vmatpush1.bf16.msra.mxu0 0
      %971 = vmatprep.subr.bf16.mxu0 0
      %972 = vmatpush1.bf16.msra.mxu0 0
      %973 = vmatprep.subr.bf16.mxu0 0
      %974 = vmatpush1.bf16.msra.mxu0 %v916
      %975 = vmatprep.subr.bf16.mxu0 0
      %976 = vmatpush2.bf16.msra.mxu0 0
      %977 = vmatprep.subr.bf16.mxu0 0
      %978 = vmatpush2.bf16.msra.mxu0 0
      %979 = vmatprep.subr.bf16.mxu0 0
      %980 = vmatpush2.bf16.msra.mxu0 0
      %981 = vmatprep.subr.bf16.mxu0 0
      %982 = vmatpush2.bf16.msra.mxu0 0
      %983 = vmatprep.subr.bf16.mxu0 0
      %984 = vmatpush2.bf16.msra.mxu0 0
      %985 = vmatprep.subr.bf16.mxu0 0
      %986 = vmatpush2.bf16.msra.mxu0 0
      %987 = vmatprep.subr.bf16.mxu0 0
      %988 = vmatpush2.bf16.msra.mxu0 0
      %989 = vmatprep.subr.bf16.mxu0 0
      %990 = vmatpush2.bf16.msra.mxu0 0
      %991 = vmatprep.mubr.bf16.mxu0 0
      %992 = vmatmul.mubr.bf16.gmra.mxu0 %v907
      %v993 = vpop.f32.mrf.mxu0
      %v994 = vadd.f32 0.0, %v993
      %v995 = vpop.f32.mrf.mxu0
      %v996 = vpop.f32.mrf.mxu0
      %v997 = vpop.f32.mrf.mxu0
      %998 = vdwg.mxu0
      %v1001 = vcombine.low %v953, %v955
      %v1003 = vadd.f32 %v875, %v1001
      %v1004 = vadd.f32 %v876, %v994
      %s1005 = scalar_lea.vmem %s337, 10
      %v1006 = vld [vmem:[%s1005] sm:$0x3]
      %v1007 = vld [vmem:[%s331] sm:$0x3f]
      %v1009 = vcombine.high %v1007, %v1007
      %v1011 = vunpack.c.l.s4 1983009808
      %v1012 = vunpack.c.0.s8 %v1011
      %v1013 = vlaneseq
      %v1014 = vshrl.u32 %v1013, 7
      %v1015 = vsub.s32 %v1012, %v1014
      %v1016 = vrot.slane %v1007, %v1015
      %v1018 = vunpack.c.l.s4 1983009808
      %v1019 = vunpack.c.0.s8 %v1018
      %v1020 = vlaneseq
      %v1021 = vshrl.u32 %v1020, 7
      %v1022 = vsub.s32 %v1019, %v1021
      %v1023 = vrot.slane %v1009, %v1022
      %v1024 = vcombine.high %v1016, %v1016
      %1025 = vrot.lane.b32.xlu0 %v1016, 108
      %v1026 = vpop.permute.xlu0 %1025
      %1027 = vrot.lane.b32.xlu0 %v1024, 108
      %v1028 = vpop.permute.xlu0 %1027
      %1029 = vrot.lane.b32.xlu0 %v1023, 108
      %v1030 = vpop.permute.xlu0 %1029
      %vm1031 = vcmask 883712
      %v1032 = vsel %vm1031, %v1026, %v1028
      %v1033 = vsel %vm1031, %v1028, %v1030
      %v1035 = vsel %vm392, %v1006, 0
      %v1038 = vsel %vm396, %v1032, 0
      %v1041 = vsel %vm396, %v1033, 0
      %v1044 = vsel %vm396, %v1030, 0
      %1046 = vmatprep.subr.bf16.mxu0 0
      %1047 = vmatpush1.bf16.msra.mxu0 0
      %1048 = vmatprep.subr.bf16.mxu0 0
      %1049 = vmatpush1.bf16.msra.mxu0 0
      %1050 = vmatprep.subr.bf16.mxu0 0
      %1051 = vmatpush1.bf16.msra.mxu0 0
      %1052 = vmatprep.subr.bf16.mxu0 0
      %1053 = vmatpush1.bf16.msra.mxu0 0
      %1054 = vmatprep.subr.bf16.mxu0 0
      %1055 = vmatpush1.bf16.msra.mxu0 0
      %1056 = vmatprep.subr.bf16.mxu0 0
      %1057 = vmatpush1.bf16.msra.mxu0 0
      %1058 = vmatprep.subr.bf16.mxu0 0
      %1059 = vmatpush1.bf16.msra.mxu0 0
      %1060 = vmatprep.subr.bf16.mxu0 %v1041
      %1061 = vmatpush1.bf16.msra.mxu0 %v1038
      %1062 = vmatprep.subr.bf16.mxu0 0
      %1063 = vmatpush2.bf16.msra.mxu0 0
      %1064 = vmatprep.subr.bf16.mxu0 0
      %1065 = vmatpush2.bf16.msra.mxu0 0
      %1066 = vmatprep.subr.bf16.mxu0 0
      %1067 = vmatpush2.bf16.msra.mxu0 0
      %1068 = vmatprep.subr.bf16.mxu0 0
      %1069 = vmatpush2.bf16.msra.mxu0 0
      %1070 = vmatprep.subr.bf16.mxu0 0
      %1071 = vmatpush2.bf16.msra.mxu0 0
      %1072 = vmatprep.subr.bf16.mxu0 0
      %1073 = vmatpush2.bf16.msra.mxu0 0
      %1074 = vmatprep.subr.bf16.mxu0 0
      %1075 = vmatpush2.bf16.msra.mxu0 0
      %1076 = vmatprep.subr.bf16.mxu0 0
      %1077 = vmatpush2.bf16.msra.mxu0 0
      %1078 = vmatprep.mubr.bf16.mxu0 0
      %1079 = vmatmul.mubr.bf16.gmra.mxu0 %v1035
      %v1080 = vpop.f32.mrf.mxu0
      %v1081 = vadd.f32 0.0, %v1080
      %v1082 = vpop.f32.mrf.mxu0
      %v1083 = vadd.f32 0.0, %v1082
      %v1084 = vpop.f32.mrf.mxu0
      %v1085 = vpop.f32.mrf.mxu0
      %1086 = vdwg.mxu0
      %1087 = vmatprep.subr.bf16.mxu0 0
      %1088 = vmatpush1.bf16.msra.mxu0 0
      %1089 = vmatprep.subr.bf16.mxu0 0
      %1090 = vmatpush1.bf16.msra.mxu0 0
      %1091 = vmatprep.subr.bf16.mxu0 0
      %1092 = vmatpush1.bf16.msra.mxu0 0
      %1093 = vmatprep.subr.bf16.mxu0 0
      %1094 = vmatpush1.bf16.msra.mxu0 0
      %1095 = vmatprep.subr.bf16.mxu0 0
      %1096 = vmatpush1.bf16.msra.mxu0 0
      %1097 = vmatprep.subr.bf16.mxu0 0
      %1098 = vmatpush1.bf16.msra.mxu0 0
      %1099 = vmatprep.subr.bf16.mxu0 0
      %1100 = vmatpush1.bf16.msra.mxu0 0
      %1101 = vmatprep.subr.bf16.mxu0 0
      %1102 = vmatpush1.bf16.msra.mxu0 %v1044
      %1103 = vmatprep.subr.bf16.mxu0 0
      %1104 = vmatpush2.bf16.msra.mxu0 0
      %1105 = vmatprep.subr.bf16.mxu0 0
      %1106 = vmatpush2.bf16.msra.mxu0 0
      %1107 = vmatprep.subr.bf16.mxu0 0
      %1108 = vmatpush2.bf16.msra.mxu0 0
      %1109 = vmatprep.subr.bf16.mxu0 0
      %1110 = vmatpush2.bf16.msra.mxu0 0
      %1111 = vmatprep.subr.bf16.mxu0 0
      %1112 = vmatpush2.bf16.msra.mxu0 0
      %1113 = vmatprep.subr.bf16.mxu0 0
      %1114 = vmatpush2.bf16.msra.mxu0 0
      %1115 = vmatprep.subr.bf16.mxu0 0
      %1116 = vmatpush2.bf16.msra.mxu0 0
      %1117 = vmatprep.subr.bf16.mxu0 0
      %1118 = vmatpush2.bf16.msra.mxu0 0
      %1119 = vmatprep.mubr.bf16.mxu0 0
      %1120 = vmatmul.mubr.bf16.gmra.mxu0 %v1035
      %v1121 = vpop.f32.mrf.mxu0
      %v1122 = vadd.f32 0.0, %v1121
      %v1123 = vpop.f32.mrf.mxu0
      %v1124 = vpop.f32.mrf.mxu0
      %v1125 = vpop.f32.mrf.mxu0
      %1126 = vdwg.mxu0
      %v1129 = vcombine.low %v1081, %v1083
      %v1131 = vadd.f32 %v1003, %v1129
      %v1132 = vadd.f32 %v1004, %v1122
      %s1133 = scalar_lea.vmem %s337, 12
      %v1134 = vld [vmem:[%s1133] sm:$0x3]
      %v1135 = vld [vmem:[%s331] sm:$0x3f]
      %v1137 = vcombine.high %v1135, %v1135
      %v1139 = vunpack.c.l.s4 1983009808
      %v1140 = vunpack.c.0.s8 %v1139
      %v1141 = vlaneseq
      %v1142 = vshrl.u32 %v1141, 7
      %v1143 = vsub.s32 %v1140, %v1142
      %v1144 = vrot.slane %v1135, %v1143
      %v1146 = vunpack.c.l.s4 1983009808
      %v1147 = vunpack.c.0.s8 %v1146
      %v1148 = vlaneseq
      %v1149 = vshrl.u32 %v1148, 7
      %v1150 = vsub.s32 %v1147, %v1149
      %v1151 = vrot.slane %v1137, %v1150
      %v1152 = vcombine.high %v1144, %v1144
      %1153 = vrot.lane.b32.xlu0 %v1144, 92
      %v1154 = vpop.permute.xlu0 %1153
      %1155 = vrot.lane.b32.xlu0 %v1152, 92
      %v1156 = vpop.permute.xlu0 %1155
      %1157 = vrot.lane.b32.xlu0 %v1151, 92
      %v1158 = vpop.permute.xlu0 %1157
      %vm1159 = vcmask 752640
      %v1160 = vsel %vm1159, %v1154, %v1156
      %v1161 = vsel %vm1159, %v1156, %v1158
      %v1163 = vsel %vm392, %v1134, 0
      %v1166 = vsel %vm396, %v1160, 0
      %v1169 = vsel %vm396, %v1161, 0
      %v1172 = vsel %vm396, %v1158, 0
      %1174 = vmatprep.subr.bf16.mxu0 0
      %1175 = vmatpush1.bf16.msra.mxu0 0
      %1176 = vmatprep.subr.bf16.mxu0 0
      %1177 = vmatpush1.bf16.msra.mxu0 0
      %1178 = vmatprep.subr.bf16.mxu0 0
      %1179 = vmatpush1.bf16.msra.mxu0 0
      %1180 = vmatprep.subr.bf16.mxu0 0
      %1181 = vmatpush1.bf16.msra.mxu0 0
      %1182 = vmatprep.subr.bf16.mxu0 0
      %1183 = vmatpush1.bf16.msra.mxu0 0
      %1184 = vmatprep.subr.bf16.mxu0 0
      %1185 = vmatpush1.bf16.msra.mxu0 0
      %1186 = vmatprep.subr.bf16.mxu0 0
      %1187 = vmatpush1.bf16.msra.mxu0 0
      %1188 = vmatprep.subr.bf16.mxu0 %v1169
      %1189 = vmatpush1.bf16.msra.mxu0 %v1166
      %1190 = vmatprep.subr.bf16.mxu0 0
      %1191 = vmatpush2.bf16.msra.mxu0 0
      %1192 = vmatprep.subr.bf16.mxu0 0
      %1193 = vmatpush2.bf16.msra.mxu0 0
      %1194 = vmatprep.subr.bf16.mxu0 0
      %1195 = vmatpush2.bf16.msra.mxu0 0
      %1196 = vmatprep.subr.bf16.mxu0 0
      %1197 = vmatpush2.bf16.msra.mxu0 0
      %1198 = vmatprep.subr.bf16.mxu0 0
      %1199 = vmatpush2.bf16.msra.mxu0 0
      %1200 = vmatprep.subr.bf16.mxu0 0
      %1201 = vmatpush2.bf16.msra.mxu0 0
      %1202 = vmatprep.subr.bf16.mxu0 0
      %1203 = vmatpush2.bf16.msra.mxu0 0
      %1204 = vmatprep.subr.bf16.mxu0 0
      %1205 = vmatpush2.bf16.msra.mxu0 0
      %1206 = vmatprep.mubr.bf16.mxu0 0
      %1207 = vmatmul.mubr.bf16.gmra.mxu0 %v1163
      %v1208 = vpop.f32.mrf.mxu0
      %v1209 = vadd.f32 0.0, %v1208
      %v1210 = vpop.f32.mrf.mxu0
      %v1211 = vadd.f32 0.0, %v1210
      %v1212 = vpop.f32.mrf.mxu0
      %v1213 = vpop.f32.mrf.mxu0
      %1214 = vdwg.mxu0
      %1215 = vmatprep.subr.bf16.mxu0 0
      %1216 = vmatpush1.bf16.msra.mxu0 0
      %1217 = vmatprep.subr.bf16.mxu0 0
      %1218 = vmatpush1.bf16.msra.mxu0 0
      %1219 = vmatprep.subr.bf16.mxu0 0
      %1220 = vmatpush1.bf16.msra.mxu0 0
      %1221 = vmatprep.subr.bf16.mxu0 0
      %1222 = vmatpush1.bf16.msra.mxu0 0
      %1223 = vmatprep.subr.bf16.mxu0 0
      %1224 = vmatpush1.bf16.msra.mxu0 0
      %1225 = vmatprep.subr.bf16.mxu0 0
      %1226 = vmatpush1.bf16.msra.mxu0 0
      %1227 = vmatprep.subr.bf16.mxu0 0
      %1228 = vmatpush1.bf16.msra.mxu0 0
      %1229 = vmatprep.subr.bf16.mxu0 0
      %1230 = vmatpush1.bf16.msra.mxu0 %v1172
      %1231 = vmatprep.subr.bf16.mxu0 0
      %1232 = vmatpush2.bf16.msra.mxu0 0
      %1233 = vmatprep.subr.bf16.mxu0 0
      %1234 = vmatpush2.bf16.msra.mxu0 0
      %1235 = vmatprep.subr.bf16.mxu0 0
      %1236 = vmatpush2.bf16.msra.mxu0 0
      %1237 = vmatprep.subr.bf16.mxu0 0
      %1238 = vmatpush2.bf16.msra.mxu0 0
      %1239 = vmatprep.subr.bf16.mxu0 0
      %1240 = vmatpush2.bf16.msra.mxu0 0
      %1241 = vmatprep.subr.bf16.mxu0 0
      %1242 = vmatpush2.bf16.msra.mxu0 0
      %1243 = vmatprep.subr.bf16.mxu0 0
      %1244 = vmatpush2.bf16.msra.mxu0 0
      %1245 = vmatprep.subr.bf16.mxu0 0
      %1246 = vmatpush2.bf16.msra.mxu0 0
      %1247 = vmatprep.mubr.bf16.mxu0 0
      %1248 = vmatmul.mubr.bf16.gmra.mxu0 %v1163
      %v1249 = vpop.f32.mrf.mxu0
      %v1250 = vadd.f32 0.0, %v1249
      %v1251 = vpop.f32.mrf.mxu0
      %v1252 = vpop.f32.mrf.mxu0
      %v1253 = vpop.f32.mrf.mxu0
      %1254 = vdwg.mxu0
      %v1257 = vcombine.low %v1209, %v1211
      %v1259 = vadd.f32 %v1131, %v1257
      %v1260 = vadd.f32 %v1132, %v1250
      %s1261 = scalar_lea.vmem %s337, 14
      %v1262 = vld [vmem:[%s1261] sm:$0x3]
      %v1263 = vld [vmem:[%s331] sm:$0x3f]
      %v1265 = vcombine.high %v1263, %v1263
      %v1267 = vunpack.c.l.s4 1983009808
      %v1268 = vunpack.c.0.s8 %v1267
      %v1269 = vlaneseq
      %v1270 = vshrl.u32 %v1269, 7
      %v1271 = vsub.s32 %v1268, %v1270
      %v1272 = vrot.slane %v1263, %v1271
      %v1274 = vunpack.c.l.s4 1983009808
      %v1275 = vunpack.c.0.s8 %v1274
      %v1276 = vlaneseq
      %v1277 = vshrl.u32 %v1276, 7
      %v1278 = vsub.s32 %v1275, %v1277
      %v1279 = vrot.slane %v1265, %v1278
      %v1280 = vcombine.high %v1272, %v1272
      %1281 = vrot.lane.b32.xlu0 %v1272, 91
      %v1282 = vpop.permute.xlu0 %1281
      %1283 = vrot.lane.b32.xlu0 %v1280, 91
      %v1284 = vpop.permute.xlu0 %1283
      %1285 = vrot.lane.b32.xlu0 %v1279, 91
      %v1286 = vpop.permute.xlu0 %1285
      %vm1287 = vcmask 744448
      %v1288 = vsel %vm1287, %v1282, %v1284
      %v1289 = vsel %vm1287, %v1284, %v1286
      %v1291 = vsel %vm392, %v1262, 0
      %v1294 = vsel %vm396, %v1288, 0
      %v1297 = vsel %vm396, %v1289, 0
      %v1300 = vsel %vm396, %v1286, 0
      %1302 = vmatprep.subr.bf16.mxu0 0
      %1303 = vmatpush1.bf16.msra.mxu0 0
      %1304 = vmatprep.subr.bf16.mxu0 0
      %1305 = vmatpush1.bf16.msra.mxu0 0
      %1306 = vmatprep.subr.bf16.mxu0 0
      %1307 = vmatpush1.bf16.msra.mxu0 0
      %1308 = vmatprep.subr.bf16.mxu0 0
      %1309 = vmatpush1.bf16.msra.mxu0 0
      %1310 = vmatprep.subr.bf16.mxu0 0
      %1311 = vmatpush1.bf16.msra.mxu0 0
      %1312 = vmatprep.subr.bf16.mxu0 0
      %1313 = vmatpush1.bf16.msra.mxu0 0
      %1314 = vmatprep.subr.bf16.mxu0 0
      %1315 = vmatpush1.bf16.msra.mxu0 0
      %1316 = vmatprep.subr.bf16.mxu0 %v1297
      %1317 = vmatpush1.bf16.msra.mxu0 %v1294
      %1318 = vmatprep.subr.bf16.mxu0 0
      %1319 = vmatpush2.bf16.msra.mxu0 0
      %1320 = vmatprep.subr.bf16.mxu0 0
      %1321 = vmatpush2.bf16.msra.mxu0 0
      %1322 = vmatprep.subr.bf16.mxu0 0
      %1323 = vmatpush2.bf16.msra.mxu0 0
      %1324 = vmatprep.subr.bf16.mxu0 0
      %1325 = vmatpush2.bf16.msra.mxu0 0
      %1326 = vmatprep.subr.bf16.mxu0 0
      %1327 = vmatpush2.bf16.msra.mxu0 0
      %1328 = vmatprep.subr.bf16.mxu0 0
      %1329 = vmatpush2.bf16.msra.mxu0 0
      %1330 = vmatprep.subr.bf16.mxu0 0
      %1331 = vmatpush2.bf16.msra.mxu0 0
      %1332 = vmatprep.subr.bf16.mxu0 0
      %1333 = vmatpush2.bf16.msra.mxu0 0
      %1334 = vmatprep.mubr.bf16.mxu0 0
      %1335 = vmatmul.mubr.bf16.gmra.mxu0 %v1291
      %v1336 = vpop.f32.mrf.mxu0
      %v1337 = vadd.f32 0.0, %v1336
      %v1338 = vpop.f32.mrf.mxu0
      %v1339 = vadd.f32 0.0, %v1338
      %v1340 = vpop.f32.mrf.mxu0
      %v1341 = vpop.f32.mrf.mxu0
      %1342 = vdwg.mxu0
      %1343 = vmatprep.subr.bf16.mxu0 0
      %1344 = vmatpush1.bf16.msra.mxu0 0
      %1345 = vmatprep.subr.bf16.mxu0 0
      %1346 = vmatpush1.bf16.msra.mxu0 0
      %1347 = vmatprep.subr.bf16.mxu0 0
      %1348 = vmatpush1.bf16.msra.mxu0 0
      %1349 = vmatprep.subr.bf16.mxu0 0
      %1350 = vmatpush1.bf16.msra.mxu0 0
      %1351 = vmatprep.subr.bf16.mxu0 0
      %1352 = vmatpush1.bf16.msra.mxu0 0
      %1353 = vmatprep.subr.bf16.mxu0 0
      %1354 = vmatpush1.bf16.msra.mxu0 0
      %1355 = vmatprep.subr.bf16.mxu0 0
      %1356 = vmatpush1.bf16.msra.mxu0 0
      %1357 = vmatprep.subr.bf16.mxu0 0
      %1358 = vmatpush1.bf16.msra.mxu0 %v1300
      %1359 = vmatprep.subr.bf16.mxu0 0
      %1360 = vmatpush2.bf16.msra.mxu0 0
      %1361 = vmatprep.subr.bf16.mxu0 0
      %1362 = vmatpush2.bf16.msra.mxu0 0
      %1363 = vmatprep.subr.bf16.mxu0 0
      %1364 = vmatpush2.bf16.msra.mxu0 0
      %1365 = vmatprep.subr.bf16.mxu0 0
      %1366 = vmatpush2.bf16.msra.mxu0 0
      %1367 = vmatprep.subr.bf16.mxu0 0
      %1368 = vmatpush2.bf16.msra.mxu0 0
      %1369 = vmatprep.subr.bf16.mxu0 0
      %1370 = vmatpush2.bf16.msra.mxu0 0
      %1371 = vmatprep.subr.bf16.mxu0 0
      %1372 = vmatpush2.bf16.msra.mxu0 0
      %1373 = vmatprep.subr.bf16.mxu0 0
      %1374 = vmatpush2.bf16.msra.mxu0 0
      %1375 = vmatprep.mubr.bf16.mxu0 0
      %1376 = vmatmul.mubr.bf16.gmra.mxu0 %v1291
      %v1377 = vpop.f32.mrf.mxu0
      %v1378 = vadd.f32 0.0, %v1377
      %v1379 = vpop.f32.mrf.mxu0
      %v1380 = vpop.f32.mrf.mxu0
      %v1381 = vpop.f32.mrf.mxu0
      %1382 = vdwg.mxu0
      %v1385 = vcombine.low %v1337, %v1339
      %v1387 = vadd.f32 %v1259, %v1385
      %v1388 = vadd.f32 %v1260, %v1378
      %s1389 = scalar_lea.vmem %s337, 16
      %v1390 = vld [vmem:[%s1389] sm:$0x3]
      %v1391 = vld [vmem:[%s331] sm:$0x3f]
      %v1393 = vcombine.high %v1391, %v1391
      %v1395 = vunpack.c.l.s4 1983009808
      %v1396 = vunpack.c.0.s8 %v1395
      %v1397 = vlaneseq
      %v1398 = vshrl.u32 %v1397, 7
      %v1399 = vsub.s32 %v1396, %v1398
      %v1400 = vrot.slane %v1391, %v1399
      %v1402 = vunpack.c.l.s4 1983009808
      %v1403 = vunpack.c.0.s8 %v1402
      %v1404 = vlaneseq
      %v1405 = vshrl.u32 %v1404, 7
      %v1406 = vsub.s32 %v1403, %v1405
      %v1407 = vrot.slane %v1393, %v1406
      %v1408 = vcombine.high %v1400, %v1400
      %1409 = vrot.lane.b32.xlu0 %v1400, 90
      %v1410 = vpop.permute.xlu0 %1409
      %1411 = vrot.lane.b32.xlu0 %v1408, 90
      %v1412 = vpop.permute.xlu0 %1411
      %1413 = vrot.lane.b32.xlu0 %v1407, 90
      %v1414 = vpop.permute.xlu0 %1413
      %vm1415 = vcmask 736256
      %v1416 = vsel %vm1415, %v1410, %v1412
      %v1417 = vsel %vm1415, %v1412, %v1414
      %v1419 = vsel %vm392, %v1390, 0
      %v1422 = vsel %vm396, %v1416, 0
      %v1425 = vsel %vm396, %v1417, 0
      %v1428 = vsel %vm396, %v1414, 0
      %1430 = vmatprep.subr.bf16.mxu0 0
      %1431 = vmatpush1.bf16.msra.mxu0 0
      %1432 = vmatprep.subr.bf16.mxu0 0
      %1433 = vmatpush1.bf16.msra.mxu0 0
      %1434 = vmatprep.subr.bf16.mxu0 0
      %1435 = vmatpush1.bf16.msra.mxu0 0
      %1436 = vmatprep.subr.bf16.mxu0 0
      %1437 = vmatpush1.bf16.msra.mxu0 0
      %1438 = vmatprep.subr.bf16.mxu0 0
      %1439 = vmatpush1.bf16.msra.mxu0 0
      %1440 = vmatprep.subr.bf16.mxu0 0
      %1441 = vmatpush1.bf16.msra.mxu0 0
      %1442 = vmatprep.subr.bf16.mxu0 0
      %1443 = vmatpush1.bf16.msra.mxu0 0
      %1444 = vmatprep.subr.bf16.mxu0 %v1425
      %1445 = vmatpush1.bf16.msra.mxu0 %v1422
      %1446 = vmatprep.subr.bf16.mxu0 0
      %1447 = vmatpush2.bf16.msra.mxu0 0
      %1448 = vmatprep.subr.bf16.mxu0 0
      %1449 = vmatpush2.bf16.msra.mxu0 0
      %1450 = vmatprep.subr.bf16.mxu0 0
      %1451 = vmatpush2.bf16.msra.mxu0 0
      %1452 = vmatprep.subr.bf16.mxu0 0
      %1453 = vmatpush2.bf16.msra.mxu0 0
      %1454 = vmatprep.subr.bf16.mxu0 0
      %1455 = vmatpush2.bf16.msra.mxu0 0
      %1456 = vmatprep.subr.bf16.mxu0 0
      %1457 = vmatpush2.bf16.msra.mxu0 0
      %1458 = vmatprep.subr.bf16.mxu0 0
      %1459 = vmatpush2.bf16.msra.mxu0 0
      %1460 = vmatprep.subr.bf16.mxu0 0
      %1461 = vmatpush2.bf16.msra.mxu0 0
      %1462 = vmatprep.mubr.bf16.mxu0 0
      %1463 = vmatmul.mubr.bf16.gmra.mxu0 %v1419
      %v1464 = vpop.f32.mrf.mxu0
      %v1465 = vadd.f32 0.0, %v1464
      %v1466 = vpop.f32.mrf.mxu0
      %v1467 = vadd.f32 0.0, %v1466
      %v1468 = vpop.f32.mrf.mxu0
      %v1469 = vpop.f32.mrf.mxu0
      %1470 = vdwg.mxu0
      %1471 = vmatprep.subr.bf16.mxu0 0
      %1472 = vmatpush1.bf16.msra.mxu0 0
      %1473 = vmatprep.subr.bf16.mxu0 0
      %1474 = vmatpush1.bf16.msra.mxu0 0
      %1475 = vmatprep.subr.bf16.mxu0 0
      %1476 = vmatpush1.bf16.msra.mxu0 0
      %1477 = vmatprep.subr.bf16.mxu0 0
      %1478 = vmatpush1.bf16.msra.mxu0 0
      %1479 = vmatprep.subr.bf16.mxu0 0
      %1480 = vmatpush1.bf16.msra.mxu0 0
      %1481 = vmatprep.subr.bf16.mxu0 0
      %1482 = vmatpush1.bf16.msra.mxu0 0
      %1483 = vmatprep.subr.bf16.mxu0 0
      %1484 = vmatpush1.bf16.msra.mxu0 0
      %1485 = vmatprep.subr.bf16.mxu0 0
      %1486 = vmatpush1.bf16.msra.mxu0 %v1428
      %1487 = vmatprep.subr.bf16.mxu0 0
      %1488 = vmatpush2.bf16.msra.mxu0 0
      %1489 = vmatprep.subr.bf16.mxu0 0
      %1490 = vmatpush2.bf16.msra.mxu0 0
      %1491 = vmatprep.subr.bf16.mxu0 0
      %1492 = vmatpush2.bf16.msra.mxu0 0
      %1493 = vmatprep.subr.bf16.mxu0 0
      %1494 = vmatpush2.bf16.msra.mxu0 0
      %1495 = vmatprep.subr.bf16.mxu0 0
      %1496 = vmatpush2.bf16.msra.mxu0 0
      %1497 = vmatprep.subr.bf16.mxu0 0
      %1498 = vmatpush2.bf16.msra.mxu0 0
      %1499 = vmatprep.subr.bf16.mxu0 0
      %1500 = vmatpush2.bf16.msra.mxu0 0
      %1501 = vmatprep.subr.bf16.mxu0 0
      %1502 = vmatpush2.bf16.msra.mxu0 0
      %1503 = vmatprep.mubr.bf16.mxu0 0
      %1504 = vmatmul.mubr.bf16.gmra.mxu0 %v1419
      %v1505 = vpop.f32.mrf.mxu0
      %v1506 = vadd.f32 0.0, %v1505
      %v1507 = vpop.f32.mrf.mxu0
      %v1508 = vpop.f32.mrf.mxu0
      %v1509 = vpop.f32.mrf.mxu0
      %1510 = vdwg.mxu0
      %v1513 = vcombine.low %v1465, %v1467
      %v1515 = vadd.f32 %v1387, %v1513
      %v1516 = vadd.f32 %v1388, %v1506
      %1517 = vst [vmem:[#allocation2] sm:$0xff] %v1515
      %vm1518 = vcmask 257024
      %1519 = vst.msk [vmem:[#allocation2 + $0x8] sm:$0xf] %vm1518, %v1516
      %p1520 = scmp.eq.s32.totalorder %s25, 2
      // Predicated region
      $region41: #{unet3d_decoder_forward.8} parent=35 // pred_check
        %p1521 = pneg %p1520
      $region42: #{unet3d_decoder_forward.8} parent=35 // pred_check_branch
        %1523 = sbr.rel (%p1521) target = $region44
      $region43: #{unet3d_decoder_forward.8} parent=35 // pred_region
        %v1524 = vld [vmem:[%s2] sm:$0xf]
        %1526 = vset.pattern.permute.xlu0 0
        %1527 = vperm.xlu0 %1526, %v1524
        %v1528 = vpop.permute.xlu0 %1527
        %v1530 = vunpack.c.l.s4 839922192
        %v1531 = vunpack.c.0.s8 %v1530
        %v1532 = vlaneseq
        %v1533 = vshrl.u32 %v1532, 7
        %v1534 = vsub.s32 %v1531, %v1533
        %v1535 = vrot.slane %v1528, %v1534
        %v1537 = vadd.f32 %v1515, %v1535
        %v1538 = vadd.f32 %v1516, %v1535
        %v1540 = vcombine.high %v1537, %v1537
        %v1542 = vpack.c.bf16 %v1537, %v1537
        %v1543 = vpack.c.bf16 %v1540, %v1540
        %v1544 = vpack.c.bf16 %v1538, %v1538
        %v1548 = vcombine.low %v1542, %v1543
        %v1550 = vunpack.c.l.s4 1983009808
        %v1551 = vunpack.c.0.s8 %v1550
        %v1552 = vlaneseq
        %v1553 = vshrl.u32 %v1552, 7
        %v1554 = vsub.s32 %v1551, %v1553
        %v1555 = vrot.slane %v1548, %v1554
        %v1557 = vunpack.c.l.s4 1983009808
        %v1558 = vunpack.c.0.s8 %v1557
        %v1559 = vlaneseq
        %v1560 = vshrl.u32 %v1559, 7
        %v1561 = vsub.s32 %v1558, %v1560
        %v1562 = vrot.slane %v1544, %v1561
        %v1563 = vcombine.low %v1555, %v1562
        %vm1565 = vcmask 1043458
        %vm1566 = vmor %vm1565, %vm396
        %vm1567 = vcmask 259076
        %vm1568 = vmor %vm1567, %vm1566
        %1569 = vst.msk [vmem:[%s346] sm:$0x3f] %vm1568, %v1563
        %v1570 = vld [vmem:[%s3] sm:$0x7]
        %v1572 = vlaneseq
        %v1573 = vshrl.u32 %v1572, 7
        %v1574 = vsub.s32 0, %v1573
        %v1575 = vrot.slane %v1570, %v1574
        %v1576 = vlaneseq
        %v1577 = vshrl.u32 %v1576, 7
        %v1578 = vsub.s32 1, %v1577
        %v1579 = vrot.slane %v1570, %v1578
        %v1580 = vlaneseq
        %v1581 = vshrl.u32 %v1580, 7
        %v1582 = vsub.s32 2, %v1581
        %v1583 = vrot.slane %v1570, %v1582
        %v1585 = vcombine.low %v1575, %v1579
        %v1587 = vmul.f32 %v1537, %v1585
        %v1588 = vmul.f32 %v1538, %v1583
        %v1590 = vcombine.high %v1587, %v1587
        %vm1592 = vcmask 1043456
        %v1593 = vsel %vm1592, %v1587, 0.0
        %v1594 = vsel %vm1592, %v1590, 0.0
        %v1595 = vadd.f32 %v1593, %v1594
        %v1596 = vsel %vm1518, %v1588, 0.0
        %v1597 = vadd.f32 %v1595, %v1596
        %1598 = vadd.xlane.f32.xlu0 %v1597
        %v1599 = vpop.xlane.xlu0 %1598
        %vm1600 = vcmask 3072
        %1601 = vst.msk [vmem:[%s354] sm:$0xf] %vm1600, %v1599
        %v1602 = vmul.f32 %v1537, %v1537
        %v1603 = vmul.f32 %v1538, %v1538
        %v1604 = vmul.f32 %v1602, %v1585
        %v1605 = vmul.f32 %v1603, %v1583
        %v1607 = vcombine.high %v1604, %v1604
        %v1609 = vsel %vm1592, %v1604, 0.0
        %v1610 = vsel %vm1592, %v1607, 0.0
        %v1611 = vadd.f32 %v1609, %v1610
        %v1612 = vsel %vm1518, %v1605, 0.0
        %v1613 = vadd.f32 %v1611, %v1612
        %1614 = vadd.xlane.f32.xlu0 %v1613
        %v1615 = vpop.xlane.xlu0 %1614
        %1616 = vst.msk [vmem:[%s362] sm:$0xf] %vm1600, %v1615
      $region44: #{unet3d_decoder_forward.8} parent=35 // pred_fallthru
        _
      %p1617 = scmp.lt.s32.totalorder %s23, 1
      %s1618 = scalar_select %p1617, %s23, 1
      %p1619 = scmp.lt.s32.totalorder %s24, 15
      %s1620 = scalar_select %p1619, %s24, 15
      %s1621 = smul.addr %s1620, 3
      %s1622 = smul.addr %s1618, 48
      %s1623 = sadd.s32 %s1621, %s1622
      %s1624 = smul.addr %s1623, 2
      %s1625 = scalar_lea.vmem %s4, %s1624
      %p1626 = scmp.lt.s32.totalorder %s23, 1
      %s1627 = scalar_select %p1626, %s23, 1
      %p1628 = scmp.lt.s32.totalorder %s24, 15
      %s1629 = scalar_select %p1628, %s24, 15
      %s1630 = smul.addr %s1627, 16
      %s1631 = sadd.s32 %s1629, %s1630
      %s1632 = smul.addr %s1631, 4
      %s1633 = scalar_lea.vmem %s5, %s1632
      %p1634 = scmp.lt.s32.totalorder %s23, 1
      %s1635 = scalar_select %p1634, %s23, 1
      %p1636 = scmp.lt.s32.totalorder %s24, 15
      %s1637 = scalar_select %p1636, %s24, 15
      %s1638 = smul.addr %s1635, 16
      %s1639 = sadd.s32 %s1637, %s1638
      %s1640 = smul.addr %s1639, 4
      %s1641 = scalar_lea.vmem %s6, %s1640
      // Predicated region
      $region45: #{unet3d_decoder_forward.8} parent=35 // pred_check
        %p1642 = pneg %p155
      $region46: #{unet3d_decoder_forward.8} parent=35 // pred_check_branch
        %1644 = sbr.rel (%p1642) target = $region48
      $region47: #{unet3d_decoder_forward.8} parent=35 // pred_region
        _
      $region48: #{unet3d_decoder_forward.8} parent=35 // pred_fallthru
        _
      // Predicated region
      $region49: #{unet3d_decoder_forward.8} parent=35 // pred_check
        %p1645 = pneg %p183
      $region50: #{unet3d_decoder_forward.8} parent=35 // pred_check_branch
        %1647 = sbr.rel (%p1645) target = $region52
      $region51: #{unet3d_decoder_forward.8} parent=35 // pred_region
        _
      $region52: #{unet3d_decoder_forward.8} parent=35 // pred_fallthru
        _
      // Predicated region
      $region53: #{unet3d_decoder_forward.8} parent=35 // pred_check
        %p1648 = pneg %p211
      $region54: #{unet3d_decoder_forward.8} parent=35 // pred_check_branch
        %1650 = sbr.rel (%p1648) target = $region56
      $region55: #{unet3d_decoder_forward.8} parent=35 // pred_region
        _
      $region56: #{unet3d_decoder_forward.8} parent=35 // pred_fallthru
        _
    $region36: #{unet3d_decoder_forward.8} parent=5 // pred_fallthru
      _
    %p1651 = scmp.le.s32.totalorder 2, %s13
    // Predicated region
    $region57: #{unet3d_decoder_forward.8} parent=5 // pred_check
      %p1652 = pneg %p1651
    $region58: #{unet3d_decoder_forward.8} parent=5 // pred_check_branch
      %1654 = sbr.rel (%p1652) target = $region60
    $region59: #{unet3d_decoder_forward.8} parent=5 // pred_region
      %s1655 = ssub.s32 %s13, 2
      // Predicated region
      $region61: #{unet3d_decoder_forward.8} parent=59 // pred_check
        %p1656 = pneg %p161
      $region62: #{unet3d_decoder_forward.8} parent=59 // pred_check_branch
        %1658 = sbr.rel (%p1656) target = $region64
      $region63: #{unet3d_decoder_forward.8} parent=59 // pred_region
        %p1659 = scmp.lt.s32.totalorder %s26, 1
        %s1660 = scalar_select %p1659, %s26, 1
        %p1661 = scmp.lt.s32.totalorder %s27, 15
        %s1662 = scalar_select %p1661, %s27, 15
        %s1663 = smul.addr %s1662, 3
        %s1664 = smul.addr %s1660, 48
        %s1665 = sadd.s32 %s1663, %s1664
        %s1666 = smul.addr %s1665, 2
        %s1667 = scalar_lea.vmem %s4, %s1666
      $region64: #{unet3d_decoder_forward.8} parent=59 // pred_fallthru
        _
      // Predicated region
      $region65: #{unet3d_decoder_forward.8} parent=59 // pred_check
        %p1668 = pneg %p189
      $region66: #{unet3d_decoder_forward.8} parent=59 // pred_check_branch
        %1670 = sbr.rel (%p1668) target = $region68
      $region67: #{unet3d_decoder_forward.8} parent=59 // pred_region
        %p1671 = scmp.lt.s32.totalorder %s26, 1
        %s1672 = scalar_select %p1671, %s26, 1
        %p1673 = scmp.lt.s32.totalorder %s27, 15
        %s1674 = scalar_select %p1673, %s27, 15
        %s1675 = smul.addr %s1672, 16
        %s1676 = sadd.s32 %s1674, %s1675
        %s1677 = smul.addr %s1676, 4
        %s1678 = scalar_lea.vmem %s5, %s1677
      $region68: #{unet3d_decoder_forward.8} parent=59 // pred_fallthru
        _
      // Predicated region
      $region69: #{unet3d_decoder_forward.8} parent=59 // pred_check
        %p1679 = pneg %p217
      $region70: #{unet3d_decoder_forward.8} parent=59 // pred_check_branch
        %1681 = sbr.rel (%p1679) target = $region72
      $region71: #{unet3d_decoder_forward.8} parent=59 // pred_region
        %p1682 = scmp.lt.s32.totalorder %s26, 1
        %s1683 = scalar_select %p1682, %s26, 1
        %p1684 = scmp.lt.s32.totalorder %s27, 15
        %s1685 = scalar_select %p1684, %s27, 15
        %s1686 = smul.addr %s1683, 16
        %s1687 = sadd.s32 %s1685, %s1686
        %s1688 = smul.addr %s1687, 4
        %s1689 = scalar_lea.vmem %s6, %s1688
      $region72: #{unet3d_decoder_forward.8} parent=59 // pred_fallthru
        _
    $region60: #{unet3d_decoder_forward.8} parent=5 // pred_fallthru
      _
  $region6: #{unet3d_decoder_forward.8} parent=0 // loop_footer
    %s17 = sadd.s32 1, %s13
  $region7: #{unet3d_decoder_forward.8} parent=0 // loop_footer_branch
    %12 = sbr.rel target = $region3
  $region8: #{unet3d_decoder_forward.8} parent=0 // loop_exit
    _

</llo_original>
